<compile_context>
chip_gen: v5e
topology: v5e:2x2
jax: 0.10.0
libtpu: 0.0.40
codegen_flags: <defaults>
</compile_context>

<pallas_src>
import functools

import jax
import jax.numpy as jnp
from jax.experimental import pallas as pl
from jax.experimental.pallas import tpu as pltpu

# ----------------------------------------------------------------------------- config
N_FFT = 512
HOP = N_FFT // 4
N_HFFT = N_FFT // 2 + 1
N_CH = 4
SR = 16000.0
SS = 340.4
DIST = 100.0

MC = int(45 // 1.414)                      # model_complexity -> 31 (complex path)
ENC_CH = [2 * N_CH, MC, MC, 2*MC, 2*MC, 2*MC, 2*MC, 2*MC, 2*MC, 2*MC, 128]
ENC_K = [(7,1),(1,7),(7,5),(7,5),(5,3),(5,3),(5,3),(5,3),(5,3),(5,3)]
ENC_S = [(1,1),(1,1),(2,2),(2,1),(2,2),(2,1),(2,2),(2,1),(2,2),(2,1)]
ENC_P = [(3,0),(0,3),(3,2),(3,2),(2,1),(2,1),(2,1),(2,1),(2,1),(2,1)]
DEC_CH = [0] + [2*MC]*11
DEC_K = [(5,3),(5,3),(5,3),(5,3),(5,3),(5,3),(7,5),(7,5),(1,7),(7,1)]
DEC_S = [(2,1),(2,2),(2,1),(2,2),(2,1),(2,2),(2,1),(2,2),(1,1),(1,1)]
DEC_P = [(2,1),(2,1),(2,1),(2,1),(2,1),(2,1),(3,2),(3,2),(0,3),(3,0)]
DEC_OP = [(0,0),(0,1),(0,0),(0,1),(0,0),(0,1),(0,0),(0,1),(0,0),(0,0)]
MODEL_LEN = 10

TM_MAX = 512          # M-tile (rows of im2col matrix)
TK_MAX = 2048         # packed-K tile (reduction axis)


def _round_up(v, m):
    return ((v + m - 1) // m) * m


# ----------------------------------------------------------------------------- Pallas kernels
def _conv_mm_kernel(act, a_ref, b_ref, s_ref, t_ref, o_ref, acc_ref):
    """Packed-complex matmul + fused bias/BN/LeakyReLU epilogue."""
    k = pl.program_id(1)

    @pl.when(k == 0)
    def _():
        acc_ref[...] = jnp.zeros_like(acc_ref)

    acc_ref[...] += jnp.dot(a_ref[...], b_ref[...],
                            preferred_element_type=jnp.float32)

    @pl.when(k == pl.num_programs(1) - 1)
    def _():
        y = acc_ref[...] * s_ref[...] + t_ref[...]
        if act:
            y = jnp.where(y >= 0, y, 0.01 * y)        # LeakyReLU(0.01)
        o_ref[...] = y.astype(o_ref.dtype)


def fused_complex_conv_matmul(A2, Bm, scale, shift, act, out_dtype):
    """A2: (M, 2K) bf16 = [ar | ai]; Bm: (2K, N2p) bf16 = [[Wr,Wi],[-Wi,Wr]] (padded).
    Returns (M, N2p) with real in cols [0:N], imag in [N:2N]."""
    M_raw, K2_raw = A2.shape
    _, N2p = Bm.shape

    if M_raw > TM_MAX:
        TM = TM_MAX
        Mp = _round_up(M_raw, TM)
    else:
        TM = _round_up(M_raw, 8)
        Mp = TM

    nk = -(-K2_raw // TK_MAX)
    TK = _round_up(-(-K2_raw // nk), 128)
    K2p = nk * TK

    A2p = jnp.pad(A2, ((0, Mp - M_raw), (0, K2p - K2_raw)))
    Bmp = jnp.pad(Bm, ((0, K2p - K2_raw), (0, 0)))

    out = pl.pallas_call(
        functools.partial(_conv_mm_kernel, act),
        out_shape=jax.ShapeDtypeStruct((Mp, N2p), out_dtype),
        grid_spec=pltpu.PrefetchScalarGridSpec(
            num_scalar_prefetch=0,
            grid=(Mp // TM, nk),
            in_specs=[pl.BlockSpec((TM, TK), lambda i, k: (i, k)),
                      pl.BlockSpec((TK, N2p), lambda i, k: (k, 0)),
                      pl.BlockSpec((1, N2p), lambda i, k: (0, 0)),
                      pl.BlockSpec((1, N2p), lambda i, k: (0, 0))],
            out_specs=pl.BlockSpec((TM, N2p), lambda i, k: (i, 0)),
            scratch_shapes=[pltpu.VMEM((TM, N2p), jnp.float32)]),
        compiler_params=pltpu.CompilerParams(
            dimension_semantics=("parallel", "arbitrary")),
    )(A2p, Bmp, scale, shift)
    return out[:M_raw]


def _attractor_kernel(af_ref, w1_ref, b1_ref, w2_ref, b2_ref, w3_ref, b3_ref, o_ref):
    h = jnp.dot(af_ref[...], w1_ref[0], preferred_element_type=jnp.float32) + b1_ref[0]
    h = jnp.dot(h.astype(jnp.bfloat16), w2_ref[0],
                preferred_element_type=jnp.float32) + b2_ref[0]
    h = jnp.dot(h.astype(jnp.bfloat16), w3_ref[0],
                preferred_element_type=jnp.float32) + b3_ref[0]
    o_ref[0] = h


def _mask_kernel(mr_ref, mi_ref, xr_ref, xi_ref, yr_ref, yi_ref):
    mr = jnp.tanh(mr_ref[...])
    mi = jnp.tanh(mi_ref[...])
    xr, xi = xr_ref[...], xi_ref[...]
    yr_ref[...] = xr * mr - xi * mi
    yi_ref[...] = xr * mi + xi * mr


# ----------------------------------------------------------------------------- complex convs (im2col + fused Pallas matmul)
def complex_conv2d(x, p, stride, padding, bn=True, act=True,
                   out_dtype=jnp.bfloat16, eps=1e-5):
    """x: (B, Cin, H, W, 2); p['wr'/'wi']: (Cout, Cin, KH, KW)."""
    # TODO(synk): stream the im2col windows via BlockSpec/manual DMA instead of
    # materializing the patch matrix in HBM (KH*KW duplication).
    wr, wi, br, bi = p['wr'], p['wi'], p['br'], p['bi']
    B, Cin, H, W, _ = x.shape
    Cout, _, KH, KW = wr.shape
    sh, sw = stride
    ph, pw = padding
    OH = (H + 2 * ph - KH) // sh + 1
    OW = (W + 2 * pw - KW) // sw + 1

    xp = jnp.pad(x.astype(jnp.bfloat16),
                 ((0, 0), (0, 0), (ph, ph), (pw, pw), (0, 0)))
    cols = []
    for kh in range(KH):
        for kw in range(KW):
            cols.append(xp[:, :, kh:kh + (OH - 1) * sh + 1:sh,
                           kw:kw + (OW - 1) * sw + 1:sw, :])
    pc = jnp.stack(cols, axis=2)                     # (B, Cin, KH*KW, OH, OW, 2)
    pc = jnp.transpose(pc, (0, 3, 4, 5, 1, 2))       # (B, OH, OW, 2, Cin, KH*KW)
    K = Cin * KH * KW
    N = Cout
    A2 = pc.reshape(B * OH * OW, 2 * K)              # [ar | ai], bf16

    Wr = wr.reshape(Cout, K).T.astype(jnp.float32)   # (K, N)
    Wi = wi.reshape(Cout, K).T.astype(jnp.float32)
    N2p = _round_up(2 * N, 128)
    top = jnp.concatenate([Wr, Wi], axis=1)
    bot = jnp.concatenate([-Wi, Wr], axis=1)
    Bm = jnp.concatenate([top, bot], axis=0)         # (2K, 2N)
    Bm = jnp.pad(Bm, ((0, 0), (0, N2p - 2 * N))).astype(jnp.bfloat16)

    # TODO(synk): ComplexConv2d bias convention = each real conv carries its own
    # bias before the complex combine (common open-source implementation).
    bias_r = br - bi
    bias_i = br + bi
    if bn:
        # TODO(synk): ComplexBatchNorm2d is not defined in the reference source;
        # eval-mode per-channel BN with identical re/im statistics is used.
        s = p['g'] * jax.lax.rsqrt(p['v'] + eps)
        sh_r = p['b'] + (bias_r - p['m']) * s
        sh_i = p['b'] + (bias_i - p['m']) * s
    else:
        s = jnp.ones((N,), jnp.float32)
        sh_r, sh_i = bias_r, bias_i
    zpad = jnp.zeros((N2p - 2 * N,), jnp.float32)
    scale = jnp.concatenate([s, s, zpad])[None, :]
    shift = jnp.concatenate([sh_r, sh_i, zpad])[None, :]

    out = fused_complex_conv_matmul(A2, Bm, scale, shift, act, out_dtype)
    yr = out[:, :N]
    yi = out[:, N:2 * N]
    y = jnp.stack([yr, yi], axis=-1).reshape(B, OH, OW, Cout, 2)
    return jnp.transpose(y, (0, 3, 1, 2, 4))         # (B, Cout, OH, OW, 2)


def complex_conv_transpose2d(x, p, stride, padding, output_padding,
                             bn=True, act=True, out_dtype=jnp.bfloat16):
    # p['wr'/'wi']: (Cin, Cout, KH, KW) -- PyTorch ConvTranspose2d layout.
    # TODO(synk): the zero-inserted (dilated) input still feeds the matmul; a
    # subpixel decomposition would cut decoder FLOPs by up to stride_h*stride_w.
    B, Cin, H, W, _ = x.shape
    _, Cout, KH, KW = p['wr'].shape
    sh, sw = stride
    ph, pw = padding
    oph, opw = output_padding
    Hd, Wd = (H - 1) * sh + 1, (W - 1) * sw + 1
    xd = jnp.zeros((B, Cin, Hd, Wd, 2), x.dtype).at[:, :, ::sh, ::sw, :].set(x)
    xd = jnp.pad(xd, ((0, 0), (0, 0),
                      (KH - 1 - ph, KH - 1 - ph + oph),
                      (KW - 1 - pw, KW - 1 - pw + opw), (0, 0)))
    wrc = jnp.transpose(p['wr'][:, :, ::-1, ::-1], (1, 0, 2, 3))
    wic = jnp.transpose(p['wi'][:, :, ::-1, ::-1], (1, 0, 2, 3))
    p2 = dict(p, wr=wrc, wi=wic)
    return complex_conv2d(xd, p2, (1, 1), (0, 0), bn=bn, act=act,
                          out_dtype=out_dtype)


# ----------------------------------------------------------------------------- attractors (one batched pallas_call)
def attractors_fwd(params, af):
    """Runs attractors[0..8] and the bottleneck attractor in a single kernel.
    Returns (10, B, 128) f32 (outputs right-padded to 128)."""
    B = af.shape[0]
    attrs = list(params['attr']) + [params['attr_bn']]
    w1 = jnp.stack([a['w1'] for a in attrs])                          # (10, 2, 1024)
    w1 = jnp.pad(w1, ((0, 0), (0, 126), (0, 0))).astype(jnp.bfloat16)  # (10,128,1024)
    b1 = jnp.stack([a['b1'] for a in attrs])[:, None, :]
    w2 = jnp.stack([a['w2'] for a in attrs]).astype(jnp.bfloat16)
    b2 = jnp.stack([a['b2'] for a in attrs])[:, None, :]
    w3 = jnp.stack([jnp.pad(a['w3'], ((0, 0), (0, 128 - a['w3'].shape[1])))
                    for a in attrs]).astype(jnp.bfloat16)
    b3 = jnp.stack([jnp.pad(a['b3'], ((0, 128 - a['b3'].shape[0]),))
                    for a in attrs])[:, None, :]
    af_p = jnp.zeros((8, 128), jnp.bfloat16).at[:B, :2].set(af.astype(jnp.bfloat16))

    out = pl.pallas_call(
        _attractor_kernel,
        out_shape=jax.ShapeDtypeStruct((10, 8, 128), jnp.float32),
        grid_spec=pltpu.PrefetchScalarGridSpec(
            num_scalar_prefetch=0,
            grid=(10,),
            in_specs=[pl.BlockSpec((8, 128), lambda g: (0, 0)),
                      pl.BlockSpec((1, 128, 1024), lambda g: (g, 0, 0)),
                      pl.BlockSpec((1, 1, 1024), lambda g: (g, 0, 0)),
                      pl.BlockSpec((1, 1024, 1024), lambda g: (g, 0, 0)),
                      pl.BlockSpec((1, 1, 1024), lambda g: (g, 0, 0)),
                      pl.BlockSpec((1, 1024, 128), lambda g: (g, 0, 0)),
                      pl.BlockSpec((1, 1, 128), lambda g: (g, 0, 0))],
            out_specs=pl.BlockSpec((1, 8, 128), lambda g: (g, 0, 0))),
        compiler_params=pltpu.CompilerParams(dimension_semantics=("arbitrary",)),
    )(af_p, w1, b1, w2, b2, w3, b3)
    return out[:, :B, :]


# ----------------------------------------------------------------------------- tanh-mask * spectrum
def apply_mask(mask_ri, X0):
    B, F, T, _ = mask_ri.shape
    mr = mask_ri[..., 0].reshape(B * F, T).astype(jnp.float32)
    mi = mask_ri[..., 1].reshape(B * F, T).astype(jnp.float32)
    xr = jnp.real(X0).reshape(B * F, T)
    xi = jnp.imag(X0).reshape(B * F, T)
    yr, yi = pl.pallas_call(
        _mask_kernel,
        out_shape=(jax.ShapeDtypeStruct((B * F, T), jnp.float32),
                   jax.ShapeDtypeStruct((B * F, T), jnp.float32)),
    )(mr, mi, xr, xi)
    return (yr + 1j * yi).reshape(B, F, T)


# ----------------------------------------------------------------------------- model
def encoder_fwd(p, x, s, pad):
    return complex_conv2d(x, p, s, pad, bn=True, act=True)


def decoder_fwd(p, x, s, pad, op):
    return complex_conv_transpose2d(x, p, s, pad, op, bn=True, act=True)


def udss_net(params, sf, af):
    a_all = attractors_fwd(params, af)             # (10, B, 128) f32
    sf_skip = []
    for i in range(MODEL_LEN):
        sf_skip.append(sf)
        sf = encoder_fwd(params['enc'][i], sf, ENC_S[i], ENC_P[i])
    p = sf                                         # bottleneck = Identity
    a_bn = a_all[9, :, :ENC_CH[-1]].astype(p.dtype)
    p = a_bn[:, :, None, None, None] * p
    for i in range(MODEL_LEN - 1):
        a_i = a_all[i, :, :ENC_CH[i + 1]].astype(sf_skip[i + 1].dtype)
        sf_skip[i + 1] = a_i[:, :, None, None, None] * sf_skip[i + 1]
    for i in range(MODEL_LEN):
        p = decoder_fwd(params['dec'][i], p, DEC_S[i], DEC_P[i], DEC_OP[i])
        if i == MODEL_LEN - 1:
            break
        p = jnp.concatenate([p, sf_skip[MODEL_LEN - 1 - i]], axis=1)
    mask = complex_conv2d(p, params['lin'], (1, 1), (0, 0),
                          bn=False, act=False, out_dtype=jnp.float32)
    return jnp.squeeze(mask, axis=1)               # (B, F, T, 2), pre-tanh


# ----------------------------------------------------------------------------- STFT / iSTFT / features (JAX glue)
def hann_window(n):
    return 0.5 - 0.5 * jnp.cos(2.0 * jnp.pi * jnp.arange(n) / n)


def stft(x, window):
    pad = N_FFT // 2
    xp = jnp.pad(x, ((0, 0), (pad, pad)), mode='reflect')
    T = 1 + (xp.shape[1] - N_FFT) // HOP
    idx = jnp.arange(T)[:, None] * HOP + jnp.arange(N_FFT)[None, :]
    frames = xp[:, idx] * window[None, None, :]
    X = jnp.fft.rfft(frames, axis=-1)
    return jnp.transpose(X, (0, 2, 1))                       # (N, F, T)


def istft(Y, window, length):
    B = Y.shape[0]
    frames = jnp.fft.irfft(jnp.transpose(Y, (0, 2, 1)), n=N_FFT, axis=-1)
    frames = frames * window[None, None, :]
    T = frames.shape[1]
    out_len = N_FFT + HOP * (T - 1)
    idx = (jnp.arange(T)[:, None] * HOP + jnp.arange(N_FFT)[None, :]).reshape(-1)
    y = jnp.zeros((B, out_len), jnp.float32).at[:, idx].add(frames.reshape(B, -1))
    wsq = jnp.zeros((out_len,), jnp.float32).at[idx].add(jnp.tile(window ** 2, T))
    start = N_FFT // 2
    return y[:, start:start + length] / wsq[start:start + length][None, :]


def angle_pre(angle):
    a = -angle / 180.0 * jnp.pi
    return jnp.stack([jnp.sin(a), jnp.cos(a)], axis=1)


def steering_vector(angle, mic_pos):
    B = angle.shape[0]
    a = -angle / 180.0 * jnp.pi
    half_pi = jnp.float32(90.0 / 180.0 * jnp.pi)
    loc_src = jnp.stack([DIST * jnp.cos(a) * jnp.sin(half_pi),
                         DIST * jnp.sin(a) * jnp.sin(half_pi),
                         jnp.full_like(a, DIST * jnp.cos(half_pi))], axis=1)
    # Reproduce torch.norm over the whole (B,3) difference (scalar per mic).
    tdoa = jnp.stack([jnp.linalg.norm(mic_pos[:, i] - loc_src) for i in range(N_CH)])
    tdoa = jnp.broadcast_to(tdoa[None, :], (B, N_CH))
    tdoa = tdoa - tdoa[:, 0:1]
    const = -1j * 2.0 * jnp.pi * SR / (N_FFT * SS)
    j_idx = jnp.arange(N_HFFT)
    SV = jnp.exp(j_idx[None, None, :] * tdoa[:, :, None].astype(jnp.complex64) * const)
    SV = SV / jnp.linalg.norm(SV, axis=1, keepdims=True)
    return SV                                                # (B, C, F) complex


def udss_helper_forward(params, x, angle, mic_pos):
    B, C, L = x.shape
    window = hann_window(N_FFT)
    X = stft(x.reshape(B * C, L), window)                    # (B*C, F, T)
    T0 = X.shape[-1]
    short = 16 - T0 % 16
    X = jnp.pad(X, ((0, 0), (0, 0), (0, short)))
    T = X.shape[-1]
    X = X.reshape(B, C, N_HFFT, T)

    SV = steering_vector(angle, mic_pos)
    SV = jnp.broadcast_to(SV[..., None], (B, C, N_HFFT, T))
    af = angle_pre(angle)

    spec = jnp.stack([jnp.real(X), jnp.imag(X)], axis=-1)
    spec = jnp.concatenate(
        [spec, jnp.stack([jnp.real(SV), jnp.imag(SV)], axis=-1)], axis=1)  # (B,8,F,T,2)

    mask_pre = udss_net(params, spec, af)                    # (B, F, T, 2)
    Y = apply_mask(mask_pre, X[:, 0])                        # tanh + complex mul
    return istft(Y, window, L)


# ----------------------------------------------------------------------------- deterministic parameter init
def init_params(key):
    keys = iter(jax.random.split(key, 128))
    nrm = lambda k, shp, std: jax.random.normal(k, shp, jnp.float32) * std

    def bn(c):
        return dict(g=jnp.ones((c,), jnp.float32), b=jnp.zeros((c,), jnp.float32),
                    m=jnp.zeros((c,), jnp.float32), v=jnp.ones((c,), jnp.float32))

    enc = []
    for i in range(MODEL_LEN):
        cin, cout = ENC_CH[i], ENC_CH[i + 1]
        kh, kw = ENC_K[i]
        std = (cin * kh * kw) ** -0.5
        enc.append(dict(wr=nrm(next(keys), (cout, cin, kh, kw), std),
                        wi=nrm(next(keys), (cout, cin, kh, kw), std),
                        br=jnp.zeros((cout,), jnp.float32),
                        bi=jnp.zeros((cout,), jnp.float32), **bn(cout)))

    dec = []
    for i in range(MODEL_LEN):
        cin = DEC_CH[i] + ENC_CH[MODEL_LEN - i]
        cout = DEC_CH[i + 1]
        kh, kw = DEC_K[i]
        std = (cin * kh * kw) ** -0.5
        dec.append(dict(wr=nrm(next(keys), (cin, cout, kh, kw), std),
                        wi=nrm(next(keys), (cin, cout, kh, kw), std),
                        br=jnp.zeros((cout,), jnp.float32),
                        bi=jnp.zeros((cout,), jnp.float32), **bn(cout)))

    def attractor(k, n_out):
        k1, k2, k3 = jax.random.split(k, 3)
        return dict(w1=nrm(k1, (2, 1024), 2 ** -0.5), b1=jnp.zeros((1024,), jnp.float32),
                    w2=nrm(k2, (1024, 1024), 1024 ** -0.5), b2=jnp.zeros((1024,), jnp.float32),
                    w3=nrm(k3, (1024, n_out), 1024 ** -0.5), b3=jnp.zeros((n_out,), jnp.float32))

    attr = [attractor(next(keys), ENC_CH[i + 1]) for i in range(MODEL_LEN - 1)]
    attr_bn = attractor(next(keys), ENC_CH[-1])

    std = DEC_CH[-1] ** -0.5
    lin = dict(wr=nrm(next(keys), (1, DEC_CH[-1], 1, 1), std),
               wi=nrm(next(keys), (1, DEC_CH[-1], 1, 1), std),
               br=jnp.zeros((1,), jnp.float32), bi=jnp.zeros((1,), jnp.float32))

    return dict(enc=enc, dec=dec, attr=attr, attr_bn=attr_bn, lin=lin)


# ----------------------------------------------------------------------------- main
if __name__ == "__main__":
    key = jax.random.PRNGKey(0)
    kp, kx, km = jax.random.split(key, 3)
    params = init_params(kp)

    B, L = 1, 512
    x = jax.random.normal(kx, (B, N_CH, L), jnp.float32)
    angle = jnp.array([30.0], jnp.float32)                   # [B]
    mic_pos = jax.random.normal(km, (B, N_CH, 3), jnp.float32) * 0.05

    y = udss_helper_forward(params, x, angle, mic_pos)
    y = jax.block_until_ready(y)
    assert y.shape == (B, L)
    assert bool(jnp.all(jnp.isfinite(y)))
    print("KERNEL_OK")
</pallas_src>

<mosaic_0001>
module attributes {stable_mosaic.version = 11 : i64} {
  func.func @_attractor_kernel(%arg0: i32, %arg1: memref<8x128xbf16, #tpu.memory_space<vmem>>, %arg2: memref<1x128x1024xbf16, #tpu.memory_space<vmem>>, %arg3: memref<1x1x1024xf32, #tpu.memory_space<vmem>>, %arg4: memref<1x1024x1024xbf16, #tpu.memory_space<vmem>>, %arg5: memref<1x1x1024xf32, #tpu.memory_space<vmem>>, %arg6: memref<1x1024x128xbf16, #tpu.memory_space<vmem>>, %arg7: memref<1x1x128xf32, #tpu.memory_space<vmem>>, %arg8: memref<1x8x128xf32, #tpu.memory_space<vmem>>) attributes {dimension_semantics = [#tpu.dimension_semantics<arbitrary>], iteration_bounds = array<i64: 10>, scalar_prefetch = 0 : i64, scratch_operands = 0 : i64, tpu.core_type = #tpu.core_type<tc>, window_params = [{pipeline_mode = #tpu.pipeline_mode<synchronous>, transform_indices = @transform_0, window_bounds = array<i64: 8, 128>}, {transform_indices = @transform_1, window_bounds = array<i64: 1, 128, 1024>}, {transform_indices = @transform_2, window_bounds = array<i64: 1, 1, 1024>}, {transform_indices = @transform_3, window_bounds = array<i64: 1, 1024, 1024>}, {transform_indices = @transform_4, window_bounds = array<i64: 1, 1, 1024>}, {transform_indices = @transform_5, window_bounds = array<i64: 1, 1024, 128>}, {transform_indices = @transform_6, window_bounds = array<i64: 1, 1, 128>}, {transform_indices = @transform_7, window_bounds = array<i64: 1, 8, 128>}]} {
    %c0 = arith.constant 0 : index
    %c0_0 = arith.constant 0 : index
    %0 = vector.load %arg1[%c0, %c0_0] : memref<8x128xbf16, #tpu.memory_space<vmem>>, vector<8x128xbf16>
    %c0_1 = arith.constant 0 : index
    %c0_2 = arith.constant 0 : index
    %c0_3 = arith.constant 0 : index
    %1 = vector.load %arg2[%c0_1, %c0_2, %c0_3] : memref<1x128x1024xbf16, #tpu.memory_space<vmem>>, vector<1x128x1024xbf16>
    %2 = vector.shape_cast %1 : vector<1x128x1024xbf16> to vector<128x1024xbf16>
    %cst = arith.constant dense<0.000000e+00> : vector<8x1024xf32>
    %3 = tpu.matmul %0, %2, %cst {dimension_numbers = #tpu.dot_dimension_numbers<[1], [0], [0], [1], [0, 0, 1, 1], [], []>} : vector<8x128xbf16>, vector<128x1024xbf16>, vector<8x1024xf32> -> vector<8x1024xf32>
    %c0_4 = arith.constant 0 : index
    %c0_5 = arith.constant 0 : index
    %c0_6 = arith.constant 0 : index
    %4 = vector.load %arg3[%c0_4, %c0_5, %c0_6] : memref<1x1x1024xf32, #tpu.memory_space<vmem>>, vector<1x1x1024xf32>
    %5 = vector.shape_cast %4 : vector<1x1x1024xf32> to vector<1x1024xf32>
    %6 = vector.broadcast %5 : vector<1x1024xf32> to vector<8x1024xf32>
    %7 = arith.addf %3, %6 : vector<8x1024xf32>
    %8 = arith.truncf %7 : vector<8x1024xf32> to vector<8x1024xbf16>
    %c0_7 = arith.constant 0 : index
    %c0_8 = arith.constant 0 : index
    %c0_9 = arith.constant 0 : index
    %9 = vector.load %arg4[%c0_7, %c0_8, %c0_9] : memref<1x1024x1024xbf16, #tpu.memory_space<vmem>>, vector<1x1024x1024xbf16>
    %10 = vector.shape_cast %9 : vector<1x1024x1024xbf16> to vector<1024x1024xbf16>
    %cst_10 = arith.constant dense<0.000000e+00> : vector<8x1024xf32>
    %11 = tpu.matmul %8, %10, %cst_10 {dimension_numbers = #tpu.dot_dimension_numbers<[1], [0], [0], [1], [0, 0, 1, 1], [], []>} : vector<8x1024xbf16>, vector<1024x1024xbf16>, vector<8x1024xf32> -> vector<8x1024xf32>
    %c0_11 = arith.constant 0 : index
    %c0_12 = arith.constant 0 : index
    %c0_13 = arith.constant 0 : index
    %12 = vector.load %arg5[%c0_11, %c0_12, %c0_13] : memref<1x1x1024xf32, #tpu.memory_space<vmem>>, vector<1x1x1024xf32>
    %13 = vector.shape_cast %12 : vector<1x1x1024xf32> to vector<1x1024xf32>
    %14 = vector.broadcast %13 : vector<1x1024xf32> to vector<8x1024xf32>
    %15 = arith.addf %11, %14 : vector<8x1024xf32>
    %16 = arith.truncf %15 : vector<8x1024xf32> to vector<8x1024xbf16>
    %c0_14 = arith.constant 0 : index
    %c0_15 = arith.constant 0 : index
    %c0_16 = arith.constant 0 : index
    %17 = vector.load %arg6[%c0_14, %c0_15, %c0_16] : memref<1x1024x128xbf16, #tpu.memory_space<vmem>>, vector<1x1024x128xbf16>
    %18 = vector.shape_cast %17 : vector<1x1024x128xbf16> to vector<1024x128xbf16>
    %cst_17 = arith.constant dense<0.000000e+00> : vector<8x128xf32>
    %19 = tpu.matmul %16, %18, %cst_17 {dimension_numbers = #tpu.dot_dimension_numbers<[1], [0], [0], [1], [0, 0, 1, 1], [], []>} : vector<8x1024xbf16>, vector<1024x128xbf16>, vector<8x128xf32> -> vector<8x128xf32>
    %c0_18 = arith.constant 0 : index
    %c0_19 = arith.constant 0 : index
    %c0_20 = arith.constant 0 : index
    %20 = vector.load %arg7[%c0_18, %c0_19, %c0_20] : memref<1x1x128xf32, #tpu.memory_space<vmem>>, vector<1x1x128xf32>
    %21 = vector.shape_cast %20 : vector<1x1x128xf32> to vector<1x128xf32>
    %22 = vector.broadcast %21 : vector<1x128xf32> to vector<8x128xf32>
    %23 = arith.addf %19, %22 : vector<8x128xf32>
    %c0_21 = arith.constant 0 : index
    %c0_22 = arith.constant 0 : index
    %c0_23 = arith.constant 0 : index
    %24 = vector.load %arg8[%c0_21, %c0_22, %c0_23] : memref<1x8x128xf32, #tpu.memory_space<vmem>>, vector<1x8x128xf32>
    %25 = vector.shape_cast %24 : vector<1x8x128xf32> to vector<8x128xf32>
    %26 = vector.shape_cast %23 : vector<8x128xf32> to vector<1x8x128xf32>
    tpu.vector_store %arg8[%c0_21, %c0_22, %c0_23], %26 {strides = array<i32>} : memref<1x8x128xf32, #tpu.memory_space<vmem>>, vector<1x8x128xf32>,
    return
  }
  func.func @transform_0(%arg0: i32) -> (i32, i32) {
    %c0_i32 = arith.constant 0 : i32
    %c0_i32_0 = arith.constant 0 : i32
    %c0_i32_1 = arith.constant 0 : i32
    return %c0_i32, %c0_i32_0 : i32, i32
  }
  func.func @transform_1(%arg0: i32) -> (i32, i32, i32) {
    %c0_i32 = arith.constant 0 : i32
    %c0_i32_0 = arith.constant 0 : i32
    %c0_i32_1 = arith.constant 0 : i32
    return %arg0, %c0_i32, %c0_i32_0 : i32, i32, i32
  }
  func.func @transform_2(%arg0: i32) -> (i32, i32, i32) {
    %c0_i32 = arith.constant 0 : i32
    %c0_i32_0 = arith.constant 0 : i32
    %c0_i32_1 = arith.constant 0 : i32
    return %arg0, %c0_i32, %c0_i32_0 : i32, i32, i32
  }
  func.func @transform_3(%arg0: i32) -> (i32, i32, i32) {
    %c0_i32 = arith.constant 0 : i32
    %c0_i32_0 = arith.constant 0 : i32
    %c0_i32_1 = arith.constant 0 : i32
    return %arg0, %c0_i32, %c0_i32_0 : i32, i32, i32
  }
  func.func @transform_4(%arg0: i32) -> (i32, i32, i32) {
    %c0_i32 = arith.constant 0 : i32
    %c0_i32_0 = arith.constant 0 : i32
    %c0_i32_1 = arith.constant 0 : i32
    return %arg0, %c0_i32, %c0_i32_0 : i32, i32, i32
  }
  func.func @transform_5(%arg0: i32) -> (i32, i32, i32) {
    %c0_i32 = arith.constant 0 : i32
    %c0_i32_0 = arith.constant 0 : i32
    %c0_i32_1 = arith.constant 0 : i32
    return %arg0, %c0_i32, %c0_i32_0 : i32, i32, i32
  }
  func.func @transform_6(%arg0: i32) -> (i32, i32, i32) {
    %c0_i32 = arith.constant 0 : i32
    %c0_i32_0 = arith.constant 0 : i32
    %c0_i32_1 = arith.constant 0 : i32
    return %arg0, %c0_i32, %c0_i32_0 : i32, i32, i32
  }
  func.func @transform_7(%arg0: i32) -> (i32, i32, i32) {
    %c0_i32 = arith.constant 0 : i32
    %c0_i32_0 = arith.constant 0 : i32
    %c0_i32_1 = arith.constant 0 : i32
    return %arg0, %c0_i32, %c0_i32_0 : i32, i32, i32
  }
}

</mosaic_0001>

<llo_original>
// kernel: tpu_custom_call.1
$region0: #{tpu_custom_call.1}
  #allocation0 [shape = 'u32[]', space=smem, size = 0x4, offset = 0x4, fixed_abs, tag = 'smem constant byte address 0x4 - core index']
  #allocation1 [shape = 'u32[72,128]{1,0:T(1,128)}', space=vmem, size = 0x9000, scoped, tag = 'internal scratch']
  %s0 = inlined_call_operand.hbm [shape: bf16[8,128], index: 0, kind: input, shape index: {}]
  %s1 = inlined_call_operand.hbm [shape: bf16[10,128,1024], index: 1, kind: input, shape index: {}]
  %s2 = inlined_call_operand.hbm [shape: f32[10,1,1024], index: 2, kind: input, shape index: {}]
  %s3 = inlined_call_operand.hbm [shape: bf16[10,1024,1024], index: 3, kind: input, shape index: {}]
  %s4 = inlined_call_operand.hbm [shape: f32[10,1,1024], index: 4, kind: input, shape index: {}]
  %s5 = inlined_call_operand.hbm [shape: bf16[10,1024,128], index: 5, kind: input, shape index: {}]
  %s6 = inlined_call_operand.hbm [shape: f32[10,1,128], index: 6, kind: input, shape index: {}]
  %s7 = inlined_call_operand.hbm [shape: f32[10,8,128], index: 7, kind: output, shape index: {}]
  %s8 = sld [smem:[#allocation0]]
  $region89: #{tpu_custom_call.1} parent=0
    _
  %s10 = ssub.s32 1, %s8
  %s11 = scalar_select 0, %s10, %s8
  $region1: #{tpu_custom_call.1} parent=0
    #allocation2 [shape = 'u8[2048]{0}', space=vmem, size = 0x800, scoped, tag = 'input window, operand 0, single buffered']
    #allocation3 [shape = 's32[2]{0}', space=sflag, size = 0x8, scoped, tag = 'scoped memory for tpu_custom_call.1']
    #allocation4 [shape = 's32[2]{0}', space=sflag, size = 0x8, scoped, tag = 'scoped memory for tpu_custom_call.1']
    #allocation5 [shape = 'u8[524288]{0}', space=vmem, size = 0x80000, scoped, tag = 'input window, operand 1']
    #allocation6 [shape = 's32[2]{0}', space=sflag, size = 0x8, scoped, tag = 'scoped memory for tpu_custom_call.1']
    #allocation7 [shape = 'u8[8192]{0}', space=vmem, size = 0x2000, scoped, tag = 'input window, operand 2']
    #allocation8 [shape = 'u8[4194304]{0}', space=vmem, size = 0x400000, scoped, tag = 'input window, operand 3']
    #allocation9 [shape = 's32[2]{0}', space=sflag, size = 0x8, scoped, tag = 'scoped memory for tpu_custom_call.1']
    #allocation10 [shape = 'u8[8192]{0}', space=vmem, size = 0x2000, scoped, tag = 'input window, operand 4']
    #allocation11 [shape = 'u8[524288]{0}', space=vmem, size = 0x80000, scoped, tag = 'input window, operand 5']
    #allocation12 [shape = 's32[2]{0}', space=sflag, size = 0x8, scoped, tag = 'scoped memory for tpu_custom_call.1']
    #allocation13 [shape = 'u8[1024]{0}', space=vmem, size = 0x400, scoped, tag = 'input window, operand 6']
    #allocation14 [shape = 'u8[8192]{0}', space=vmem, size = 0x2000, scoped, tag = 'output window, operand 0']
    %12 = vsyncpa [#allocation3], 0
    %13 = vsyncpa [#allocation6], 0
    %s14 = scalar_lea.sflag [#allocation6], 1
    %15 = vsyncpa %s14, 0
    %16 = vsyncpa [#allocation9], 0
    %s17 = scalar_lea.sflag [#allocation9], 1
    %18 = vsyncpa %s17, 0
    %19 = vsyncpa [#allocation12], 0
    %s20 = scalar_lea.sflag [#allocation12], 1
    %21 = vsyncpa %s20, 0
    %22 = vsyncpa [#allocation4], 0
    %s23 = scalar_lea.sflag [#allocation4], 1
    %24 = vsyncpa %s23, 0
    loop: start=0, step=1, limit=12
    $region2: #{tpu_custom_call.1} parent=1 // loop_pre_header
      _
    $region3: #{tpu_custom_call.1} parent=1 // loop_header
      %s26 = sphi 0, %s30
      %p27 = scmp.ge.s32.totalorder %s26, 12
      %s34 = sphi 0, %s34
      %s36 = sphi 0, %s34
      %s37 = sphi 0, %s36
      %s51 = sphi 0, %s37
      %s57 = sphi 0, %s59
      %s60 = sphi 0, %s57
      %s61 = sphi 0, %s60
      %s77 = sphi 0, %s61
      %s83 = sphi 0, %s85
      %s86 = sphi 0, %s83
      %s87 = sphi 0, %s86
      %s103 = sphi 0, %s87
      %s109 = sphi 0, %s111
      %s112 = sphi 0, %s109
      %s113 = sphi 0, %s112
      %s129 = sphi 0, %s113
      %s135 = sphi 0, %s137
      %s138 = sphi 0, %s135
      %s139 = sphi 0, %s138
      %s155 = sphi 0, %s139
      %s161 = sphi 0, %s163
      %s164 = sphi 0, %s161
      %s165 = sphi 0, %s164
      %s181 = sphi 0, %s165
      %s187 = sphi 0, %s189
      %s190 = sphi 0, %s187
      %s191 = sphi 0, %s190
      %s207 = sphi 0, %s191
      %s213 = sphi 0, %s215
      %s216 = sphi 0, %s213
      %s217 = sphi 0, %s216
      %s233 = sphi 0, %s217
    $region4: #{tpu_custom_call.1} parent=1 // loop_header_branch
      %29 = sbr.rel (%p27) target = $region8
    $region5: #{tpu_custom_call.1} parent=1 // loop_body
      %s31 = ssub.s32 %s26, 1
      %s32 = ssub.s32 %s26, 2
      %s33 = sadd.s32 %s26, 1
      %s35 = sadd.s32 %s34, 1
      %p38 = scmp.eq.s32.totalorder %s26, 9
      %p39 = scmp.ne.s32.totalorder %s34, %s36
      %p40 = scmp.eq.s32.totalorder %s26, 0
      %p41 = por %p39, %p40
      %p42 = scmp.ne.s32.totalorder %s34, %s36
      %p43 = scmp.eq.s32.totalorder %s31, 9
      %p44 = por %p42, %p43
      %p45 = scmp.ne.s32.totalorder %s36, %s37
      %p46 = scmp.eq.s32.totalorder %s31, 0
      %p47 = por %p45, %p46
      %p48 = scmp.ne.s32.totalorder %s36, %s37
      %p49 = scmp.eq.s32.totalorder %s32, 9
      %p50 = por %p48, %p49
      %p52 = scmp.ne.s32.totalorder %s37, %s51
      %p53 = scmp.eq.s32.totalorder %s32, 0
      %p54 = por %p52, %p53
      %s55 = ssub.s32 %s26, %s33
      %p56 = scmp.eq.s32.totalorder %s55, 0
      %s58 = sadd.s32 %s57, 1
      %s59 = scalar_select %p56, %s57, %s58
      %p62 = pneg %p56
      %p63 = scmp.eq.s32.totalorder %s26, 9
      %p64 = por %p62, %p63
      %p65 = scmp.ne.s32.totalorder %s57, %s60
      %p66 = scmp.eq.s32.totalorder %s26, 0
      %p67 = por %p65, %p66
      %p68 = scmp.ne.s32.totalorder %s57, %s60
      %p69 = scmp.eq.s32.totalorder %s31, 9
      %p70 = por %p68, %p69
      %p71 = scmp.ne.s32.totalorder %s60, %s61
      %p72 = scmp.eq.s32.totalorder %s31, 0
      %p73 = por %p71, %p72
      %p74 = scmp.ne.s32.totalorder %s60, %s61
      %p75 = scmp.eq.s32.totalorder %s32, 9
      %p76 = por %p74, %p75
      %p78 = scmp.ne.s32.totalorder %s61, %s77
      %p79 = scmp.eq.s32.totalorder %s32, 0
      %p80 = por %p78, %p79
      %s81 = ssub.s32 %s26, %s33
      %p82 = scmp.eq.s32.totalorder %s81, 0
      %s84 = sadd.s32 %s83, 1
      %s85 = scalar_select %p82, %s83, %s84
      %p88 = pneg %p82
      %p89 = scmp.eq.s32.totalorder %s26, 9
      %p90 = por %p88, %p89
      %p91 = scmp.ne.s32.totalorder %s83, %s86
      %p92 = scmp.eq.s32.totalorder %s26, 0
      %p93 = por %p91, %p92
      %p94 = scmp.ne.s32.totalorder %s83, %s86
      %p95 = scmp.eq.s32.totalorder %s31, 9
      %p96 = por %p94, %p95
      %p97 = scmp.ne.s32.totalorder %s86, %s87
      %p98 = scmp.eq.s32.totalorder %s31, 0
      %p99 = por %p97, %p98
      %p100 = scmp.ne.s32.totalorder %s86, %s87
      %p101 = scmp.eq.s32.totalorder %s32, 9
      %p102 = por %p100, %p101
      %p104 = scmp.ne.s32.totalorder %s87, %s103
      %p105 = scmp.eq.s32.totalorder %s32, 0
      %p106 = por %p104, %p105
      %s107 = ssub.s32 %s26, %s33
      %p108 = scmp.eq.s32.totalorder %s107, 0
      %s110 = sadd.s32 %s109, 1
      %s111 = scalar_select %p108, %s109, %s110
      %p114 = pneg %p108
      %p115 = scmp.eq.s32.totalorder %s26, 9
      %p116 = por %p114, %p115
      %p117 = scmp.ne.s32.totalorder %s109, %s112
      %p118 = scmp.eq.s32.totalorder %s26, 0
      %p119 = por %p117, %p118
      %p120 = scmp.ne.s32.totalorder %s109, %s112
      %p121 = scmp.eq.s32.totalorder %s31, 9
      %p122 = por %p120, %p121
      %p123 = scmp.ne.s32.totalorder %s112, %s113
      %p124 = scmp.eq.s32.totalorder %s31, 0
      %p125 = por %p123, %p124
      %p126 = scmp.ne.s32.totalorder %s112, %s113
      %p127 = scmp.eq.s32.totalorder %s32, 9
      %p128 = por %p126, %p127
      %p130 = scmp.ne.s32.totalorder %s113, %s129
      %p131 = scmp.eq.s32.totalorder %s32, 0
      %p132 = por %p130, %p131
      %s133 = ssub.s32 %s26, %s33
      %p134 = scmp.eq.s32.totalorder %s133, 0
      %s136 = sadd.s32 %s135, 1
      %s137 = scalar_select %p134, %s135, %s136
      %p140 = pneg %p134
      %p141 = scmp.eq.s32.totalorder %s26, 9
      %p142 = por %p140, %p141
      %p143 = scmp.ne.s32.totalorder %s135, %s138
      %p144 = scmp.eq.s32.totalorder %s26, 0
      %p145 = por %p143, %p144
      %p146 = scmp.ne.s32.totalorder %s135, %s138
      %p147 = scmp.eq.s32.totalorder %s31, 9
      %p148 = por %p146, %p147
      %p149 = scmp.ne.s32.totalorder %s138, %s139
      %p150 = scmp.eq.s32.totalorder %s31, 0
      %p151 = por %p149, %p150
      %p152 = scmp.ne.s32.totalorder %s138, %s139
      %p153 = scmp.eq.s32.totalorder %s32, 9
      %p154 = por %p152, %p153
      %p156 = scmp.ne.s32.totalorder %s139, %s155
      %p157 = scmp.eq.s32.totalorder %s32, 0
      %p158 = por %p156, %p157
      %s159 = ssub.s32 %s26, %s33
      %p160 = scmp.eq.s32.totalorder %s159, 0
      %s162 = sadd.s32 %s161, 1
      %s163 = scalar_select %p160, %s161, %s162
      %p166 = pneg %p160
      %p167 = scmp.eq.s32.totalorder %s26, 9
      %p168 = por %p166, %p167
      %p169 = scmp.ne.s32.totalorder %s161, %s164
      %p170 = scmp.eq.s32.totalorder %s26, 0
      %p171 = por %p169, %p170
      %p172 = scmp.ne.s32.totalorder %s161, %s164
      %p173 = scmp.eq.s32.totalorder %s31, 9
      %p174 = por %p172, %p173
      %p175 = scmp.ne.s32.totalorder %s164, %s165
      %p176 = scmp.eq.s32.totalorder %s31, 0
      %p177 = por %p175, %p176
      %p178 = scmp.ne.s32.totalorder %s164, %s165
      %p179 = scmp.eq.s32.totalorder %s32, 9
      %p180 = por %p178, %p179
      %p182 = scmp.ne.s32.totalorder %s165, %s181
      %p183 = scmp.eq.s32.totalorder %s32, 0
      %p184 = por %p182, %p183
      %s185 = ssub.s32 %s26, %s33
      %p186 = scmp.eq.s32.totalorder %s185, 0
      %s188 = sadd.s32 %s187, 1
      %s189 = scalar_select %p186, %s187, %s188
      %p192 = pneg %p186
      %p193 = scmp.eq.s32.totalorder %s26, 9
      %p194 = por %p192, %p193
      %p195 = scmp.ne.s32.totalorder %s187, %s190
      %p196 = scmp.eq.s32.totalorder %s26, 0
      %p197 = por %p195, %p196
      %p198 = scmp.ne.s32.totalorder %s187, %s190
      %p199 = scmp.eq.s32.totalorder %s31, 9
      %p200 = por %p198, %p199
      %p201 = scmp.ne.s32.totalorder %s190, %s191
      %p202 = scmp.eq.s32.totalorder %s31, 0
      %p203 = por %p201, %p202
      %p204 = scmp.ne.s32.totalorder %s190, %s191
      %p205 = scmp.eq.s32.totalorder %s32, 9
      %p206 = por %p204, %p205
      %p208 = scmp.ne.s32.totalorder %s191, %s207
      %p209 = scmp.eq.s32.totalorder %s32, 0
      %p210 = por %p208, %p209
      %s211 = ssub.s32 %s26, %s33
      %p212 = scmp.eq.s32.totalorder %s211, 0
      %s214 = sadd.s32 %s213, 1
      %s215 = scalar_select %p212, %s213, %s214
      %p218 = pneg %p212
      %p219 = scmp.eq.s32.totalorder %s26, 9
      %p220 = por %p218, %p219
      %p221 = scmp.ne.s32.totalorder %s213, %s216
      %p222 = scmp.eq.s32.totalorder %s26, 0
      %p223 = por %p221, %p222
      %p224 = scmp.ne.s32.totalorder %s213, %s216
      %p225 = scmp.eq.s32.totalorder %s31, 9
      %p226 = por %p224, %p225
      %p227 = scmp.ne.s32.totalorder %s216, %s217
      %p228 = scmp.eq.s32.totalorder %s31, 0
      %p229 = por %p227, %p228
      %p230 = scmp.ne.s32.totalorder %s216, %s217
      %p231 = scmp.eq.s32.totalorder %s32, 9
      %p232 = por %p230, %p231
      %p234 = scmp.ne.s32.totalorder %s217, %s233
      %p235 = scmp.eq.s32.totalorder %s32, 0
      %p236 = por %p234, %p235
      %p237 = scmp.le.s32.totalorder 1, %s26
      %p238 = scmp.lt.s32.totalorder %s26, 11
      %p239 = pnand %p237, %p238
      %p240 = pneg %p239
      // Predicated region
      $region9: #{tpu_custom_call.1} parent=5 // pred_check
        _
      $region10: #{tpu_custom_call.1} parent=5 // pred_check_branch
        %242 = sbr.rel (%p239) target = $region12
      $region11: #{tpu_custom_call.1} parent=5 // pred_region
        %s243 = ssub.s32 %s26, 1
        // Predicated region
        $region13: #{tpu_custom_call.1} parent=11 // pred_check
          %p244 = pneg %p47
        $region14: #{tpu_custom_call.1} parent=11 // pred_check_branch
          %246 = sbr.rel (%p244) target = $region16
        $region15: #{tpu_custom_call.1} parent=11 // pred_region
          %248 = vsyncadd [#allocation3], 0
          %s250 = sshll.u32 %s0, 4
          %s251 = int_to_ptr.hbm [resolvable:$true] %s250
          %s252 = sshll.u32 [#allocation2], 4
          %s253 = int_to_ptr.vmem [resolvable:$true] %s252
          %255 = dma.hbm_to_vmem [thread:$0]  %s251, 64, %s253, [#allocation3]
        $region16: #{tpu_custom_call.1} parent=11 // pred_fallthru
          _
      $region12: #{tpu_custom_call.1} parent=5 // pred_fallthru
        _
      %p256 = scmp.lt.s32.totalorder %s26, 10
      // Predicated region
      $region17: #{tpu_custom_call.1} parent=5 // pred_check
        %p257 = pneg %p256
      $region18: #{tpu_custom_call.1} parent=5 // pred_check_branch
        %259 = sbr.rel (%p257) target = $region20
      $region19: #{tpu_custom_call.1} parent=5 // pred_region
        // Predicated region
        $region21: #{tpu_custom_call.1} parent=19 // pred_check
          %p260 = pneg %p67
        $region22: #{tpu_custom_call.1} parent=19 // pred_check_branch
          %262 = sbr.rel (%p260) target = $region24
        $region23: #{tpu_custom_call.1} parent=19 // pred_region
          %s263 = sand.u32 %s26, 1
          %s264 = scalar_lea.sflag [#allocation6], %s263
          %s265 = sand.u32 %s57, 1
          %s266 = smul.addr %s265, 512
          %s267 = scalar_lea.vmem [#allocation5], %s266
          %269 = vsyncadd %s264, 0
          %s270 = smul.addr %s26, 128
          %s271 = smul.addr %s270, 4
          %s272 = scalar_lea.hbm %s1, %s271
          %s273 = sshll.u32 %s272, 4
          %s274 = int_to_ptr.hbm [resolvable:$true] %s273
          %s275 = sshll.u32 %s267, 4
          %s276 = int_to_ptr.vmem [resolvable:$true] %s275
          %281 = dma.hbm_to_vmem [thread:$0]  %s274, 8192, %s276, %s264, 512, 512, 32
        $region24: #{tpu_custom_call.1} parent=19 // pred_fallthru
          _
        // Predicated region
        $region25: #{tpu_custom_call.1} parent=19 // pred_check
          %p282 = pneg %p93
        $region26: #{tpu_custom_call.1} parent=19 // pred_check_branch
          %284 = sbr.rel (%p282) target = $region28
        $region27: #{tpu_custom_call.1} parent=19 // pred_region
          %s285 = sand.u32 %s26, 1
          %s286 = scalar_lea.sflag [#allocation6], %s285
          %s287 = sand.u32 %s83, 1
          %s288 = smul.addr %s287, 8
          %s289 = scalar_lea.vmem [#allocation7], %s288
          %291 = vsyncadd %s286, 0
          %s292 = smul.addr %s26, 8
          %s293 = scalar_lea.hbm %s2, %s292
          %s295 = sshll.u32 %s293, 4
          %s296 = int_to_ptr.hbm [resolvable:$true] %s295
          %s297 = sshll.u32 %s289, 4
          %s298 = int_to_ptr.vmem [resolvable:$true] %s297
          %300 = dma.hbm_to_vmem [thread:$0]  %s296, 128, %s298, %s286
        $region28: #{tpu_custom_call.1} parent=19 // pred_fallthru
          _
        // Predicated region
        $region29: #{tpu_custom_call.1} parent=19 // pred_check
          %p301 = pneg %p119
        $region30: #{tpu_custom_call.1} parent=19 // pred_check_branch
          %303 = sbr.rel (%p301) target = $region32
        $region31: #{tpu_custom_call.1} parent=19 // pred_region
          %s304 = sand.u32 %s26, 1
          %s305 = scalar_lea.sflag [#allocation9], %s304
          %s306 = sand.u32 %s109, 1
          %s307 = smul.addr %s306, 4096
          %s308 = scalar_lea.vmem [#allocation8], %s307
          %310 = vsyncadd %s305, 0
          %s311 = smul.addr %s26, 1024
          %s312 = smul.addr %s311, 4
          %s313 = scalar_lea.hbm %s3, %s312
          %s314 = sshll.u32 %s313, 4
          %s315 = int_to_ptr.hbm [resolvable:$true] %s314
          %s316 = sshll.u32 %s308, 4
          %s317 = int_to_ptr.vmem [resolvable:$true] %s316
          %322 = dma.hbm_to_vmem [thread:$0]  %s315, 65536, %s317, %s305, 512, 512, 32
        $region32: #{tpu_custom_call.1} parent=19 // pred_fallthru
          _
        // Predicated region
        $region33: #{tpu_custom_call.1} parent=19 // pred_check
          %p323 = pneg %p145
        $region34: #{tpu_custom_call.1} parent=19 // pred_check_branch
          %325 = sbr.rel (%p323) target = $region36
        $region35: #{tpu_custom_call.1} parent=19 // pred_region
          %s326 = sand.u32 %s26, 1
          %s327 = scalar_lea.sflag [#allocation9], %s326
          %s328 = sand.u32 %s135, 1
          %s329 = smul.addr %s328, 8
          %s330 = scalar_lea.vmem [#allocation10], %s329
          %332 = vsyncadd %s327, 0
          %s333 = smul.addr %s26, 8
          %s334 = scalar_lea.hbm %s4, %s333
          %s336 = sshll.u32 %s334, 4
          %s337 = int_to_ptr.hbm [resolvable:$true] %s336
          %s338 = sshll.u32 %s330, 4
          %s339 = int_to_ptr.vmem [resolvable:$true] %s338
          %341 = dma.hbm_to_vmem [thread:$0]  %s337, 128, %s339, %s327
        $region36: #{tpu_custom_call.1} parent=19 // pred_fallthru
          _
        // Predicated region
        $region37: #{tpu_custom_call.1} parent=19 // pred_check
          %p342 = pneg %p171
        $region38: #{tpu_custom_call.1} parent=19 // pred_check_branch
          %344 = sbr.rel (%p342) target = $region40
        $region39: #{tpu_custom_call.1} parent=19 // pred_region
          %s345 = sand.u32 %s26, 1
          %s346 = scalar_lea.sflag [#allocation12], %s345
          %s347 = sand.u32 %s161, 1
          %s348 = smul.addr %s347, 512
          %s349 = scalar_lea.vmem [#allocation11], %s348
          %351 = vsyncadd %s346, 0
          %s352 = smul.addr %s26, 128
          %s353 = smul.addr %s352, 4
          %s354 = scalar_lea.hbm %s5, %s353
          %s355 = sshll.u32 %s354, 4
          %s356 = int_to_ptr.hbm [resolvable:$true] %s355
          %s357 = sshll.u32 %s349, 4
          %s358 = int_to_ptr.vmem [resolvable:$true] %s357
          %363 = dma.hbm_to_vmem [thread:$0]  %s356, 8192, %s358, %s346, 64, 64, 4
        $region40: #{tpu_custom_call.1} parent=19 // pred_fallthru
          _
        // Predicated region
        $region41: #{tpu_custom_call.1} parent=19 // pred_check
          %p364 = pneg %p197
        $region42: #{tpu_custom_call.1} parent=19 // pred_check_branch
          %366 = sbr.rel (%p364) target = $region44
        $region43: #{tpu_custom_call.1} parent=19 // pred_region
          %s367 = sand.u32 %s26, 1
          %s368 = scalar_lea.sflag [#allocation12], %s367
          %s369 = sand.u32 %s187, 1
          %s370 = scalar_lea.vmem [#allocation13], %s369
          %372 = vsyncadd %s368, 0
          %s373 = scalar_lea.hbm %s6, %s26
          %s375 = sshll.u32 %s373, 4
          %s376 = int_to_ptr.hbm [resolvable:$true] %s375
          %s377 = sshll.u32 %s370, 4
          %s378 = int_to_ptr.vmem [resolvable:$true] %s377
          %380 = dma.hbm_to_vmem [thread:$0]  %s376, 16, %s378, %s368
        $region44: #{tpu_custom_call.1} parent=19 // pred_fallthru
          _
      $region20: #{tpu_custom_call.1} parent=5 // pred_fallthru
        _
      %p381 = scmp.le.s32.totalorder 1, %s26
      %p382 = scmp.lt.s32.totalorder %s26, 11
      %p383 = pnand %p381, %p382
      %p384 = pneg %p383
      // Predicated region
      $region45: #{tpu_custom_call.1} parent=5 // pred_check
        _
      $region46: #{tpu_custom_call.1} parent=5 // pred_check_branch
        %386 = sbr.rel (%p383) target = $region48
      $region47: #{tpu_custom_call.1} parent=5 // pred_region
        %s387 = ssub.s32 %s26, 1
        // Predicated region
        $region49: #{tpu_custom_call.1} parent=47 // pred_check
          %p388 = pneg %p47
        $region50: #{tpu_custom_call.1} parent=47 // pred_check_branch
          %390 = sbr.rel (%p388) target = $region52
        $region51: #{tpu_custom_call.1} parent=47 // pred_region
          %392 = dma.done [#allocation3], 64
        $region52: #{tpu_custom_call.1} parent=47 // pred_fallthru
          _
        %s393 = sand.u32 %s31, 1
        %s394 = scalar_lea.sflag [#allocation6], %s393
        %s395 = sand.u32 %s60, 1
        %s396 = smul.addr %s395, 512
        %s397 = scalar_lea.vmem [#allocation5], %s396
        // Predicated region
        $region53: #{tpu_custom_call.1} parent=47 // pred_check
          %p398 = pneg %p73
        $region54: #{tpu_custom_call.1} parent=47 // pred_check_branch
          %400 = sbr.rel (%p398) target = $region56
        $region55: #{tpu_custom_call.1} parent=47 // pred_region
          %402 = dma.done %s394, 8192
        $region56: #{tpu_custom_call.1} parent=47 // pred_fallthru
          _
        %s403 = sand.u32 %s31, 1
        %s404 = scalar_lea.sflag [#allocation6], %s403
        %s405 = sand.u32 %s86, 1
        %s406 = smul.addr %s405, 8
        %s407 = scalar_lea.vmem [#allocation7], %s406
        // Predicated region
        $region57: #{tpu_custom_call.1} parent=47 // pred_check
          %p408 = pneg %p99
        $region58: #{tpu_custom_call.1} parent=47 // pred_check_branch
          %410 = sbr.rel (%p408) target = $region60
        $region59: #{tpu_custom_call.1} parent=47 // pred_region
          %412 = dma.done %s404, 128
        $region60: #{tpu_custom_call.1} parent=47 // pred_fallthru
          _
        %s413 = sand.u32 %s31, 1
        %s414 = scalar_lea.sflag [#allocation9], %s413
        %s415 = sand.u32 %s112, 1
        %s416 = smul.addr %s415, 4096
        %s417 = scalar_lea.vmem [#allocation8], %s416
        // Predicated region
        $region61: #{tpu_custom_call.1} parent=47 // pred_check
          %p418 = pneg %p125
        $region62: #{tpu_custom_call.1} parent=47 // pred_check_branch
          %420 = sbr.rel (%p418) target = $region64
        $region63: #{tpu_custom_call.1} parent=47 // pred_region
          %422 = dma.done %s414, 65536
        $region64: #{tpu_custom_call.1} parent=47 // pred_fallthru
          _
        %s423 = sand.u32 %s31, 1
        %s424 = scalar_lea.sflag [#allocation9], %s423
        %s425 = sand.u32 %s138, 1
        %s426 = smul.addr %s425, 8
        %s427 = scalar_lea.vmem [#allocation10], %s426
        // Predicated region
        $region65: #{tpu_custom_call.1} parent=47 // pred_check
          %p428 = pneg %p151
        $region66: #{tpu_custom_call.1} parent=47 // pred_check_branch
          %430 = sbr.rel (%p428) target = $region68
        $region67: #{tpu_custom_call.1} parent=47 // pred_region
          %432 = dma.done %s424, 128
        $region68: #{tpu_custom_call.1} parent=47 // pred_fallthru
          _
        %s433 = sand.u32 %s31, 1
        %s434 = scalar_lea.sflag [#allocation12], %s433
        %s435 = sand.u32 %s164, 1
        %s436 = smul.addr %s435, 512
        %s437 = scalar_lea.vmem [#allocation11], %s436
        // Predicated region
        $region69: #{tpu_custom_call.1} parent=47 // pred_check
          %p438 = pneg %p177
        $region70: #{tpu_custom_call.1} parent=47 // pred_check_branch
          %440 = sbr.rel (%p438) target = $region72
        $region71: #{tpu_custom_call.1} parent=47 // pred_region
          %442 = dma.done %s434, 8192
        $region72: #{tpu_custom_call.1} parent=47 // pred_fallthru
          _
        %s443 = sand.u32 %s31, 1
        %s444 = scalar_lea.sflag [#allocation12], %s443
        %s445 = sand.u32 %s190, 1
        %s446 = scalar_lea.vmem [#allocation13], %s445
        // Predicated region
        $region73: #{tpu_custom_call.1} parent=47 // pred_check
          %p447 = pneg %p203
        $region74: #{tpu_custom_call.1} parent=47 // pred_check_branch
          %449 = sbr.rel (%p447) target = $region76
        $region75: #{tpu_custom_call.1} parent=47 // pred_region
          %451 = dma.done %s444, 16
        $region76: #{tpu_custom_call.1} parent=47 // pred_fallthru
          _
        %p452 = pneg %p47
        %p453 = pneg %p44
        %s454 = sand.u32 %s31, 1
        %s455 = scalar_lea.sflag [#allocation6], %s454
        %s456 = sand.u32 %s60, 1
        %s457 = smul.addr %s456, 512
        %s458 = scalar_lea.vmem [#allocation5], %s457
        %p459 = pneg %p73
        %p460 = pneg %p70
        %s461 = sand.u32 %s31, 1
        %s462 = scalar_lea.sflag [#allocation6], %s461
        %s463 = sand.u32 %s86, 1
        %s464 = smul.addr %s463, 8
        %s465 = scalar_lea.vmem [#allocation7], %s464
        %p466 = pneg %p99
        %p467 = pneg %p96
        %s468 = sand.u32 %s31, 1
        %s469 = scalar_lea.sflag [#allocation9], %s468
        %s470 = sand.u32 %s112, 1
        %s471 = smul.addr %s470, 4096
        %s472 = scalar_lea.vmem [#allocation8], %s471
        %p473 = pneg %p125
        %p474 = pneg %p122
        %s475 = sand.u32 %s31, 1
        %s476 = scalar_lea.sflag [#allocation9], %s475
        %s477 = sand.u32 %s138, 1
        %s478 = smul.addr %s477, 8
        %s479 = scalar_lea.vmem [#allocation10], %s478
        %p480 = pneg %p151
        %p481 = pneg %p148
        %s482 = sand.u32 %s31, 1
        %s483 = scalar_lea.sflag [#allocation12], %s482
        %s484 = sand.u32 %s164, 1
        %s485 = smul.addr %s484, 512
        %s486 = scalar_lea.vmem [#allocation11], %s485
        %p487 = pneg %p177
        %p488 = pneg %p174
        %s489 = sand.u32 %s31, 1
        %s490 = scalar_lea.sflag [#allocation12], %s489
        %s491 = sand.u32 %s190, 1
        %s492 = scalar_lea.vmem [#allocation13], %s491
        %p493 = pneg %p203
        %p494 = pneg %p200
        %p495 = pneg %p229
        %p496 = pneg %p226
        %s497 = sand.u32 %s216, 1
        %s498 = scalar_lea.sflag [#allocation4], %s497
        %s499 = sand.u32 %s216, 1
        %s500 = smul.addr %s499, 8
        %s501 = scalar_lea.vmem [#allocation14], %s500
        %v502 = vld [vmem:[#allocation2] sm:$0xf]
        %v503 = vld [vmem:[%s397] sm:$0xff]
        %v504 = vld [vmem:[%s397 + $0x8] sm:$0xff]
        %v505 = vld [vmem:[%s397 + $0x10] sm:$0xff]
        %v506 = vld [vmem:[%s397 + $0x18] sm:$0xff]
        %v507 = vld [vmem:[%s397 + $0x20] sm:$0xff]
        %v508 = vld [vmem:[%s397 + $0x28] sm:$0xff]
        %v509 = vld [vmem:[%s397 + $0x30] sm:$0xff]
        %v510 = vld [vmem:[%s397 + $0x38] sm:$0xff]
        %v511 = vld [vmem:[%s397 + $0x40] sm:$0xff]
        %v512 = vld [vmem:[%s397 + $0x48] sm:$0xff]
        %v513 = vld [vmem:[%s397 + $0x50] sm:$0xff]
        %v514 = vld [vmem:[%s397 + $0x58] sm:$0xff]
        %v515 = vld [vmem:[%s397 + $0x60] sm:$0xff]
        %v516 = vld [vmem:[%s397 + $0x68] sm:$0xff]
        %v517 = vld [vmem:[%s397 + $0x70] sm:$0xff]
        %v518 = vld [vmem:[%s397 + $0x78] sm:$0xff]
        %v519 = vld [vmem:[%s397 + $0x80] sm:$0xff]
        %v520 = vld [vmem:[%s397 + $0x88] sm:$0xff]
        %v521 = vld [vmem:[%s397 + $0x90] sm:$0xff]
        %v522 = vld [vmem:[%s397 + $0x98] sm:$0xff]
        %v523 = vld [vmem:[%s397 + $0xa0] sm:$0xff]
        %v524 = vld [vmem:[%s397 + $0xa8] sm:$0xff]
        %v525 = vld [vmem:[%s397 + $0xb0] sm:$0xff]
        %v526 = vld [vmem:[%s397 + $0xb8] sm:$0xff]
        %v527 = vld [vmem:[%s397 + $0xc0] sm:$0xff]
        %v528 = vld [vmem:[%s397 + $0xc8] sm:$0xff]
        %v529 = vld [vmem:[%s397 + $0xd0] sm:$0xff]
        %v530 = vld [vmem:[%s397 + $0xd8] sm:$0xff]
        %v531 = vld [vmem:[%s397 + $0xe0] sm:$0xff]
        %v532 = vld [vmem:[%s397 + $0xe8] sm:$0xff]
        %v533 = vld [vmem:[%s397 + $0xf0] sm:$0xff]
        %v534 = vld [vmem:[%s397 + $0xf8] sm:$0xff]
        %v535 = vld [vmem:[%s397 + $0x100] sm:$0xff]
        %v536 = vld [vmem:[%s397 + $0x108] sm:$0xff]
        %v537 = vld [vmem:[%s397 + $0x110] sm:$0xff]
        %v538 = vld [vmem:[%s397 + $0x118] sm:$0xff]
        %v539 = vld [vmem:[%s397 + $0x120] sm:$0xff]
        %v540 = vld [vmem:[%s397 + $0x128] sm:$0xff]
        %v541 = vld [vmem:[%s397 + $0x130] sm:$0xff]
        %v542 = vld [vmem:[%s397 + $0x138] sm:$0xff]
        %v543 = vld [vmem:[%s397 + $0x140] sm:$0xff]
        %v544 = vld [vmem:[%s397 + $0x148] sm:$0xff]
        %v545 = vld [vmem:[%s397 + $0x150] sm:$0xff]
        %v546 = vld [vmem:[%s397 + $0x158] sm:$0xff]
        %v547 = vld [vmem:[%s397 + $0x160] sm:$0xff]
        %v548 = vld [vmem:[%s397 + $0x168] sm:$0xff]
        %v549 = vld [vmem:[%s397 + $0x170] sm:$0xff]
        %v550 = vld [vmem:[%s397 + $0x178] sm:$0xff]
        %v551 = vld [vmem:[%s397 + $0x180] sm:$0xff]
        %v552 = vld [vmem:[%s397 + $0x188] sm:$0xff]
        %v553 = vld [vmem:[%s397 + $0x190] sm:$0xff]
        %v554 = vld [vmem:[%s397 + $0x198] sm:$0xff]
        %v555 = vld [vmem:[%s397 + $0x1a0] sm:$0xff]
        %v556 = vld [vmem:[%s397 + $0x1a8] sm:$0xff]
        %v557 = vld [vmem:[%s397 + $0x1b0] sm:$0xff]
        %v558 = vld [vmem:[%s397 + $0x1b8] sm:$0xff]
        %v559 = vld [vmem:[%s397 + $0x1c0] sm:$0xff]
        %v560 = vld [vmem:[%s397 + $0x1c8] sm:$0xff]
        %v561 = vld [vmem:[%s397 + $0x1d0] sm:$0xff]
        %v562 = vld [vmem:[%s397 + $0x1d8] sm:$0xff]
        %v563 = vld [vmem:[%s397 + $0x1e0] sm:$0xff]
        %v564 = vld [vmem:[%s397 + $0x1e8] sm:$0xff]
        %v565 = vld [vmem:[%s397 + $0x1f0] sm:$0xff]
        %v566 = vld [vmem:[%s397 + $0x1f8] sm:$0xff]
        %v567 = vld [vmem:[%s407] sm:$0xff]
        %v569 = vperm.slane %v567, 0
        %v570 = vperm.slane %v567, 1
        %v571 = vperm.slane %v567, 2
        %v572 = vperm.slane %v567, 3
        %v573 = vperm.slane %v567, 4
        %v574 = vperm.slane %v567, 5
        %v575 = vperm.slane %v567, 6
        %v576 = vperm.slane %v567, 7
        %v649 = vunpack.c.l.b16 %v503
        %v650 = vunpack.c.h.b16 %v503
        %v651 = vunpack.c.l.b16 %v504
        %v652 = vunpack.c.h.b16 %v504
        %v653 = vunpack.c.l.b16 %v505
        %v654 = vunpack.c.h.b16 %v505
        %v655 = vunpack.c.l.b16 %v506
        %v656 = vunpack.c.h.b16 %v506
        %v657 = vunpack.c.l.b16 %v507
        %v658 = vunpack.c.h.b16 %v507
        %v659 = vunpack.c.l.b16 %v508
        %v660 = vunpack.c.h.b16 %v508
        %v661 = vunpack.c.l.b16 %v509
        %v662 = vunpack.c.h.b16 %v509
        %v663 = vunpack.c.l.b16 %v510
        %v664 = vunpack.c.h.b16 %v510
        %v665 = vunpack.c.l.b16 %v511
        %v666 = vunpack.c.h.b16 %v511
        %v667 = vunpack.c.l.b16 %v512
        %v668 = vunpack.c.h.b16 %v512
        %v669 = vunpack.c.l.b16 %v513
        %v670 = vunpack.c.h.b16 %v513
        %v671 = vunpack.c.l.b16 %v514
        %v672 = vunpack.c.h.b16 %v514
        %v673 = vunpack.c.l.b16 %v515
        %v674 = vunpack.c.h.b16 %v515
        %v675 = vunpack.c.l.b16 %v516
        %v676 = vunpack.c.h.b16 %v516
        %v677 = vunpack.c.l.b16 %v517
        %v678 = vunpack.c.h.b16 %v517
        %v679 = vunpack.c.l.b16 %v518
        %v680 = vunpack.c.h.b16 %v518
        %v681 = vunpack.c.l.b16 %v519
        %v682 = vunpack.c.h.b16 %v519
        %v683 = vunpack.c.l.b16 %v520
        %v684 = vunpack.c.h.b16 %v520
        %v685 = vunpack.c.l.b16 %v521
        %v686 = vunpack.c.h.b16 %v521
        %v687 = vunpack.c.l.b16 %v522
        %v688 = vunpack.c.h.b16 %v522
        %v689 = vunpack.c.l.b16 %v523
        %v690 = vunpack.c.h.b16 %v523
        %v691 = vunpack.c.l.b16 %v524
        %v692 = vunpack.c.h.b16 %v524
        %v693 = vunpack.c.l.b16 %v525
        %v694 = vunpack.c.h.b16 %v525
        %v695 = vunpack.c.l.b16 %v526
        %v696 = vunpack.c.h.b16 %v526
        %v697 = vunpack.c.l.b16 %v527
        %v698 = vunpack.c.h.b16 %v527
        %v699 = vunpack.c.l.b16 %v528
        %v700 = vunpack.c.h.b16 %v528
        %v701 = vunpack.c.l.b16 %v529
        %v702 = vunpack.c.h.b16 %v529
        %v703 = vunpack.c.l.b16 %v530
        %v704 = vunpack.c.h.b16 %v530
        %v705 = vunpack.c.l.b16 %v531
        %v706 = vunpack.c.h.b16 %v531
        %v707 = vunpack.c.l.b16 %v532
        %v708 = vunpack.c.h.b16 %v532
        %v709 = vunpack.c.l.b16 %v533
        %v710 = vunpack.c.h.b16 %v533
        %v711 = vunpack.c.l.b16 %v534
        %v712 = vunpack.c.h.b16 %v534
        %v713 = vunpack.c.l.b16 %v535
        %v714 = vunpack.c.h.b16 %v535
        %v715 = vunpack.c.l.b16 %v536
        %v716 = vunpack.c.h.b16 %v536
        %v717 = vunpack.c.l.b16 %v537
        %v718 = vunpack.c.h.b16 %v537
        %v719 = vunpack.c.l.b16 %v538
        %v720 = vunpack.c.h.b16 %v538
        %v721 = vunpack.c.l.b16 %v539
        %v722 = vunpack.c.h.b16 %v539
        %v723 = vunpack.c.l.b16 %v540
        %v724 = vunpack.c.h.b16 %v540
        %v725 = vunpack.c.l.b16 %v541
        %v726 = vunpack.c.h.b16 %v541
        %v727 = vunpack.c.l.b16 %v542
        %v728 = vunpack.c.h.b16 %v542
        %v729 = vunpack.c.l.b16 %v543
        %v730 = vunpack.c.h.b16 %v543
        %v731 = vunpack.c.l.b16 %v544
        %v732 = vunpack.c.h.b16 %v544
        %v733 = vunpack.c.l.b16 %v545
        %v734 = vunpack.c.h.b16 %v545
        %v735 = vunpack.c.l.b16 %v546
        %v736 = vunpack.c.h.b16 %v546
        %v737 = vunpack.c.l.b16 %v547
        %v738 = vunpack.c.h.b16 %v547
        %v739 = vunpack.c.l.b16 %v548
        %v740 = vunpack.c.h.b16 %v548
        %v741 = vunpack.c.l.b16 %v549
        %v742 = vunpack.c.h.b16 %v549
        %v743 = vunpack.c.l.b16 %v550
        %v744 = vunpack.c.h.b16 %v550
        %v745 = vunpack.c.l.b16 %v551
        %v746 = vunpack.c.h.b16 %v551
        %v747 = vunpack.c.l.b16 %v552
        %v748 = vunpack.c.h.b16 %v552
        %v749 = vunpack.c.l.b16 %v553
        %v750 = vunpack.c.h.b16 %v553
        %v751 = vunpack.c.l.b16 %v554
        %v752 = vunpack.c.h.b16 %v554
        %v753 = vunpack.c.l.b16 %v555
        %v754 = vunpack.c.h.b16 %v555
        %v755 = vunpack.c.l.b16 %v556
        %v756 = vunpack.c.h.b16 %v556
        %v757 = vunpack.c.l.b16 %v557
        %v758 = vunpack.c.h.b16 %v557
        %v759 = vunpack.c.l.b16 %v558
        %v760 = vunpack.c.h.b16 %v558
        %v761 = vunpack.c.l.b16 %v559
        %v762 = vunpack.c.h.b16 %v559
        %v763 = vunpack.c.l.b16 %v560
        %v764 = vunpack.c.h.b16 %v560
        %v765 = vunpack.c.l.b16 %v561
        %v766 = vunpack.c.h.b16 %v561
        %v767 = vunpack.c.l.b16 %v562
        %v768 = vunpack.c.h.b16 %v562
        %v769 = vunpack.c.l.b16 %v563
        %v770 = vunpack.c.h.b16 %v563
        %v771 = vunpack.c.l.b16 %v564
        %v772 = vunpack.c.h.b16 %v564
        %v773 = vunpack.c.l.b16 %v565
        %v774 = vunpack.c.h.b16 %v565
        %v775 = vunpack.c.l.b16 %v566
        %v776 = vunpack.c.h.b16 %v566
        %v777 = vpack.c.b16 %v657, %v649
        %v778 = vpack.c.b16 %v658, %v650
        %v779 = vpack.c.b16 %v659, %v651
        %v780 = vpack.c.b16 %v660, %v652
        %v781 = vpack.c.b16 %v661, %v653
        %v782 = vpack.c.b16 %v662, %v654
        %v783 = vpack.c.b16 %v663, %v655
        %v784 = vpack.c.b16 %v664, %v656
        %v785 = vpack.c.b16 %v673, %v665
        %v786 = vpack.c.b16 %v674, %v666
        %v787 = vpack.c.b16 %v675, %v667
        %v788 = vpack.c.b16 %v676, %v668
        %v789 = vpack.c.b16 %v677, %v669
        %v790 = vpack.c.b16 %v678, %v670
        %v791 = vpack.c.b16 %v679, %v671
        %v792 = vpack.c.b16 %v680, %v672
        %v793 = vpack.c.b16 %v689, %v681
        %v794 = vpack.c.b16 %v690, %v682
        %v795 = vpack.c.b16 %v691, %v683
        %v796 = vpack.c.b16 %v692, %v684
        %v797 = vpack.c.b16 %v693, %v685
        %v798 = vpack.c.b16 %v694, %v686
        %v799 = vpack.c.b16 %v695, %v687
        %v800 = vpack.c.b16 %v696, %v688
        %v801 = vpack.c.b16 %v705, %v697
        %v802 = vpack.c.b16 %v706, %v698
        %v803 = vpack.c.b16 %v707, %v699
        %v804 = vpack.c.b16 %v708, %v700
        %v805 = vpack.c.b16 %v709, %v701
        %v806 = vpack.c.b16 %v710, %v702
        %v807 = vpack.c.b16 %v711, %v703
        %v808 = vpack.c.b16 %v712, %v704
        %v809 = vpack.c.b16 %v721, %v713
        %v810 = vpack.c.b16 %v722, %v714
        %v811 = vpack.c.b16 %v723, %v715
        %v812 = vpack.c.b16 %v724, %v716
        %v813 = vpack.c.b16 %v725, %v717
        %v814 = vpack.c.b16 %v726, %v718
        %v815 = vpack.c.b16 %v727, %v719
        %v816 = vpack.c.b16 %v728, %v720
        %v817 = vpack.c.b16 %v737, %v729
        %v818 = vpack.c.b16 %v738, %v730
        %v819 = vpack.c.b16 %v739, %v731
        %v820 = vpack.c.b16 %v740, %v732
        %v821 = vpack.c.b16 %v741, %v733
        %v822 = vpack.c.b16 %v742, %v734
        %v823 = vpack.c.b16 %v743, %v735
        %v824 = vpack.c.b16 %v744, %v736
        %v825 = vpack.c.b16 %v753, %v745
        %v826 = vpack.c.b16 %v754, %v746
        %v827 = vpack.c.b16 %v755, %v747
        %v828 = vpack.c.b16 %v756, %v748
        %v829 = vpack.c.b16 %v757, %v749
        %v830 = vpack.c.b16 %v758, %v750
        %v831 = vpack.c.b16 %v759, %v751
        %v832 = vpack.c.b16 %v760, %v752
        %v833 = vpack.c.b16 %v769, %v761
        %v834 = vpack.c.b16 %v770, %v762
        %v835 = vpack.c.b16 %v771, %v763
        %v836 = vpack.c.b16 %v772, %v764
        %v837 = vpack.c.b16 %v773, %v765
        %v838 = vpack.c.b16 %v774, %v766
        %v839 = vpack.c.b16 %v775, %v767
        %v840 = vpack.c.b16 %v776, %v768
        %905 = vmatpush.bf16.msra.mxu0 %v833
        %906 = vmatpush.bf16.msra.mxu0 %v825
        %907 = vmatpush.bf16.msra.mxu0 %v817
        %908 = vmatpush.bf16.msra.mxu0 %v809
        %909 = vmatpush.bf16.msra.mxu0 %v801
        %910 = vmatpush.bf16.msra.mxu0 %v793
        %911 = vmatpush.bf16.msra.mxu0 %v785
        %912 = vmatpush.bf16.msra.mxu0 %v777
        %913 = vmatmul.bf16.gmra.mxu0 %v502
        %v914 = vpop.f32.mrf.mxu0
        %v915 = vadd.f32 %v569, %v914
        %v916 = vpop.f32.mrf.mxu0
        %917 = vdwg.mxu0
        %918 = vmatpush.bf16.msra.mxu0 %v834
        %919 = vmatpush.bf16.msra.mxu0 %v826
        %920 = vmatpush.bf16.msra.mxu0 %v818
        %921 = vmatpush.bf16.msra.mxu0 %v810
        %922 = vmatpush.bf16.msra.mxu0 %v802
        %923 = vmatpush.bf16.msra.mxu0 %v794
        %924 = vmatpush.bf16.msra.mxu0 %v786
        %925 = vmatpush.bf16.msra.mxu0 %v778
        %926 = vmatmul.bf16.gmra.mxu0 %v502
        %v927 = vpop.f32.mrf.mxu0
        %v928 = vadd.f32 %v570, %v927
        %v929 = vpop.f32.mrf.mxu0
        %930 = vdwg.mxu0
        %931 = vmatpush.bf16.msra.mxu0 %v835
        %932 = vmatpush.bf16.msra.mxu0 %v827
        %933 = vmatpush.bf16.msra.mxu0 %v819
        %934 = vmatpush.bf16.msra.mxu0 %v811
        %935 = vmatpush.bf16.msra.mxu0 %v803
        %936 = vmatpush.bf16.msra.mxu0 %v795
        %937 = vmatpush.bf16.msra.mxu0 %v787
        %938 = vmatpush.bf16.msra.mxu0 %v779
        %939 = vmatmul.bf16.gmra.mxu0 %v502
        %v940 = vpop.f32.mrf.mxu0
        %v941 = vadd.f32 %v571, %v940
        %v942 = vpop.f32.mrf.mxu0
        %943 = vdwg.mxu0
        %944 = vmatpush.bf16.msra.mxu0 %v836
        %945 = vmatpush.bf16.msra.mxu0 %v828
        %946 = vmatpush.bf16.msra.mxu0 %v820
        %947 = vmatpush.bf16.msra.mxu0 %v812
        %948 = vmatpush.bf16.msra.mxu0 %v804
        %949 = vmatpush.bf16.msra.mxu0 %v796
        %950 = vmatpush.bf16.msra.mxu0 %v788
        %951 = vmatpush.bf16.msra.mxu0 %v780
        %952 = vmatmul.bf16.gmra.mxu0 %v502
        %v953 = vpop.f32.mrf.mxu0
        %v954 = vadd.f32 %v572, %v953
        %v955 = vpop.f32.mrf.mxu0
        %956 = vdwg.mxu0
        %957 = vmatpush.bf16.msra.mxu0 %v837
        %958 = vmatpush.bf16.msra.mxu0 %v829
        %959 = vmatpush.bf16.msra.mxu0 %v821
        %960 = vmatpush.bf16.msra.mxu0 %v813
        %961 = vmatpush.bf16.msra.mxu0 %v805
        %962 = vmatpush.bf16.msra.mxu0 %v797
        %963 = vmatpush.bf16.msra.mxu0 %v789
        %964 = vmatpush.bf16.msra.mxu0 %v781
        %965 = vmatmul.bf16.gmra.mxu0 %v502
        %v966 = vpop.f32.mrf.mxu0
        %v967 = vadd.f32 %v573, %v966
        %v968 = vpop.f32.mrf.mxu0
        %969 = vdwg.mxu0
        %970 = vmatpush.bf16.msra.mxu0 %v838
        %971 = vmatpush.bf16.msra.mxu0 %v830
        %972 = vmatpush.bf16.msra.mxu0 %v822
        %973 = vmatpush.bf16.msra.mxu0 %v814
        %974 = vmatpush.bf16.msra.mxu0 %v806
        %975 = vmatpush.bf16.msra.mxu0 %v798
        %976 = vmatpush.bf16.msra.mxu0 %v790
        %977 = vmatpush.bf16.msra.mxu0 %v782
        %978 = vmatmul.bf16.gmra.mxu0 %v502
        %v979 = vpop.f32.mrf.mxu0
        %v980 = vadd.f32 %v574, %v979
        %v981 = vpop.f32.mrf.mxu0
        %982 = vdwg.mxu0
        %983 = vmatpush.bf16.msra.mxu0 %v839
        %984 = vmatpush.bf16.msra.mxu0 %v831
        %985 = vmatpush.bf16.msra.mxu0 %v823
        %986 = vmatpush.bf16.msra.mxu0 %v815
        %987 = vmatpush.bf16.msra.mxu0 %v807
        %988 = vmatpush.bf16.msra.mxu0 %v799
        %989 = vmatpush.bf16.msra.mxu0 %v791
        %990 = vmatpush.bf16.msra.mxu0 %v783
        %991 = vmatmul.bf16.gmra.mxu0 %v502
        %v992 = vpop.f32.mrf.mxu0
        %v993 = vadd.f32 %v575, %v992
        %v994 = vpop.f32.mrf.mxu0
        %995 = vdwg.mxu0
        %996 = vmatpush.bf16.msra.mxu0 %v840
        %997 = vmatpush.bf16.msra.mxu0 %v832
        %998 = vmatpush.bf16.msra.mxu0 %v824
        %999 = vmatpush.bf16.msra.mxu0 %v816
        %1000 = vmatpush.bf16.msra.mxu0 %v808
        %1001 = vmatpush.bf16.msra.mxu0 %v800
        %1002 = vmatpush.bf16.msra.mxu0 %v792
        %1003 = vmatpush.bf16.msra.mxu0 %v784
        %1004 = vmatmul.bf16.gmra.mxu0 %v502
        %v1005 = vpop.f32.mrf.mxu0
        %v1006 = vadd.f32 %v576, %v1005
        %v1007 = vpop.f32.mrf.mxu0
        %1008 = vdwg.mxu0
        %v1009 = vpack.c.bf16 %v915, %v915
        %v1010 = vpack.c.bf16 %v928, %v928
        %v1011 = vpack.c.bf16 %v941, %v941
        %v1012 = vpack.c.bf16 %v954, %v954
        %v1013 = vpack.c.bf16 %v967, %v967
        %v1014 = vpack.c.bf16 %v980, %v980
        %v1015 = vpack.c.bf16 %v993, %v993
        %v1016 = vpack.c.bf16 %v1006, %v1006
        %v1017 = vld [vmem:[%s417] sm:$0xff]
        %v1018 = vld [vmem:[%s417 + $0x8] sm:$0xff]
        %v1019 = vld [vmem:[%s417 + $0x10] sm:$0xff]
        %v1020 = vld [vmem:[%s417 + $0x18] sm:$0xff]
        %v1021 = vld [vmem:[%s417 + $0x20] sm:$0xff]
        %v1022 = vld [vmem:[%s417 + $0x28] sm:$0xff]
        %v1023 = vld [vmem:[%s417 + $0x30] sm:$0xff]
        %v1024 = vld [vmem:[%s417 + $0x38] sm:$0xff]
        %v1025 = vld [vmem:[%s417 + $0x40] sm:$0xff]
        %v1026 = vld [vmem:[%s417 + $0x48] sm:$0xff]
        %v1027 = vld [vmem:[%s417 + $0x50] sm:$0xff]
        %v1028 = vld [vmem:[%s417 + $0x58] sm:$0xff]
        %v1029 = vld [vmem:[%s417 + $0x60] sm:$0xff]
        %v1030 = vld [vmem:[%s417 + $0x68] sm:$0xff]
        %v1031 = vld [vmem:[%s417 + $0x70] sm:$0xff]
        %v1032 = vld [vmem:[%s417 + $0x78] sm:$0xff]
        %v1033 = vld [vmem:[%s417 + $0x80] sm:$0xff]
        %v1034 = vld [vmem:[%s417 + $0x88] sm:$0xff]
        %v1035 = vld [vmem:[%s417 + $0x90] sm:$0xff]
        %v1036 = vld [vmem:[%s417 + $0x98] sm:$0xff]
        %v1037 = vld [vmem:[%s417 + $0xa0] sm:$0xff]
        %v1038 = vld [vmem:[%s417 + $0xa8] sm:$0xff]
        %v1039 = vld [vmem:[%s417 + $0xb0] sm:$0xff]
        %v1040 = vld [vmem:[%s417 + $0xb8] sm:$0xff]
        %v1041 = vld [vmem:[%s417 + $0xc0] sm:$0xff]
        %v1042 = vld [vmem:[%s417 + $0xc8] sm:$0xff]
        %v1043 = vld [vmem:[%s417 + $0xd0] sm:$0xff]
        %v1044 = vld [vmem:[%s417 + $0xd8] sm:$0xff]
        %v1045 = vld [vmem:[%s417 + $0xe0] sm:$0xff]
        %v1046 = vld [vmem:[%s417 + $0xe8] sm:$0xff]
        %v1047 = vld [vmem:[%s417 + $0xf0] sm:$0xff]
        %v1048 = vld [vmem:[%s417 + $0xf8] sm:$0xff]
        %v1049 = vld [vmem:[%s417 + $0x100] sm:$0xff]
        %v1050 = vld [vmem:[%s417 + $0x108] sm:$0xff]
        %v1051 = vld [vmem:[%s417 + $0x110] sm:$0xff]
        %v1052 = vld [vmem:[%s417 + $0x118] sm:$0xff]
        %v1053 = vld [vmem:[%s417 + $0x120] sm:$0xff]
        %v1054 = vld [vmem:[%s417 + $0x128] sm:$0xff]
        %v1055 = vld [vmem:[%s417 + $0x130] sm:$0xff]
        %v1056 = vld [vmem:[%s417 + $0x138] sm:$0xff]
        %v1057 = vld [vmem:[%s417 + $0x140] sm:$0xff]
        %v1058 = vld [vmem:[%s417 + $0x148] sm:$0xff]
        %v1059 = vld [vmem:[%s417 + $0x150] sm:$0xff]
        %v1060 = vld [vmem:[%s417 + $0x158] sm:$0xff]
        %v1061 = vld [vmem:[%s417 + $0x160] sm:$0xff]
        %v1062 = vld [vmem:[%s417 + $0x168] sm:$0xff]
        %v1063 = vld [vmem:[%s417 + $0x170] sm:$0xff]
        %v1064 = vld [vmem:[%s417 + $0x178] sm:$0xff]
        %v1065 = vld [vmem:[%s417 + $0x180] sm:$0xff]
        %v1066 = vld [vmem:[%s417 + $0x188] sm:$0xff]
        %v1067 = vld [vmem:[%s417 + $0x190] sm:$0xff]
        %v1068 = vld [vmem:[%s417 + $0x198] sm:$0xff]
        %v1069 = vld [vmem:[%s417 + $0x1a0] sm:$0xff]
        %v1070 = vld [vmem:[%s417 + $0x1a8] sm:$0xff]
        %v1071 = vld [vmem:[%s417 + $0x1b0] sm:$0xff]
        %v1072 = vld [vmem:[%s417 + $0x1b8] sm:$0xff]
        %v1073 = vld [vmem:[%s417 + $0x1c0] sm:$0xff]
        %v1074 = vld [vmem:[%s417 + $0x1c8] sm:$0xff]
        %v1075 = vld [vmem:[%s417 + $0x1d0] sm:$0xff]
        %v1076 = vld [vmem:[%s417 + $0x1d8] sm:$0xff]
        %v1077 = vld [vmem:[%s417 + $0x1e0] sm:$0xff]
        %v1078 = vld [vmem:[%s417 + $0x1e8] sm:$0xff]
        %v1079 = vld [vmem:[%s417 + $0x1f0] sm:$0xff]
        %v1080 = vld [vmem:[%s417 + $0x1f8] sm:$0xff]
        %v1081 = vld [vmem:[%s417 + $0x200] sm:$0xff]
        %v1082 = vld [vmem:[%s417 + $0x208] sm:$0xff]
        %v1083 = vld [vmem:[%s417 + $0x210] sm:$0xff]
        %v1084 = vld [vmem:[%s417 + $0x218] sm:$0xff]
        %v1085 = vld [vmem:[%s417 + $0x220] sm:$0xff]
        %v1086 = vld [vmem:[%s417 + $0x228] sm:$0xff]
        %v1087 = vld [vmem:[%s417 + $0x230] sm:$0xff]
        %v1088 = vld [vmem:[%s417 + $0x238] sm:$0xff]
        %v1089 = vld [vmem:[%s417 + $0x240] sm:$0xff]
        %v1090 = vld [vmem:[%s417 + $0x248] sm:$0xff]
        %v1091 = vld [vmem:[%s417 + $0x250] sm:$0xff]
        %v1092 = vld [vmem:[%s417 + $0x258] sm:$0xff]
        %v1093 = vld [vmem:[%s417 + $0x260] sm:$0xff]
        %v1094 = vld [vmem:[%s417 + $0x268] sm:$0xff]
        %v1095 = vld [vmem:[%s417 + $0x270] sm:$0xff]
        %v1096 = vld [vmem:[%s417 + $0x278] sm:$0xff]
        %v1097 = vld [vmem:[%s417 + $0x280] sm:$0xff]
        %v1098 = vld [vmem:[%s417 + $0x288] sm:$0xff]
        %v1099 = vld [vmem:[%s417 + $0x290] sm:$0xff]
        %v1100 = vld [vmem:[%s417 + $0x298] sm:$0xff]
        %v1101 = vld [vmem:[%s417 + $0x2a0] sm:$0xff]
        %v1102 = vld [vmem:[%s417 + $0x2a8] sm:$0xff]
        %v1103 = vld [vmem:[%s417 + $0x2b0] sm:$0xff]
        %v1104 = vld [vmem:[%s417 + $0x2b8] sm:$0xff]
        %v1105 = vld [vmem:[%s417 + $0x2c0] sm:$0xff]
        %v1106 = vld [vmem:[%s417 + $0x2c8] sm:$0xff]
        %v1107 = vld [vmem:[%s417 + $0x2d0] sm:$0xff]
        %v1108 = vld [vmem:[%s417 + $0x2d8] sm:$0xff]
        %v1109 = vld [vmem:[%s417 + $0x2e0] sm:$0xff]
        %v1110 = vld [vmem:[%s417 + $0x2e8] sm:$0xff]
        %v1111 = vld [vmem:[%s417 + $0x2f0] sm:$0xff]
        %v1112 = vld [vmem:[%s417 + $0x2f8] sm:$0xff]
        %v1113 = vld [vmem:[%s417 + $0x300] sm:$0xff]
        %v1114 = vld [vmem:[%s417 + $0x308] sm:$0xff]
        %v1115 = vld [vmem:[%s417 + $0x310] sm:$0xff]
        %v1116 = vld [vmem:[%s417 + $0x318] sm:$0xff]
        %v1117 = vld [vmem:[%s417 + $0x320] sm:$0xff]
        %v1118 = vld [vmem:[%s417 + $0x328] sm:$0xff]
        %v1119 = vld [vmem:[%s417 + $0x330] sm:$0xff]
        %v1120 = vld [vmem:[%s417 + $0x338] sm:$0xff]
        %v1121 = vld [vmem:[%s417 + $0x340] sm:$0xff]
        %v1122 = vld [vmem:[%s417 + $0x348] sm:$0xff]
        %v1123 = vld [vmem:[%s417 + $0x350] sm:$0xff]
        %v1124 = vld [vmem:[%s417 + $0x358] sm:$0xff]
        %v1125 = vld [vmem:[%s417 + $0x360] sm:$0xff]
        %v1126 = vld [vmem:[%s417 + $0x368] sm:$0xff]
        %v1127 = vld [vmem:[%s417 + $0x370] sm:$0xff]
        %v1128 = vld [vmem:[%s417 + $0x378] sm:$0xff]
        %v1129 = vld [vmem:[%s417 + $0x380] sm:$0xff]
        %v1130 = vld [vmem:[%s417 + $0x388] sm:$0xff]
        %v1131 = vld [vmem:[%s417 + $0x390] sm:$0xff]
        %v1132 = vld [vmem:[%s417 + $0x398] sm:$0xff]
        %v1133 = vld [vmem:[%s417 + $0x3a0] sm:$0xff]
        %v1134 = vld [vmem:[%s417 + $0x3a8] sm:$0xff]
        %v1135 = vld [vmem:[%s417 + $0x3b0] sm:$0xff]
        %v1136 = vld [vmem:[%s417 + $0x3b8] sm:$0xff]
        %v1137 = vld [vmem:[%s417 + $0x3c0] sm:$0xff]
        %v1138 = vld [vmem:[%s417 + $0x3c8] sm:$0xff]
        %v1139 = vld [vmem:[%s417 + $0x3d0] sm:$0xff]
        %v1140 = vld [vmem:[%s417 + $0x3d8] sm:$0xff]
        %v1141 = vld [vmem:[%s417 + $0x3e0] sm:$0xff]
        %v1142 = vld [vmem:[%s417 + $0x3e8] sm:$0xff]
        %v1143 = vld [vmem:[%s417 + $0x3f0] sm:$0xff]
        %v1144 = vld [vmem:[%s417 + $0x3f8] sm:$0xff]
        %v1145 = vld [vmem:[%s417 + $0x400] sm:$0xff]
        %v1146 = vld [vmem:[%s417 + $0x408] sm:$0xff]
        %v1147 = vld [vmem:[%s417 + $0x410] sm:$0xff]
        %v1148 = vld [vmem:[%s417 + $0x418] sm:$0xff]
        %v1149 = vld [vmem:[%s417 + $0x420] sm:$0xff]
        %v1150 = vld [vmem:[%s417 + $0x428] sm:$0xff]
        %v1151 = vld [vmem:[%s417 + $0x430] sm:$0xff]
        %v1152 = vld [vmem:[%s417 + $0x438] sm:$0xff]
        %v1153 = vld [vmem:[%s417 + $0x440] sm:$0xff]
        %v1154 = vld [vmem:[%s417 + $0x448] sm:$0xff]
        %v1155 = vld [vmem:[%s417 + $0x450] sm:$0xff]
        %v1156 = vld [vmem:[%s417 + $0x458] sm:$0xff]
        %v1157 = vld [vmem:[%s417 + $0x460] sm:$0xff]
        %v1158 = vld [vmem:[%s417 + $0x468] sm:$0xff]
        %v1159 = vld [vmem:[%s417 + $0x470] sm:$0xff]
        %v1160 = vld [vmem:[%s417 + $0x478] sm:$0xff]
        %v1161 = vld [vmem:[%s417 + $0x480] sm:$0xff]
        %v1162 = vld [vmem:[%s417 + $0x488] sm:$0xff]
        %v1163 = vld [vmem:[%s417 + $0x490] sm:$0xff]
        %v1164 = vld [vmem:[%s417 + $0x498] sm:$0xff]
        %v1165 = vld [vmem:[%s417 + $0x4a0] sm:$0xff]
        %v1166 = vld [vmem:[%s417 + $0x4a8] sm:$0xff]
        %v1167 = vld [vmem:[%s417 + $0x4b0] sm:$0xff]
        %v1168 = vld [vmem:[%s417 + $0x4b8] sm:$0xff]
        %v1169 = vld [vmem:[%s417 + $0x4c0] sm:$0xff]
        %v1170 = vld [vmem:[%s417 + $0x4c8] sm:$0xff]
        %v1171 = vld [vmem:[%s417 + $0x4d0] sm:$0xff]
        %v1172 = vld [vmem:[%s417 + $0x4d8] sm:$0xff]
        %v1173 = vld [vmem:[%s417 + $0x4e0] sm:$0xff]
        %v1174 = vld [vmem:[%s417 + $0x4e8] sm:$0xff]
        %v1175 = vld [vmem:[%s417 + $0x4f0] sm:$0xff]
        %v1176 = vld [vmem:[%s417 + $0x4f8] sm:$0xff]
        %v1177 = vld [vmem:[%s417 + $0x500] sm:$0xff]
        %v1178 = vld [vmem:[%s417 + $0x508] sm:$0xff]
        %v1179 = vld [vmem:[%s417 + $0x510] sm:$0xff]
        %v1180 = vld [vmem:[%s417 + $0x518] sm:$0xff]
        %v1181 = vld [vmem:[%s417 + $0x520] sm:$0xff]
        %v1182 = vld [vmem:[%s417 + $0x528] sm:$0xff]
        %v1183 = vld [vmem:[%s417 + $0x530] sm:$0xff]
        %v1184 = vld [vmem:[%s417 + $0x538] sm:$0xff]
        %v1185 = vld [vmem:[%s417 + $0x540] sm:$0xff]
        %v1186 = vld [vmem:[%s417 + $0x548] sm:$0xff]
        %v1187 = vld [vmem:[%s417 + $0x550] sm:$0xff]
        %v1188 = vld [vmem:[%s417 + $0x558] sm:$0xff]
        %v1189 = vld [vmem:[%s417 + $0x560] sm:$0xff]
        %v1190 = vld [vmem:[%s417 + $0x568] sm:$0xff]
        %v1191 = vld [vmem:[%s417 + $0x570] sm:$0xff]
        %v1192 = vld [vmem:[%s417 + $0x578] sm:$0xff]
        %v1193 = vld [vmem:[%s417 + $0x580] sm:$0xff]
        %v1194 = vld [vmem:[%s417 + $0x588] sm:$0xff]
        %v1195 = vld [vmem:[%s417 + $0x590] sm:$0xff]
        %v1196 = vld [vmem:[%s417 + $0x598] sm:$0xff]
        %v1197 = vld [vmem:[%s417 + $0x5a0] sm:$0xff]
        %v1198 = vld [vmem:[%s417 + $0x5a8] sm:$0xff]
        %v1199 = vld [vmem:[%s417 + $0x5b0] sm:$0xff]
        %v1200 = vld [vmem:[%s417 + $0x5b8] sm:$0xff]
        %v1201 = vld [vmem:[%s417 + $0x5c0] sm:$0xff]
        %v1202 = vld [vmem:[%s417 + $0x5c8] sm:$0xff]
        %v1203 = vld [vmem:[%s417 + $0x5d0] sm:$0xff]
        %v1204 = vld [vmem:[%s417 + $0x5d8] sm:$0xff]
        %v1205 = vld [vmem:[%s417 + $0x5e0] sm:$0xff]
        %v1206 = vld [vmem:[%s417 + $0x5e8] sm:$0xff]
        %v1207 = vld [vmem:[%s417 + $0x5f0] sm:$0xff]
        %v1208 = vld [vmem:[%s417 + $0x5f8] sm:$0xff]
        %v1209 = vld [vmem:[%s417 + $0x600] sm:$0xff]
        %v1210 = vld [vmem:[%s417 + $0x608] sm:$0xff]
        %v1211 = vld [vmem:[%s417 + $0x610] sm:$0xff]
        %v1212 = vld [vmem:[%s417 + $0x618] sm:$0xff]
        %v1213 = vld [vmem:[%s417 + $0x620] sm:$0xff]
        %v1214 = vld [vmem:[%s417 + $0x628] sm:$0xff]
        %v1215 = vld [vmem:[%s417 + $0x630] sm:$0xff]
        %v1216 = vld [vmem:[%s417 + $0x638] sm:$0xff]
        %v1217 = vld [vmem:[%s417 + $0x640] sm:$0xff]
        %v1218 = vld [vmem:[%s417 + $0x648] sm:$0xff]
        %v1219 = vld [vmem:[%s417 + $0x650] sm:$0xff]
        %v1220 = vld [vmem:[%s417 + $0x658] sm:$0xff]
        %v1221 = vld [vmem:[%s417 + $0x660] sm:$0xff]
        %v1222 = vld [vmem:[%s417 + $0x668] sm:$0xff]
        %v1223 = vld [vmem:[%s417 + $0x670] sm:$0xff]
        %v1224 = vld [vmem:[%s417 + $0x678] sm:$0xff]
        %v1225 = vld [vmem:[%s417 + $0x680] sm:$0xff]
        %v1226 = vld [vmem:[%s417 + $0x688] sm:$0xff]
        %v1227 = vld [vmem:[%s417 + $0x690] sm:$0xff]
        %v1228 = vld [vmem:[%s417 + $0x698] sm:$0xff]
        %v1229 = vld [vmem:[%s417 + $0x6a0] sm:$0xff]
        %v1230 = vld [vmem:[%s417 + $0x6a8] sm:$0xff]
        %v1231 = vld [vmem:[%s417 + $0x6b0] sm:$0xff]
        %v1232 = vld [vmem:[%s417 + $0x6b8] sm:$0xff]
        %v1233 = vld [vmem:[%s417 + $0x6c0] sm:$0xff]
        %v1234 = vld [vmem:[%s417 + $0x6c8] sm:$0xff]
        %v1235 = vld [vmem:[%s417 + $0x6d0] sm:$0xff]
        %v1236 = vld [vmem:[%s417 + $0x6d8] sm:$0xff]
        %v1237 = vld [vmem:[%s417 + $0x6e0] sm:$0xff]
        %v1238 = vld [vmem:[%s417 + $0x6e8] sm:$0xff]
        %v1239 = vld [vmem:[%s417 + $0x6f0] sm:$0xff]
        %v1240 = vld [vmem:[%s417 + $0x6f8] sm:$0xff]
        %v1241 = vld [vmem:[%s417 + $0x700] sm:$0xff]
        %v1242 = vld [vmem:[%s417 + $0x708] sm:$0xff]
        %v1243 = vld [vmem:[%s417 + $0x710] sm:$0xff]
        %v1244 = vld [vmem:[%s417 + $0x718] sm:$0xff]
        %v1245 = vld [vmem:[%s417 + $0x720] sm:$0xff]
        %v1246 = vld [vmem:[%s417 + $0x728] sm:$0xff]
        %v1247 = vld [vmem:[%s417 + $0x730] sm:$0xff]
        %v1248 = vld [vmem:[%s417 + $0x738] sm:$0xff]
        %v1249 = vld [vmem:[%s417 + $0x740] sm:$0xff]
        %v1250 = vld [vmem:[%s417 + $0x748] sm:$0xff]
        %v1251 = vld [vmem:[%s417 + $0x750] sm:$0xff]
        %v1252 = vld [vmem:[%s417 + $0x758] sm:$0xff]
        %v1253 = vld [vmem:[%s417 + $0x760] sm:$0xff]
        %v1254 = vld [vmem:[%s417 + $0x768] sm:$0xff]
        %v1255 = vld [vmem:[%s417 + $0x770] sm:$0xff]
        %v1256 = vld [vmem:[%s417 + $0x778] sm:$0xff]
        %v1257 = vld [vmem:[%s417 + $0x780] sm:$0xff]
        %v1258 = vld [vmem:[%s417 + $0x788] sm:$0xff]
        %v1259 = vld [vmem:[%s417 + $0x790] sm:$0xff]
        %v1260 = vld [vmem:[%s417 + $0x798] sm:$0xff]
        %v1261 = vld [vmem:[%s417 + $0x7a0] sm:$0xff]
        %v1262 = vld [vmem:[%s417 + $0x7a8] sm:$0xff]
        %v1263 = vld [vmem:[%s417 + $0x7b0] sm:$0xff]
        %v1264 = vld [vmem:[%s417 + $0x7b8] sm:$0xff]
        %v1265 = vld [vmem:[%s417 + $0x7c0] sm:$0xff]
        %v1266 = vld [vmem:[%s417 + $0x7c8] sm:$0xff]
        %v1267 = vld [vmem:[%s417 + $0x7d0] sm:$0xff]
        %v1268 = vld [vmem:[%s417 + $0x7d8] sm:$0xff]
        %v1269 = vld [vmem:[%s417 + $0x7e0] sm:$0xff]
        %v1270 = vld [vmem:[%s417 + $0x7e8] sm:$0xff]
        %v1271 = vld [vmem:[%s417 + $0x7f0] sm:$0xff]
        %v1272 = vld [vmem:[%s417 + $0x7f8] sm:$0xff]
        %v1273 = vld [vmem:[%s417 + $0x800] sm:$0xff]
        %v1274 = vld [vmem:[%s417 + $0x808] sm:$0xff]
        %v1275 = vld [vmem:[%s417 + $0x810] sm:$0xff]
        %v1276 = vld [vmem:[%s417 + $0x818] sm:$0xff]
        %v1277 = vld [vmem:[%s417 + $0x820] sm:$0xff]
        %v1278 = vld [vmem:[%s417 + $0x828] sm:$0xff]
        %v1279 = vld [vmem:[%s417 + $0x830] sm:$0xff]
        %v1280 = vld [vmem:[%s417 + $0x838] sm:$0xff]
        %v1281 = vld [vmem:[%s417 + $0x840] sm:$0xff]
        %v1282 = vld [vmem:[%s417 + $0x848] sm:$0xff]
        %v1283 = vld [vmem:[%s417 + $0x850] sm:$0xff]
        %v1284 = vld [vmem:[%s417 + $0x858] sm:$0xff]
        %v1285 = vld [vmem:[%s417 + $0x860] sm:$0xff]
        %v1286 = vld [vmem:[%s417 + $0x868] sm:$0xff]
        %v1287 = vld [vmem:[%s417 + $0x870] sm:$0xff]
        %v1288 = vld [vmem:[%s417 + $0x878] sm:$0xff]
        %v1289 = vld [vmem:[%s417 + $0x880] sm:$0xff]
        %v1290 = vld [vmem:[%s417 + $0x888] sm:$0xff]
        %v1291 = vld [vmem:[%s417 + $0x890] sm:$0xff]
        %v1292 = vld [vmem:[%s417 + $0x898] sm:$0xff]
        %v1293 = vld [vmem:[%s417 + $0x8a0] sm:$0xff]
        %v1294 = vld [vmem:[%s417 + $0x8a8] sm:$0xff]
        %v1295 = vld [vmem:[%s417 + $0x8b0] sm:$0xff]
        %v1296 = vld [vmem:[%s417 + $0x8b8] sm:$0xff]
        %v1297 = vld [vmem:[%s417 + $0x8c0] sm:$0xff]
        %v1298 = vld [vmem:[%s417 + $0x8c8] sm:$0xff]
        %v1299 = vld [vmem:[%s417 + $0x8d0] sm:$0xff]
        %v1300 = vld [vmem:[%s417 + $0x8d8] sm:$0xff]
        %v1301 = vld [vmem:[%s417 + $0x8e0] sm:$0xff]
        %v1302 = vld [vmem:[%s417 + $0x8e8] sm:$0xff]
        %v1303 = vld [vmem:[%s417 + $0x8f0] sm:$0xff]
        %v1304 = vld [vmem:[%s417 + $0x8f8] sm:$0xff]
        %v1305 = vld [vmem:[%s417 + $0x900] sm:$0xff]
        %v1306 = vld [vmem:[%s417 + $0x908] sm:$0xff]
        %v1307 = vld [vmem:[%s417 + $0x910] sm:$0xff]
        %v1308 = vld [vmem:[%s417 + $0x918] sm:$0xff]
        %v1309 = vld [vmem:[%s417 + $0x920] sm:$0xff]
        %v1310 = vld [vmem:[%s417 + $0x928] sm:$0xff]
        %v1311 = vld [vmem:[%s417 + $0x930] sm:$0xff]
        %v1312 = vld [vmem:[%s417 + $0x938] sm:$0xff]
        %v1313 = vld [vmem:[%s417 + $0x940] sm:$0xff]
        %v1314 = vld [vmem:[%s417 + $0x948] sm:$0xff]
        %v1315 = vld [vmem:[%s417 + $0x950] sm:$0xff]
        %v1316 = vld [vmem:[%s417 + $0x958] sm:$0xff]
        %v1317 = vld [vmem:[%s417 + $0x960] sm:$0xff]
        %v1318 = vld [vmem:[%s417 + $0x968] sm:$0xff]
        %v1319 = vld [vmem:[%s417 + $0x970] sm:$0xff]
        %v1320 = vld [vmem:[%s417 + $0x978] sm:$0xff]
        %v1321 = vld [vmem:[%s417 + $0x980] sm:$0xff]
        %v1322 = vld [vmem:[%s417 + $0x988] sm:$0xff]
        %v1323 = vld [vmem:[%s417 + $0x990] sm:$0xff]
        %v1324 = vld [vmem:[%s417 + $0x998] sm:$0xff]
        %v1325 = vld [vmem:[%s417 + $0x9a0] sm:$0xff]
        %v1326 = vld [vmem:[%s417 + $0x9a8] sm:$0xff]
        %v1327 = vld [vmem:[%s417 + $0x9b0] sm:$0xff]
        %v1328 = vld [vmem:[%s417 + $0x9b8] sm:$0xff]
        %v1329 = vld [vmem:[%s417 + $0x9c0] sm:$0xff]
        %v1330 = vld [vmem:[%s417 + $0x9c8] sm:$0xff]
        %v1331 = vld [vmem:[%s417 + $0x9d0] sm:$0xff]
        %v1332 = vld [vmem:[%s417 + $0x9d8] sm:$0xff]
        %v1333 = vld [vmem:[%s417 + $0x9e0] sm:$0xff]
        %v1334 = vld [vmem:[%s417 + $0x9e8] sm:$0xff]
        %v1335 = vld [vmem:[%s417 + $0x9f0] sm:$0xff]
        %v1336 = vld [vmem:[%s417 + $0x9f8] sm:$0xff]
        %v1337 = vld [vmem:[%s417 + $0xa00] sm:$0xff]
        %v1338 = vld [vmem:[%s417 + $0xa08] sm:$0xff]
        %v1339 = vld [vmem:[%s417 + $0xa10] sm:$0xff]
        %v1340 = vld [vmem:[%s417 + $0xa18] sm:$0xff]
        %v1341 = vld [vmem:[%s417 + $0xa20] sm:$0xff]
        %v1342 = vld [vmem:[%s417 + $0xa28] sm:$0xff]
        %v1343 = vld [vmem:[%s417 + $0xa30] sm:$0xff]
        %v1344 = vld [vmem:[%s417 + $0xa38] sm:$0xff]
        %v1345 = vld [vmem:[%s417 + $0xa40] sm:$0xff]
        %v1346 = vld [vmem:[%s417 + $0xa48] sm:$0xff]
        %v1347 = vld [vmem:[%s417 + $0xa50] sm:$0xff]
        %v1348 = vld [vmem:[%s417 + $0xa58] sm:$0xff]
        %v1349 = vld [vmem:[%s417 + $0xa60] sm:$0xff]
        %v1350 = vld [vmem:[%s417 + $0xa68] sm:$0xff]
        %v1351 = vld [vmem:[%s417 + $0xa70] sm:$0xff]
        %v1352 = vld [vmem:[%s417 + $0xa78] sm:$0xff]
        %v1353 = vld [vmem:[%s417 + $0xa80] sm:$0xff]
        %v1354 = vld [vmem:[%s417 + $0xa88] sm:$0xff]
        %v1355 = vld [vmem:[%s417 + $0xa90] sm:$0xff]
        %v1356 = vld [vmem:[%s417 + $0xa98] sm:$0xff]
        %v1357 = vld [vmem:[%s417 + $0xaa0] sm:$0xff]
        %v1358 = vld [vmem:[%s417 + $0xaa8] sm:$0xff]
        %v1359 = vld [vmem:[%s417 + $0xab0] sm:$0xff]
        %v1360 = vld [vmem:[%s417 + $0xab8] sm:$0xff]
        %v1361 = vld [vmem:[%s417 + $0xac0] sm:$0xff]
        %v1362 = vld [vmem:[%s417 + $0xac8] sm:$0xff]
        %v1363 = vld [vmem:[%s417 + $0xad0] sm:$0xff]
        %v1364 = vld [vmem:[%s417 + $0xad8] sm:$0xff]
        %v1365 = vld [vmem:[%s417 + $0xae0] sm:$0xff]
        %v1366 = vld [vmem:[%s417 + $0xae8] sm:$0xff]
        %v1367 = vld [vmem:[%s417 + $0xaf0] sm:$0xff]
        %v1368 = vld [vmem:[%s417 + $0xaf8] sm:$0xff]
        %v1369 = vld [vmem:[%s417 + $0xb00] sm:$0xff]
        %v1370 = vld [vmem:[%s417 + $0xb08] sm:$0xff]
        %v1371 = vld [vmem:[%s417 + $0xb10] sm:$0xff]
        %v1372 = vld [vmem:[%s417 + $0xb18] sm:$0xff]
        %v1373 = vld [vmem:[%s417 + $0xb20] sm:$0xff]
        %v1374 = vld [vmem:[%s417 + $0xb28] sm:$0xff]
        %v1375 = vld [vmem:[%s417 + $0xb30] sm:$0xff]
        %v1376 = vld [vmem:[%s417 + $0xb38] sm:$0xff]
        %v1377 = vld [vmem:[%s417 + $0xb40] sm:$0xff]
        %v1378 = vld [vmem:[%s417 + $0xb48] sm:$0xff]
        %v1379 = vld [vmem:[%s417 + $0xb50] sm:$0xff]
        %v1380 = vld [vmem:[%s417 + $0xb58] sm:$0xff]
        %v1381 = vld [vmem:[%s417 + $0xb60] sm:$0xff]
        %v1382 = vld [vmem:[%s417 + $0xb68] sm:$0xff]
        %v1383 = vld [vmem:[%s417 + $0xb70] sm:$0xff]
        %v1384 = vld [vmem:[%s417 + $0xb78] sm:$0xff]
        %v1385 = vld [vmem:[%s417 + $0xb80] sm:$0xff]
        %v1386 = vld [vmem:[%s417 + $0xb88] sm:$0xff]
        %v1387 = vld [vmem:[%s417 + $0xb90] sm:$0xff]
        %v1388 = vld [vmem:[%s417 + $0xb98] sm:$0xff]
        %v1389 = vld [vmem:[%s417 + $0xba0] sm:$0xff]
        %v1390 = vld [vmem:[%s417 + $0xba8] sm:$0xff]
        %v1391 = vld [vmem:[%s417 + $0xbb0] sm:$0xff]
        %v1392 = vld [vmem:[%s417 + $0xbb8] sm:$0xff]
        %v1393 = vld [vmem:[%s417 + $0xbc0] sm:$0xff]
        %v1394 = vld [vmem:[%s417 + $0xbc8] sm:$0xff]
        %v1395 = vld [vmem:[%s417 + $0xbd0] sm:$0xff]
        %v1396 = vld [vmem:[%s417 + $0xbd8] sm:$0xff]
        %v1397 = vld [vmem:[%s417 + $0xbe0] sm:$0xff]
        %v1398 = vld [vmem:[%s417 + $0xbe8] sm:$0xff]
        %v1399 = vld [vmem:[%s417 + $0xbf0] sm:$0xff]
        %v1400 = vld [vmem:[%s417 + $0xbf8] sm:$0xff]
        %v1401 = vld [vmem:[%s417 + $0xc00] sm:$0xff]
        %v1402 = vld [vmem:[%s417 + $0xc08] sm:$0xff]
        %v1403 = vld [vmem:[%s417 + $0xc10] sm:$0xff]
        %v1404 = vld [vmem:[%s417 + $0xc18] sm:$0xff]
        %v1405 = vld [vmem:[%s417 + $0xc20] sm:$0xff]
        %v1406 = vld [vmem:[%s417 + $0xc28] sm:$0xff]
        %v1407 = vld [vmem:[%s417 + $0xc30] sm:$0xff]
        %v1408 = vld [vmem:[%s417 + $0xc38] sm:$0xff]
        %v1409 = vld [vmem:[%s417 + $0xc40] sm:$0xff]
        %v1410 = vld [vmem:[%s417 + $0xc48] sm:$0xff]
        %v1411 = vld [vmem:[%s417 + $0xc50] sm:$0xff]
        %v1412 = vld [vmem:[%s417 + $0xc58] sm:$0xff]
        %v1413 = vld [vmem:[%s417 + $0xc60] sm:$0xff]
        %v1414 = vld [vmem:[%s417 + $0xc68] sm:$0xff]
        %v1415 = vld [vmem:[%s417 + $0xc70] sm:$0xff]
        %v1416 = vld [vmem:[%s417 + $0xc78] sm:$0xff]
        %v1417 = vld [vmem:[%s417 + $0xc80] sm:$0xff]
        %v1418 = vld [vmem:[%s417 + $0xc88] sm:$0xff]
        %v1419 = vld [vmem:[%s417 + $0xc90] sm:$0xff]
        %v1420 = vld [vmem:[%s417 + $0xc98] sm:$0xff]
        %v1421 = vld [vmem:[%s417 + $0xca0] sm:$0xff]
        %v1422 = vld [vmem:[%s417 + $0xca8] sm:$0xff]
        %v1423 = vld [vmem:[%s417 + $0xcb0] sm:$0xff]
        %v1424 = vld [vmem:[%s417 + $0xcb8] sm:$0xff]
        %v1425 = vld [vmem:[%s417 + $0xcc0] sm:$0xff]
        %v1426 = vld [vmem:[%s417 + $0xcc8] sm:$0xff]
        %v1427 = vld [vmem:[%s417 + $0xcd0] sm:$0xff]
        %v1428 = vld [vmem:[%s417 + $0xcd8] sm:$0xff]
        %v1429 = vld [vmem:[%s417 + $0xce0] sm:$0xff]
        %v1430 = vld [vmem:[%s417 + $0xce8] sm:$0xff]
        %v1431 = vld [vmem:[%s417 + $0xcf0] sm:$0xff]
        %v1432 = vld [vmem:[%s417 + $0xcf8] sm:$0xff]
        %v1433 = vld [vmem:[%s417 + $0xd00] sm:$0xff]
        %v1434 = vld [vmem:[%s417 + $0xd08] sm:$0xff]
        %v1435 = vld [vmem:[%s417 + $0xd10] sm:$0xff]
        %v1436 = vld [vmem:[%s417 + $0xd18] sm:$0xff]
        %v1437 = vld [vmem:[%s417 + $0xd20] sm:$0xff]
        %v1438 = vld [vmem:[%s417 + $0xd28] sm:$0xff]
        %v1439 = vld [vmem:[%s417 + $0xd30] sm:$0xff]
        %v1440 = vld [vmem:[%s417 + $0xd38] sm:$0xff]
        %v1441 = vld [vmem:[%s417 + $0xd40] sm:$0xff]
        %v1442 = vld [vmem:[%s417 + $0xd48] sm:$0xff]
        %v1443 = vld [vmem:[%s417 + $0xd50] sm:$0xff]
        %v1444 = vld [vmem:[%s417 + $0xd58] sm:$0xff]
        %v1445 = vld [vmem:[%s417 + $0xd60] sm:$0xff]
        %v1446 = vld [vmem:[%s417 + $0xd68] sm:$0xff]
        %v1447 = vld [vmem:[%s417 + $0xd70] sm:$0xff]
        %v1448 = vld [vmem:[%s417 + $0xd78] sm:$0xff]
        %v1449 = vld [vmem:[%s417 + $0xd80] sm:$0xff]
        %v1450 = vld [vmem:[%s417 + $0xd88] sm:$0xff]
        %v1451 = vld [vmem:[%s417 + $0xd90] sm:$0xff]
        %v1452 = vld [vmem:[%s417 + $0xd98] sm:$0xff]
        %v1453 = vld [vmem:[%s417 + $0xda0] sm:$0xff]
        %v1454 = vld [vmem:[%s417 + $0xda8] sm:$0xff]
        %v1455 = vld [vmem:[%s417 + $0xdb0] sm:$0xff]
        %v1456 = vld [vmem:[%s417 + $0xdb8] sm:$0xff]
        %v1457 = vld [vmem:[%s417 + $0xdc0] sm:$0xff]
        %v1458 = vld [vmem:[%s417 + $0xdc8] sm:$0xff]
        %v1459 = vld [vmem:[%s417 + $0xdd0] sm:$0xff]
        %v1460 = vld [vmem:[%s417 + $0xdd8] sm:$0xff]
        %v1461 = vld [vmem:[%s417 + $0xde0] sm:$0xff]
        %v1462 = vld [vmem:[%s417 + $0xde8] sm:$0xff]
        %v1463 = vld [vmem:[%s417 + $0xdf0] sm:$0xff]
        %v1464 = vld [vmem:[%s417 + $0xdf8] sm:$0xff]
        %v1465 = vld [vmem:[%s417 + $0xe00] sm:$0xff]
        %v1466 = vld [vmem:[%s417 + $0xe08] sm:$0xff]
        %v1467 = vld [vmem:[%s417 + $0xe10] sm:$0xff]
        %v1468 = vld [vmem:[%s417 + $0xe18] sm:$0xff]
        %v1469 = vld [vmem:[%s417 + $0xe20] sm:$0xff]
        %v1470 = vld [vmem:[%s417 + $0xe28] sm:$0xff]
        %v1471 = vld [vmem:[%s417 + $0xe30] sm:$0xff]
        %v1472 = vld [vmem:[%s417 + $0xe38] sm:$0xff]
        %v1473 = vld [vmem:[%s417 + $0xe40] sm:$0xff]
        %v1474 = vld [vmem:[%s417 + $0xe48] sm:$0xff]
        %v1475 = vld [vmem:[%s417 + $0xe50] sm:$0xff]
        %v1476 = vld [vmem:[%s417 + $0xe58] sm:$0xff]
        %v1477 = vld [vmem:[%s417 + $0xe60] sm:$0xff]
        %v1478 = vld [vmem:[%s417 + $0xe68] sm:$0xff]
        %v1479 = vld [vmem:[%s417 + $0xe70] sm:$0xff]
        %v1480 = vld [vmem:[%s417 + $0xe78] sm:$0xff]
        %v1481 = vld [vmem:[%s417 + $0xe80] sm:$0xff]
        %v1482 = vld [vmem:[%s417 + $0xe88] sm:$0xff]
        %v1483 = vld [vmem:[%s417 + $0xe90] sm:$0xff]
        %v1484 = vld [vmem:[%s417 + $0xe98] sm:$0xff]
        %v1485 = vld [vmem:[%s417 + $0xea0] sm:$0xff]
        %v1486 = vld [vmem:[%s417 + $0xea8] sm:$0xff]
        %v1487 = vld [vmem:[%s417 + $0xeb0] sm:$0xff]
        %v1488 = vld [vmem:[%s417 + $0xeb8] sm:$0xff]
        %v1489 = vld [vmem:[%s417 + $0xec0] sm:$0xff]
        %v1490 = vld [vmem:[%s417 + $0xec8] sm:$0xff]
        %v1491 = vld [vmem:[%s417 + $0xed0] sm:$0xff]
        %v1492 = vld [vmem:[%s417 + $0xed8] sm:$0xff]
        %v1493 = vld [vmem:[%s417 + $0xee0] sm:$0xff]
        %v1494 = vld [vmem:[%s417 + $0xee8] sm:$0xff]
        %v1495 = vld [vmem:[%s417 + $0xef0] sm:$0xff]
        %v1496 = vld [vmem:[%s417 + $0xef8] sm:$0xff]
        %v1497 = vld [vmem:[%s417 + $0xf00] sm:$0xff]
        %v1498 = vld [vmem:[%s417 + $0xf08] sm:$0xff]
        %v1499 = vld [vmem:[%s417 + $0xf10] sm:$0xff]
        %v1500 = vld [vmem:[%s417 + $0xf18] sm:$0xff]
        %v1501 = vld [vmem:[%s417 + $0xf20] sm:$0xff]
        %v1502 = vld [vmem:[%s417 + $0xf28] sm:$0xff]
        %v1503 = vld [vmem:[%s417 + $0xf30] sm:$0xff]
        %v1504 = vld [vmem:[%s417 + $0xf38] sm:$0xff]
        %v1505 = vld [vmem:[%s417 + $0xf40] sm:$0xff]
        %v1506 = vld [vmem:[%s417 + $0xf48] sm:$0xff]
        %v1507 = vld [vmem:[%s417 + $0xf50] sm:$0xff]
        %v1508 = vld [vmem:[%s417 + $0xf58] sm:$0xff]
        %v1509 = vld [vmem:[%s417 + $0xf60] sm:$0xff]
        %v1510 = vld [vmem:[%s417 + $0xf68] sm:$0xff]
        %v1511 = vld [vmem:[%s417 + $0xf70] sm:$0xff]
        %v1512 = vld [vmem:[%s417 + $0xf78] sm:$0xff]
        %v1513 = vld [vmem:[%s417 + $0xf80] sm:$0xff]
        %v1514 = vld [vmem:[%s417 + $0xf88] sm:$0xff]
        %v1515 = vld [vmem:[%s417 + $0xf90] sm:$0xff]
        %v1516 = vld [vmem:[%s417 + $0xf98] sm:$0xff]
        %v1517 = vld [vmem:[%s417 + $0xfa0] sm:$0xff]
        %v1518 = vld [vmem:[%s417 + $0xfa8] sm:$0xff]
        %v1519 = vld [vmem:[%s417 + $0xfb0] sm:$0xff]
        %v1520 = vld [vmem:[%s417 + $0xfb8] sm:$0xff]
        %v1521 = vld [vmem:[%s417 + $0xfc0] sm:$0xff]
        %v1522 = vld [vmem:[%s417 + $0xfc8] sm:$0xff]
        %v1523 = vld [vmem:[%s417 + $0xfd0] sm:$0xff]
        %v1524 = vld [vmem:[%s417 + $0xfd8] sm:$0xff]
        %v1525 = vld [vmem:[%s417 + $0xfe0] sm:$0xff]
        %v1526 = vld [vmem:[%s417 + $0xfe8] sm:$0xff]
        %v1527 = vld [vmem:[%s417 + $0xff0] sm:$0xff]
        %v1528 = vld [vmem:[%s417 + $0xff8] sm:$0xff]
        %v1529 = vld [vmem:[%s427] sm:$0xff]
        %v1531 = vperm.slane %v1529, 0
        %v1532 = vperm.slane %v1529, 1
        %v1533 = vperm.slane %v1529, 2
        %v1534 = vperm.slane %v1529, 3
        %v1535 = vperm.slane %v1529, 4
        %v1536 = vperm.slane %v1529, 5
        %v1537 = vperm.slane %v1529, 6
        %v1538 = vperm.slane %v1529, 7
        %v2059 = vunpack.c.l.b16 %v1017
        %v2060 = vunpack.c.h.b16 %v1017
        %v2061 = vunpack.c.l.b16 %v1018
        %v2062 = vunpack.c.h.b16 %v1018
        %v2063 = vunpack.c.l.b16 %v1019
        %v2064 = vunpack.c.h.b16 %v1019
        %v2065 = vunpack.c.l.b16 %v1020
        %v2066 = vunpack.c.h.b16 %v1020
        %v2067 = vunpack.c.l.b16 %v1021
        %v2068 = vunpack.c.h.b16 %v1021
        %v2069 = vunpack.c.l.b16 %v1022
        %v2070 = vunpack.c.h.b16 %v1022
        %v2071 = vunpack.c.l.b16 %v1023
        %v2072 = vunpack.c.h.b16 %v1023
        %v2073 = vunpack.c.l.b16 %v1024
        %v2074 = vunpack.c.h.b16 %v1024
        %v2075 = vunpack.c.l.b16 %v1025
        %v2076 = vunpack.c.h.b16 %v1025
        %v2077 = vunpack.c.l.b16 %v1026
        %v2078 = vunpack.c.h.b16 %v1026
        %v2079 = vunpack.c.l.b16 %v1027
        %v2080 = vunpack.c.h.b16 %v1027
        %v2081 = vunpack.c.l.b16 %v1028
        %v2082 = vunpack.c.h.b16 %v1028
        %v2083 = vunpack.c.l.b16 %v1029
        %v2084 = vunpack.c.h.b16 %v1029
        %v2085 = vunpack.c.l.b16 %v1030
        %v2086 = vunpack.c.h.b16 %v1030
        %v2087 = vunpack.c.l.b16 %v1031
        %v2088 = vunpack.c.h.b16 %v1031
        %v2089 = vunpack.c.l.b16 %v1032
        %v2090 = vunpack.c.h.b16 %v1032
        %v2091 = vunpack.c.l.b16 %v1033
        %v2092 = vunpack.c.h.b16 %v1033
        %v2093 = vunpack.c.l.b16 %v1034
        %v2094 = vunpack.c.h.b16 %v1034
        %v2095 = vunpack.c.l.b16 %v1035
        %v2096 = vunpack.c.h.b16 %v1035
        %v2097 = vunpack.c.l.b16 %v1036
        %v2098 = vunpack.c.h.b16 %v1036
        %v2099 = vunpack.c.l.b16 %v1037
        %v2100 = vunpack.c.h.b16 %v1037
        %v2101 = vunpack.c.l.b16 %v1038
        %v2102 = vunpack.c.h.b16 %v1038
        %v2103 = vunpack.c.l.b16 %v1039
        %v2104 = vunpack.c.h.b16 %v1039
        %v2105 = vunpack.c.l.b16 %v1040
        %v2106 = vunpack.c.h.b16 %v1040
        %v2107 = vunpack.c.l.b16 %v1041
        %v2108 = vunpack.c.h.b16 %v1041
        %v2109 = vunpack.c.l.b16 %v1042
        %v2110 = vunpack.c.h.b16 %v1042
        %v2111 = vunpack.c.l.b16 %v1043
        %v2112 = vunpack.c.h.b16 %v1043
        %v2113 = vunpack.c.l.b16 %v1044
        %v2114 = vunpack.c.h.b16 %v1044
        %v2115 = vunpack.c.l.b16 %v1045
        %v2116 = vunpack.c.h.b16 %v1045
        %v2117 = vunpack.c.l.b16 %v1046
        %v2118 = vunpack.c.h.b16 %v1046
        %v2119 = vunpack.c.l.b16 %v1047
        %v2120 = vunpack.c.h.b16 %v1047
        %v2121 = vunpack.c.l.b16 %v1048
        %v2122 = vunpack.c.h.b16 %v1048
        %v2123 = vunpack.c.l.b16 %v1049
        %v2124 = vunpack.c.h.b16 %v1049
        %v2125 = vunpack.c.l.b16 %v1050
        %v2126 = vunpack.c.h.b16 %v1050
        %v2127 = vunpack.c.l.b16 %v1051
        %v2128 = vunpack.c.h.b16 %v1051
        %v2129 = vunpack.c.l.b16 %v1052
        %v2130 = vunpack.c.h.b16 %v1052
        %v2131 = vunpack.c.l.b16 %v1053
        %v2132 = vunpack.c.h.b16 %v1053
        %v2133 = vunpack.c.l.b16 %v1054
        %v2134 = vunpack.c.h.b16 %v1054
        %v2135 = vunpack.c.l.b16 %v1055
        %v2136 = vunpack.c.h.b16 %v1055
        %v2137 = vunpack.c.l.b16 %v1056
        %v2138 = vunpack.c.h.b16 %v1056
        %v2139 = vunpack.c.l.b16 %v1057
        %v2140 = vunpack.c.h.b16 %v1057
        %v2141 = vunpack.c.l.b16 %v1058
        %v2142 = vunpack.c.h.b16 %v1058
        %v2143 = vunpack.c.l.b16 %v1059
        %v2144 = vunpack.c.h.b16 %v1059
        %v2145 = vunpack.c.l.b16 %v1060
        %v2146 = vunpack.c.h.b16 %v1060
        %v2147 = vunpack.c.l.b16 %v1061
        %v2148 = vunpack.c.h.b16 %v1061
        %v2149 = vunpack.c.l.b16 %v1062
        %v2150 = vunpack.c.h.b16 %v1062
        %v2151 = vunpack.c.l.b16 %v1063
        %v2152 = vunpack.c.h.b16 %v1063
        %v2153 = vunpack.c.l.b16 %v1064
        %v2154 = vunpack.c.h.b16 %v1064
        %v2155 = vunpack.c.l.b16 %v1065
        %v2156 = vunpack.c.h.b16 %v1065
        %v2157 = vunpack.c.l.b16 %v1066
        %v2158 = vunpack.c.h.b16 %v1066
        %v2159 = vunpack.c.l.b16 %v1067
        %v2160 = vunpack.c.h.b16 %v1067
        %v2161 = vunpack.c.l.b16 %v1068
        %v2162 = vunpack.c.h.b16 %v1068
        %v2163 = vunpack.c.l.b16 %v1069
        %v2164 = vunpack.c.h.b16 %v1069
        %v2165 = vunpack.c.l.b16 %v1070
        %v2166 = vunpack.c.h.b16 %v1070
        %v2167 = vunpack.c.l.b16 %v1071
        %v2168 = vunpack.c.h.b16 %v1071
        %v2169 = vunpack.c.l.b16 %v1072
        %v2170 = vunpack.c.h.b16 %v1072
        %v2171 = vunpack.c.l.b16 %v1073
        %v2172 = vunpack.c.h.b16 %v1073
        %v2173 = vunpack.c.l.b16 %v1074
        %v2174 = vunpack.c.h.b16 %v1074
        %v2175 = vunpack.c.l.b16 %v1075
        %v2176 = vunpack.c.h.b16 %v1075
        %v2177 = vunpack.c.l.b16 %v1076
        %v2178 = vunpack.c.h.b16 %v1076
        %v2179 = vunpack.c.l.b16 %v1077
        %v2180 = vunpack.c.h.b16 %v1077
        %v2181 = vunpack.c.l.b16 %v1078
        %v2182 = vunpack.c.h.b16 %v1078
        %v2183 = vunpack.c.l.b16 %v1079
        %v2184 = vunpack.c.h.b16 %v1079
        %v2185 = vunpack.c.l.b16 %v1080
        %v2186 = vunpack.c.h.b16 %v1080
        %v2187 = vunpack.c.l.b16 %v1081
        %v2188 = vunpack.c.h.b16 %v1081
        %v2189 = vunpack.c.l.b16 %v1082
        %v2190 = vunpack.c.h.b16 %v1082
        %v2191 = vunpack.c.l.b16 %v1083
        %v2192 = vunpack.c.h.b16 %v1083
        %v2193 = vunpack.c.l.b16 %v1084
        %v2194 = vunpack.c.h.b16 %v1084
        %v2195 = vunpack.c.l.b16 %v1085
        %v2196 = vunpack.c.h.b16 %v1085
        %v2197 = vunpack.c.l.b16 %v1086
        %v2198 = vunpack.c.h.b16 %v1086
        %v2199 = vunpack.c.l.b16 %v1087
        %v2200 = vunpack.c.h.b16 %v1087
        %v2201 = vunpack.c.l.b16 %v1088
        %v2202 = vunpack.c.h.b16 %v1088
        %v2203 = vunpack.c.l.b16 %v1089
        %v2204 = vunpack.c.h.b16 %v1089
        %v2205 = vunpack.c.l.b16 %v1090
        %v2206 = vunpack.c.h.b16 %v1090
        %v2207 = vunpack.c.l.b16 %v1091
        %v2208 = vunpack.c.h.b16 %v1091
        %v2209 = vunpack.c.l.b16 %v1092
        %v2210 = vunpack.c.h.b16 %v1092
        %v2211 = vunpack.c.l.b16 %v1093
        %v2212 = vunpack.c.h.b16 %v1093
        %v2213 = vunpack.c.l.b16 %v1094
        %v2214 = vunpack.c.h.b16 %v1094
        %v2215 = vunpack.c.l.b16 %v1095
        %v2216 = vunpack.c.h.b16 %v1095
        %v2217 = vunpack.c.l.b16 %v1096
        %v2218 = vunpack.c.h.b16 %v1096
        %v2219 = vunpack.c.l.b16 %v1097
        %v2220 = vunpack.c.h.b16 %v1097
        %v2221 = vunpack.c.l.b16 %v1098
        %v2222 = vunpack.c.h.b16 %v1098
        %v2223 = vunpack.c.l.b16 %v1099
        %v2224 = vunpack.c.h.b16 %v1099
        %v2225 = vunpack.c.l.b16 %v1100
        %v2226 = vunpack.c.h.b16 %v1100
        %v2227 = vunpack.c.l.b16 %v1101
        %v2228 = vunpack.c.h.b16 %v1101
        %v2229 = vunpack.c.l.b16 %v1102
        %v2230 = vunpack.c.h.b16 %v1102
        %v2231 = vunpack.c.l.b16 %v1103
        %v2232 = vunpack.c.h.b16 %v1103
        %v2233 = vunpack.c.l.b16 %v1104
        %v2234 = vunpack.c.h.b16 %v1104
        %v2235 = vunpack.c.l.b16 %v1105
        %v2236 = vunpack.c.h.b16 %v1105
        %v2237 = vunpack.c.l.b16 %v1106
        %v2238 = vunpack.c.h.b16 %v1106
        %v2239 = vunpack.c.l.b16 %v1107
        %v2240 = vunpack.c.h.b16 %v1107
        %v2241 = vunpack.c.l.b16 %v1108
        %v2242 = vunpack.c.h.b16 %v1108
        %v2243 = vunpack.c.l.b16 %v1109
        %v2244 = vunpack.c.h.b16 %v1109
        %v2245 = vunpack.c.l.b16 %v1110
        %v2246 = vunpack.c.h.b16 %v1110
        %v2247 = vunpack.c.l.b16 %v1111
        %v2248 = vunpack.c.h.b16 %v1111
        %v2249 = vunpack.c.l.b16 %v1112
        %v2250 = vunpack.c.h.b16 %v1112
        %v2251 = vunpack.c.l.b16 %v1113
        %v2252 = vunpack.c.h.b16 %v1113
        %v2253 = vunpack.c.l.b16 %v1114
        %v2254 = vunpack.c.h.b16 %v1114
        %v2255 = vunpack.c.l.b16 %v1115
        %v2256 = vunpack.c.h.b16 %v1115
        %v2257 = vunpack.c.l.b16 %v1116
        %v2258 = vunpack.c.h.b16 %v1116
        %v2259 = vunpack.c.l.b16 %v1117
        %v2260 = vunpack.c.h.b16 %v1117
        %v2261 = vunpack.c.l.b16 %v1118
        %v2262 = vunpack.c.h.b16 %v1118
        %v2263 = vunpack.c.l.b16 %v1119
        %v2264 = vunpack.c.h.b16 %v1119
        %v2265 = vunpack.c.l.b16 %v1120
        %v2266 = vunpack.c.h.b16 %v1120
        %v2267 = vunpack.c.l.b16 %v1121
        %v2268 = vunpack.c.h.b16 %v1121
        %v2269 = vunpack.c.l.b16 %v1122
        %v2270 = vunpack.c.h.b16 %v1122
        %v2271 = vunpack.c.l.b16 %v1123
        %v2272 = vunpack.c.h.b16 %v1123
        %v2273 = vunpack.c.l.b16 %v1124
        %v2274 = vunpack.c.h.b16 %v1124
        %v2275 = vunpack.c.l.b16 %v1125
        %v2276 = vunpack.c.h.b16 %v1125
        %v2277 = vunpack.c.l.b16 %v1126
        %v2278 = vunpack.c.h.b16 %v1126
        %v2279 = vunpack.c.l.b16 %v1127
        %v2280 = vunpack.c.h.b16 %v1127
        %v2281 = vunpack.c.l.b16 %v1128
        %v2282 = vunpack.c.h.b16 %v1128
        %v2283 = vunpack.c.l.b16 %v1129
        %v2284 = vunpack.c.h.b16 %v1129
        %v2285 = vunpack.c.l.b16 %v1130
        %v2286 = vunpack.c.h.b16 %v1130
        %v2287 = vunpack.c.l.b16 %v1131
        %v2288 = vunpack.c.h.b16 %v1131
        %v2289 = vunpack.c.l.b16 %v1132
        %v2290 = vunpack.c.h.b16 %v1132
        %v2291 = vunpack.c.l.b16 %v1133
        %v2292 = vunpack.c.h.b16 %v1133
        %v2293 = vunpack.c.l.b16 %v1134
        %v2294 = vunpack.c.h.b16 %v1134
        %v2295 = vunpack.c.l.b16 %v1135
        %v2296 = vunpack.c.h.b16 %v1135
        %v2297 = vunpack.c.l.b16 %v1136
        %v2298 = vunpack.c.h.b16 %v1136
        %v2299 = vunpack.c.l.b16 %v1137
        %v2300 = vunpack.c.h.b16 %v1137
        %v2301 = vunpack.c.l.b16 %v1138
        %v2302 = vunpack.c.h.b16 %v1138
        %v2303 = vunpack.c.l.b16 %v1139
        %v2304 = vunpack.c.h.b16 %v1139
        %v2305 = vunpack.c.l.b16 %v1140
        %v2306 = vunpack.c.h.b16 %v1140
        %v2307 = vunpack.c.l.b16 %v1141
        %v2308 = vunpack.c.h.b16 %v1141
        %v2309 = vunpack.c.l.b16 %v1142
        %v2310 = vunpack.c.h.b16 %v1142
        %v2311 = vunpack.c.l.b16 %v1143
        %v2312 = vunpack.c.h.b16 %v1143
        %v2313 = vunpack.c.l.b16 %v1144
        %v2314 = vunpack.c.h.b16 %v1144
        %v2315 = vunpack.c.l.b16 %v1145
        %v2316 = vunpack.c.h.b16 %v1145
        %v2317 = vunpack.c.l.b16 %v1146
        %v2318 = vunpack.c.h.b16 %v1146
        %v2319 = vunpack.c.l.b16 %v1147
        %v2320 = vunpack.c.h.b16 %v1147
        %v2321 = vunpack.c.l.b16 %v1148
        %v2322 = vunpack.c.h.b16 %v1148
        %v2323 = vunpack.c.l.b16 %v1149
        %v2324 = vunpack.c.h.b16 %v1149
        %v2325 = vunpack.c.l.b16 %v1150
        %v2326 = vunpack.c.h.b16 %v1150
        %v2327 = vunpack.c.l.b16 %v1151
        %v2328 = vunpack.c.h.b16 %v1151
        %v2329 = vunpack.c.l.b16 %v1152
        %v2330 = vunpack.c.h.b16 %v1152
        %v2331 = vunpack.c.l.b16 %v1153
        %v2332 = vunpack.c.h.b16 %v1153
        %v2333 = vunpack.c.l.b16 %v1154
        %v2334 = vunpack.c.h.b16 %v1154
        %v2335 = vunpack.c.l.b16 %v1155
        %v2336 = vunpack.c.h.b16 %v1155
        %v2337 = vunpack.c.l.b16 %v1156
        %v2338 = vunpack.c.h.b16 %v1156
        %v2339 = vunpack.c.l.b16 %v1157
        %v2340 = vunpack.c.h.b16 %v1157
        %v2341 = vunpack.c.l.b16 %v1158
        %v2342 = vunpack.c.h.b16 %v1158
        %v2343 = vunpack.c.l.b16 %v1159
        %v2344 = vunpack.c.h.b16 %v1159
        %v2345 = vunpack.c.l.b16 %v1160
        %v2346 = vunpack.c.h.b16 %v1160
        %v2347 = vunpack.c.l.b16 %v1161
        %v2348 = vunpack.c.h.b16 %v1161
        %v2349 = vunpack.c.l.b16 %v1162
        %v2350 = vunpack.c.h.b16 %v1162
        %v2351 = vunpack.c.l.b16 %v1163
        %v2352 = vunpack.c.h.b16 %v1163
        %v2353 = vunpack.c.l.b16 %v1164
        %v2354 = vunpack.c.h.b16 %v1164
        %v2355 = vunpack.c.l.b16 %v1165
        %v2356 = vunpack.c.h.b16 %v1165
        %v2357 = vunpack.c.l.b16 %v1166
        %v2358 = vunpack.c.h.b16 %v1166
        %v2359 = vunpack.c.l.b16 %v1167
        %v2360 = vunpack.c.h.b16 %v1167
        %v2361 = vunpack.c.l.b16 %v1168
        %v2362 = vunpack.c.h.b16 %v1168
        %v2363 = vunpack.c.l.b16 %v1169
        %v2364 = vunpack.c.h.b16 %v1169
        %v2365 = vunpack.c.l.b16 %v1170
        %v2366 = vunpack.c.h.b16 %v1170
        %v2367 = vunpack.c.l.b16 %v1171
        %v2368 = vunpack.c.h.b16 %v1171
        %v2369 = vunpack.c.l.b16 %v1172
        %v2370 = vunpack.c.h.b16 %v1172
        %v2371 = vunpack.c.l.b16 %v1173
        %v2372 = vunpack.c.h.b16 %v1173
        %v2373 = vunpack.c.l.b16 %v1174
        %v2374 = vunpack.c.h.b16 %v1174
        %v2375 = vunpack.c.l.b16 %v1175
        %v2376 = vunpack.c.h.b16 %v1175
        %v2377 = vunpack.c.l.b16 %v1176
        %v2378 = vunpack.c.h.b16 %v1176
        %v2379 = vunpack.c.l.b16 %v1177
        %v2380 = vunpack.c.h.b16 %v1177
        %v2381 = vunpack.c.l.b16 %v1178
        %v2382 = vunpack.c.h.b16 %v1178
        %v2383 = vunpack.c.l.b16 %v1179
        %v2384 = vunpack.c.h.b16 %v1179
        %v2385 = vunpack.c.l.b16 %v1180
        %v2386 = vunpack.c.h.b16 %v1180
        %v2387 = vunpack.c.l.b16 %v1181
        %v2388 = vunpack.c.h.b16 %v1181
        %v2389 = vunpack.c.l.b16 %v1182
        %v2390 = vunpack.c.h.b16 %v1182
        %v2391 = vunpack.c.l.b16 %v1183
        %v2392 = vunpack.c.h.b16 %v1183
        %v2393 = vunpack.c.l.b16 %v1184
        %v2394 = vunpack.c.h.b16 %v1184
        %v2395 = vunpack.c.l.b16 %v1185
        %v2396 = vunpack.c.h.b16 %v1185
        %v2397 = vunpack.c.l.b16 %v1186
        %v2398 = vunpack.c.h.b16 %v1186
        %v2399 = vunpack.c.l.b16 %v1187
        %v2400 = vunpack.c.h.b16 %v1187
        %v2401 = vunpack.c.l.b16 %v1188
        %v2402 = vunpack.c.h.b16 %v1188
        %v2403 = vunpack.c.l.b16 %v1189
        %v2404 = vunpack.c.h.b16 %v1189
        %v2405 = vunpack.c.l.b16 %v1190
        %v2406 = vunpack.c.h.b16 %v1190
        %v2407 = vunpack.c.l.b16 %v1191
        %v2408 = vunpack.c.h.b16 %v1191
        %v2409 = vunpack.c.l.b16 %v1192
        %v2410 = vunpack.c.h.b16 %v1192
        %v2411 = vunpack.c.l.b16 %v1193
        %v2412 = vunpack.c.h.b16 %v1193
        %v2413 = vunpack.c.l.b16 %v1194
        %v2414 = vunpack.c.h.b16 %v1194
        %v2415 = vunpack.c.l.b16 %v1195
        %v2416 = vunpack.c.h.b16 %v1195
        %v2417 = vunpack.c.l.b16 %v1196
        %v2418 = vunpack.c.h.b16 %v1196
        %v2419 = vunpack.c.l.b16 %v1197
        %v2420 = vunpack.c.h.b16 %v1197
        %v2421 = vunpack.c.l.b16 %v1198
        %v2422 = vunpack.c.h.b16 %v1198
        %v2423 = vunpack.c.l.b16 %v1199
        %v2424 = vunpack.c.h.b16 %v1199
        %v2425 = vunpack.c.l.b16 %v1200
        %v2426 = vunpack.c.h.b16 %v1200
        %v2427 = vunpack.c.l.b16 %v1201
        %v2428 = vunpack.c.h.b16 %v1201
        %v2429 = vunpack.c.l.b16 %v1202
        %v2430 = vunpack.c.h.b16 %v1202
        %v2431 = vunpack.c.l.b16 %v1203
        %v2432 = vunpack.c.h.b16 %v1203
        %v2433 = vunpack.c.l.b16 %v1204
        %v2434 = vunpack.c.h.b16 %v1204
        %v2435 = vunpack.c.l.b16 %v1205
        %v2436 = vunpack.c.h.b16 %v1205
        %v2437 = vunpack.c.l.b16 %v1206
        %v2438 = vunpack.c.h.b16 %v1206
        %v2439 = vunpack.c.l.b16 %v1207
        %v2440 = vunpack.c.h.b16 %v1207
        %v2441 = vunpack.c.l.b16 %v1208
        %v2442 = vunpack.c.h.b16 %v1208
        %v2443 = vunpack.c.l.b16 %v1209
        %v2444 = vunpack.c.h.b16 %v1209
        %v2445 = vunpack.c.l.b16 %v1210
        %v2446 = vunpack.c.h.b16 %v1210
        %v2447 = vunpack.c.l.b16 %v1211
        %v2448 = vunpack.c.h.b16 %v1211
        %v2449 = vunpack.c.l.b16 %v1212
        %v2450 = vunpack.c.h.b16 %v1212
        %v2451 = vunpack.c.l.b16 %v1213
        %v2452 = vunpack.c.h.b16 %v1213
        %v2453 = vunpack.c.l.b16 %v1214
        %v2454 = vunpack.c.h.b16 %v1214
        %v2455 = vunpack.c.l.b16 %v1215
        %v2456 = vunpack.c.h.b16 %v1215
        %v2457 = vunpack.c.l.b16 %v1216
        %v2458 = vunpack.c.h.b16 %v1216
        %v2459 = vunpack.c.l.b16 %v1217
        %v2460 = vunpack.c.h.b16 %v1217
        %v2461 = vunpack.c.l.b16 %v1218
        %v2462 = vunpack.c.h.b16 %v1218
        %v2463 = vunpack.c.l.b16 %v1219
        %v2464 = vunpack.c.h.b16 %v1219
        %v2465 = vunpack.c.l.b16 %v1220
        %v2466 = vunpack.c.h.b16 %v1220
        %v2467 = vunpack.c.l.b16 %v1221
        %v2468 = vunpack.c.h.b16 %v1221
        %v2469 = vunpack.c.l.b16 %v1222
        %v2470 = vunpack.c.h.b16 %v1222
        %v2471 = vunpack.c.l.b16 %v1223
        %v2472 = vunpack.c.h.b16 %v1223
        %v2473 = vunpack.c.l.b16 %v1224
        %v2474 = vunpack.c.h.b16 %v1224
        %v2475 = vunpack.c.l.b16 %v1225
        %v2476 = vunpack.c.h.b16 %v1225
        %v2477 = vunpack.c.l.b16 %v1226
        %v2478 = vunpack.c.h.b16 %v1226
        %v2479 = vunpack.c.l.b16 %v1227
        %v2480 = vunpack.c.h.b16 %v1227
        %v2481 = vunpack.c.l.b16 %v1228
        %v2482 = vunpack.c.h.b16 %v1228
        %v2483 = vunpack.c.l.b16 %v1229
        %v2484 = vunpack.c.h.b16 %v1229
        %v2485 = vunpack.c.l.b16 %v1230
        %v2486 = vunpack.c.h.b16 %v1230
        %v2487 = vunpack.c.l.b16 %v1231
        %v2488 = vunpack.c.h.b16 %v1231
        %v2489 = vunpack.c.l.b16 %v1232
        %v2490 = vunpack.c.h.b16 %v1232
        %v2491 = vunpack.c.l.b16 %v1233
        %v2492 = vunpack.c.h.b16 %v1233
        %v2493 = vunpack.c.l.b16 %v1234
        %v2494 = vunpack.c.h.b16 %v1234
        %v2495 = vunpack.c.l.b16 %v1235
        %v2496 = vunpack.c.h.b16 %v1235
        %v2497 = vunpack.c.l.b16 %v1236
        %v2498 = vunpack.c.h.b16 %v1236
        %v2499 = vunpack.c.l.b16 %v1237
        %v2500 = vunpack.c.h.b16 %v1237
        %v2501 = vunpack.c.l.b16 %v1238
        %v2502 = vunpack.c.h.b16 %v1238
        %v2503 = vunpack.c.l.b16 %v1239
        %v2504 = vunpack.c.h.b16 %v1239
        %v2505 = vunpack.c.l.b16 %v1240
        %v2506 = vunpack.c.h.b16 %v1240
        %v2507 = vunpack.c.l.b16 %v1241
        %v2508 = vunpack.c.h.b16 %v1241
        %v2509 = vunpack.c.l.b16 %v1242
        %v2510 = vunpack.c.h.b16 %v1242
        %v2511 = vunpack.c.l.b16 %v1243
        %v2512 = vunpack.c.h.b16 %v1243
        %v2513 = vunpack.c.l.b16 %v1244
        %v2514 = vunpack.c.h.b16 %v1244
        %v2515 = vunpack.c.l.b16 %v1245
        %v2516 = vunpack.c.h.b16 %v1245
        %v2517 = vunpack.c.l.b16 %v1246
        %v2518 = vunpack.c.h.b16 %v1246
        %v2519 = vunpack.c.l.b16 %v1247
        %v2520 = vunpack.c.h.b16 %v1247
        %v2521 = vunpack.c.l.b16 %v1248
        %v2522 = vunpack.c.h.b16 %v1248
        %v2523 = vunpack.c.l.b16 %v1249
        %v2524 = vunpack.c.h.b16 %v1249
        %v2525 = vunpack.c.l.b16 %v1250
        %v2526 = vunpack.c.h.b16 %v1250
        %v2527 = vunpack.c.l.b16 %v1251
        %v2528 = vunpack.c.h.b16 %v1251
        %v2529 = vunpack.c.l.b16 %v1252
        %v2530 = vunpack.c.h.b16 %v1252
        %v2531 = vunpack.c.l.b16 %v1253
        %v2532 = vunpack.c.h.b16 %v1253
        %v2533 = vunpack.c.l.b16 %v1254
        %v2534 = vunpack.c.h.b16 %v1254
        %v2535 = vunpack.c.l.b16 %v1255
        %v2536 = vunpack.c.h.b16 %v1255
        %v2537 = vunpack.c.l.b16 %v1256
        %v2538 = vunpack.c.h.b16 %v1256
        %v2539 = vunpack.c.l.b16 %v1257
        %v2540 = vunpack.c.h.b16 %v1257
        %v2541 = vunpack.c.l.b16 %v1258
        %v2542 = vunpack.c.h.b16 %v1258
        %v2543 = vunpack.c.l.b16 %v1259
        %v2544 = vunpack.c.h.b16 %v1259
        %v2545 = vunpack.c.l.b16 %v1260
        %v2546 = vunpack.c.h.b16 %v1260
        %v2547 = vunpack.c.l.b16 %v1261
        %v2548 = vunpack.c.h.b16 %v1261
        %v2549 = vunpack.c.l.b16 %v1262
        %v2550 = vunpack.c.h.b16 %v1262
        %v2551 = vunpack.c.l.b16 %v1263
        %v2552 = vunpack.c.h.b16 %v1263
        %v2553 = vunpack.c.l.b16 %v1264
        %v2554 = vunpack.c.h.b16 %v1264
        %v2555 = vunpack.c.l.b16 %v1265
        %v2556 = vunpack.c.h.b16 %v1265
        %v2557 = vunpack.c.l.b16 %v1266
        %v2558 = vunpack.c.h.b16 %v1266
        %v2559 = vunpack.c.l.b16 %v1267
        %v2560 = vunpack.c.h.b16 %v1267
        %v2561 = vunpack.c.l.b16 %v1268
        %v2562 = vunpack.c.h.b16 %v1268
        %v2563 = vunpack.c.l.b16 %v1269
        %v2564 = vunpack.c.h.b16 %v1269
        %v2565 = vunpack.c.l.b16 %v1270
        %v2566 = vunpack.c.h.b16 %v1270
        %v2567 = vunpack.c.l.b16 %v1271
        %v2568 = vunpack.c.h.b16 %v1271
        %v2569 = vunpack.c.l.b16 %v1272
        %v2570 = vunpack.c.h.b16 %v1272
        %v2571 = vunpack.c.l.b16 %v1273
        %v2572 = vunpack.c.h.b16 %v1273
        %v2573 = vunpack.c.l.b16 %v1274
        %v2574 = vunpack.c.h.b16 %v1274
        %v2575 = vunpack.c.l.b16 %v1275
        %v2576 = vunpack.c.h.b16 %v1275
        %v2577 = vunpack.c.l.b16 %v1276
        %v2578 = vunpack.c.h.b16 %v1276
        %v2579 = vunpack.c.l.b16 %v1277
        %v2580 = vunpack.c.h.b16 %v1277
        %v2581 = vunpack.c.l.b16 %v1278
        %v2582 = vunpack.c.h.b16 %v1278
        %v2583 = vunpack.c.l.b16 %v1279
        %v2584 = vunpack.c.h.b16 %v1279
        %v2585 = vunpack.c.l.b16 %v1280
        %v2586 = vunpack.c.h.b16 %v1280
        %v2587 = vunpack.c.l.b16 %v1281
        %v2588 = vunpack.c.h.b16 %v1281
        %v2589 = vunpack.c.l.b16 %v1282
        %v2590 = vunpack.c.h.b16 %v1282
        %v2591 = vunpack.c.l.b16 %v1283
        %v2592 = vunpack.c.h.b16 %v1283
        %v2593 = vunpack.c.l.b16 %v1284
        %v2594 = vunpack.c.h.b16 %v1284
        %v2595 = vunpack.c.l.b16 %v1285
        %v2596 = vunpack.c.h.b16 %v1285
        %v2597 = vunpack.c.l.b16 %v1286
        %v2598 = vunpack.c.h.b16 %v1286
        %v2599 = vunpack.c.l.b16 %v1287
        %v2600 = vunpack.c.h.b16 %v1287
        %v2601 = vunpack.c.l.b16 %v1288
        %v2602 = vunpack.c.h.b16 %v1288
        %v2603 = vunpack.c.l.b16 %v1289
        %v2604 = vunpack.c.h.b16 %v1289
        %v2605 = vunpack.c.l.b16 %v1290
        %v2606 = vunpack.c.h.b16 %v1290
        %v2607 = vunpack.c.l.b16 %v1291
        %v2608 = vunpack.c.h.b16 %v1291
        %v2609 = vunpack.c.l.b16 %v1292
        %v2610 = vunpack.c.h.b16 %v1292
        %v2611 = vunpack.c.l.b16 %v1293
        %v2612 = vunpack.c.h.b16 %v1293
        %v2613 = vunpack.c.l.b16 %v1294
        %v2614 = vunpack.c.h.b16 %v1294
        %v2615 = vunpack.c.l.b16 %v1295
        %v2616 = vunpack.c.h.b16 %v1295
        %v2617 = vunpack.c.l.b16 %v1296
        %v2618 = vunpack.c.h.b16 %v1296
        %v2619 = vunpack.c.l.b16 %v1297
        %v2620 = vunpack.c.h.b16 %v1297
        %v2621 = vunpack.c.l.b16 %v1298
        %v2622 = vunpack.c.h.b16 %v1298
        %v2623 = vunpack.c.l.b16 %v1299
        %v2624 = vunpack.c.h.b16 %v1299
        %v2625 = vunpack.c.l.b16 %v1300
        %v2626 = vunpack.c.h.b16 %v1300
        %v2627 = vunpack.c.l.b16 %v1301
        %v2628 = vunpack.c.h.b16 %v1301
        %v2629 = vunpack.c.l.b16 %v1302
        %v2630 = vunpack.c.h.b16 %v1302
        %v2631 = vunpack.c.l.b16 %v1303
        %v2632 = vunpack.c.h.b16 %v1303
        %v2633 = vunpack.c.l.b16 %v1304
        %v2634 = vunpack.c.h.b16 %v1304
        %v2635 = vunpack.c.l.b16 %v1305
        %v2636 = vunpack.c.h.b16 %v1305
        %v2637 = vunpack.c.l.b16 %v1306
        %v2638 = vunpack.c.h.b16 %v1306
        %v2639 = vunpack.c.l.b16 %v1307
        %v2640 = vunpack.c.h.b16 %v1307
        %v2641 = vunpack.c.l.b16 %v1308
        %v2642 = vunpack.c.h.b16 %v1308
        %v2643 = vunpack.c.l.b16 %v1309
        %v2644 = vunpack.c.h.b16 %v1309
        %v2645 = vunpack.c.l.b16 %v1310
        %v2646 = vunpack.c.h.b16 %v1310
        %v2647 = vunpack.c.l.b16 %v1311
        %v2648 = vunpack.c.h.b16 %v1311
        %v2649 = vunpack.c.l.b16 %v1312
        %v2650 = vunpack.c.h.b16 %v1312
        %v2651 = vunpack.c.l.b16 %v1313
        %v2652 = vunpack.c.h.b16 %v1313
        %v2653 = vunpack.c.l.b16 %v1314
        %v2654 = vunpack.c.h.b16 %v1314
        %v2655 = vunpack.c.l.b16 %v1315
        %v2656 = vunpack.c.h.b16 %v1315
        %v2657 = vunpack.c.l.b16 %v1316
        %v2658 = vunpack.c.h.b16 %v1316
        %v2659 = vunpack.c.l.b16 %v1317
        %v2660 = vunpack.c.h.b16 %v1317
        %v2661 = vunpack.c.l.b16 %v1318
        %v2662 = vunpack.c.h.b16 %v1318
        %v2663 = vunpack.c.l.b16 %v1319
        %v2664 = vunpack.c.h.b16 %v1319
        %v2665 = vunpack.c.l.b16 %v1320
        %v2666 = vunpack.c.h.b16 %v1320
        %v2667 = vunpack.c.l.b16 %v1321
        %v2668 = vunpack.c.h.b16 %v1321
        %v2669 = vunpack.c.l.b16 %v1322
        %v2670 = vunpack.c.h.b16 %v1322
        %v2671 = vunpack.c.l.b16 %v1323
        %v2672 = vunpack.c.h.b16 %v1323
        %v2673 = vunpack.c.l.b16 %v1324
        %v2674 = vunpack.c.h.b16 %v1324
        %v2675 = vunpack.c.l.b16 %v1325
        %v2676 = vunpack.c.h.b16 %v1325
        %v2677 = vunpack.c.l.b16 %v1326
        %v2678 = vunpack.c.h.b16 %v1326
        %v2679 = vunpack.c.l.b16 %v1327
        %v2680 = vunpack.c.h.b16 %v1327
        %v2681 = vunpack.c.l.b16 %v1328
        %v2682 = vunpack.c.h.b16 %v1328
        %v2683 = vunpack.c.l.b16 %v1329
        %v2684 = vunpack.c.h.b16 %v1329
        %v2685 = vunpack.c.l.b16 %v1330
        %v2686 = vunpack.c.h.b16 %v1330
        %v2687 = vunpack.c.l.b16 %v1331
        %v2688 = vunpack.c.h.b16 %v1331
        %v2689 = vunpack.c.l.b16 %v1332
        %v2690 = vunpack.c.h.b16 %v1332
        %v2691 = vunpack.c.l.b16 %v1333
        %v2692 = vunpack.c.h.b16 %v1333
        %v2693 = vunpack.c.l.b16 %v1334
        %v2694 = vunpack.c.h.b16 %v1334
        %v2695 = vunpack.c.l.b16 %v1335
        %v2696 = vunpack.c.h.b16 %v1335
        %v2697 = vunpack.c.l.b16 %v1336
        %v2698 = vunpack.c.h.b16 %v1336
        %v2699 = vunpack.c.l.b16 %v1337
        %v2700 = vunpack.c.h.b16 %v1337
        %v2701 = vunpack.c.l.b16 %v1338
        %v2702 = vunpack.c.h.b16 %v1338
        %v2703 = vunpack.c.l.b16 %v1339
        %v2704 = vunpack.c.h.b16 %v1339
        %v2705 = vunpack.c.l.b16 %v1340
        %v2706 = vunpack.c.h.b16 %v1340
        %v2707 = vunpack.c.l.b16 %v1341
        %v2708 = vunpack.c.h.b16 %v1341
        %v2709 = vunpack.c.l.b16 %v1342
        %v2710 = vunpack.c.h.b16 %v1342
        %v2711 = vunpack.c.l.b16 %v1343
        %v2712 = vunpack.c.h.b16 %v1343
        %v2713 = vunpack.c.l.b16 %v1344
        %v2714 = vunpack.c.h.b16 %v1344
        %v2715 = vunpack.c.l.b16 %v1345
        %v2716 = vunpack.c.h.b16 %v1345
        %v2717 = vunpack.c.l.b16 %v1346
        %v2718 = vunpack.c.h.b16 %v1346
        %v2719 = vunpack.c.l.b16 %v1347
        %v2720 = vunpack.c.h.b16 %v1347
        %v2721 = vunpack.c.l.b16 %v1348
        %v2722 = vunpack.c.h.b16 %v1348
        %v2723 = vunpack.c.l.b16 %v1349
        %v2724 = vunpack.c.h.b16 %v1349
        %v2725 = vunpack.c.l.b16 %v1350
        %v2726 = vunpack.c.h.b16 %v1350
        %v2727 = vunpack.c.l.b16 %v1351
        %v2728 = vunpack.c.h.b16 %v1351
        %v2729 = vunpack.c.l.b16 %v1352
        %v2730 = vunpack.c.h.b16 %v1352
        %v2731 = vunpack.c.l.b16 %v1353
        %v2732 = vunpack.c.h.b16 %v1353
        %v2733 = vunpack.c.l.b16 %v1354
        %v2734 = vunpack.c.h.b16 %v1354
        %v2735 = vunpack.c.l.b16 %v1355
        %v2736 = vunpack.c.h.b16 %v1355
        %v2737 = vunpack.c.l.b16 %v1356
        %v2738 = vunpack.c.h.b16 %v1356
        %v2739 = vunpack.c.l.b16 %v1357
        %v2740 = vunpack.c.h.b16 %v1357
        %v2741 = vunpack.c.l.b16 %v1358
        %v2742 = vunpack.c.h.b16 %v1358
        %v2743 = vunpack.c.l.b16 %v1359
        %v2744 = vunpack.c.h.b16 %v1359
        %v2745 = vunpack.c.l.b16 %v1360
        %v2746 = vunpack.c.h.b16 %v1360
        %v2747 = vunpack.c.l.b16 %v1361
        %v2748 = vunpack.c.h.b16 %v1361
        %v2749 = vunpack.c.l.b16 %v1362
        %v2750 = vunpack.c.h.b16 %v1362
        %v2751 = vunpack.c.l.b16 %v1363
        %v2752 = vunpack.c.h.b16 %v1363
        %v2753 = vunpack.c.l.b16 %v1364
        %v2754 = vunpack.c.h.b16 %v1364
        %v2755 = vunpack.c.l.b16 %v1365
        %v2756 = vunpack.c.h.b16 %v1365
        %v2757 = vunpack.c.l.b16 %v1366
        %v2758 = vunpack.c.h.b16 %v1366
        %v2759 = vunpack.c.l.b16 %v1367
        %v2760 = vunpack.c.h.b16 %v1367
        %v2761 = vunpack.c.l.b16 %v1368
        %v2762 = vunpack.c.h.b16 %v1368
        %v2763 = vunpack.c.l.b16 %v1369
        %v2764 = vunpack.c.h.b16 %v1369
        %v2765 = vunpack.c.l.b16 %v1370
        %v2766 = vunpack.c.h.b16 %v1370
        %v2767 = vunpack.c.l.b16 %v1371
        %v2768 = vunpack.c.h.b16 %v1371
        %v2769 = vunpack.c.l.b16 %v1372
        %v2770 = vunpack.c.h.b16 %v1372
        %v2771 = vunpack.c.l.b16 %v1373
        %v2772 = vunpack.c.h.b16 %v1373
        %v2773 = vunpack.c.l.b16 %v1374
        %v2774 = vunpack.c.h.b16 %v1374
        %v2775 = vunpack.c.l.b16 %v1375
        %v2776 = vunpack.c.h.b16 %v1375
        %v2777 = vunpack.c.l.b16 %v1376
        %v2778 = vunpack.c.h.b16 %v1376
        %v2779 = vunpack.c.l.b16 %v1377
        %v2780 = vunpack.c.h.b16 %v1377
        %v2781 = vunpack.c.l.b16 %v1378
        %v2782 = vunpack.c.h.b16 %v1378
        %v2783 = vunpack.c.l.b16 %v1379
        %v2784 = vunpack.c.h.b16 %v1379
        %v2785 = vunpack.c.l.b16 %v1380
        %v2786 = vunpack.c.h.b16 %v1380
        %v2787 = vunpack.c.l.b16 %v1381
        %v2788 = vunpack.c.h.b16 %v1381
        %v2789 = vunpack.c.l.b16 %v1382
        %v2790 = vunpack.c.h.b16 %v1382
        %v2791 = vunpack.c.l.b16 %v1383
        %v2792 = vunpack.c.h.b16 %v1383
        %v2793 = vunpack.c.l.b16 %v1384
        %v2794 = vunpack.c.h.b16 %v1384
        %v2795 = vunpack.c.l.b16 %v1385
        %v2796 = vunpack.c.h.b16 %v1385
        %v2797 = vunpack.c.l.b16 %v1386
        %v2798 = vunpack.c.h.b16 %v1386
        %v2799 = vunpack.c.l.b16 %v1387
        %v2800 = vunpack.c.h.b16 %v1387
        %v2801 = vunpack.c.l.b16 %v1388
        %v2802 = vunpack.c.h.b16 %v1388
        %v2803 = vunpack.c.l.b16 %v1389
        %v2804 = vunpack.c.h.b16 %v1389
        %v2805 = vunpack.c.l.b16 %v1390
        %v2806 = vunpack.c.h.b16 %v1390
        %v2807 = vunpack.c.l.b16 %v1391
        %v2808 = vunpack.c.h.b16 %v1391
        %v2809 = vunpack.c.l.b16 %v1392
        %v2810 = vunpack.c.h.b16 %v1392
        %v2811 = vunpack.c.l.b16 %v1393
        %v2812 = vunpack.c.h.b16 %v1393
        %v2813 = vunpack.c.l.b16 %v1394
        %v2814 = vunpack.c.h.b16 %v1394
        %v2815 = vunpack.c.l.b16 %v1395
        %v2816 = vunpack.c.h.b16 %v1395
        %v2817 = vunpack.c.l.b16 %v1396
        %v2818 = vunpack.c.h.b16 %v1396
        %v2819 = vunpack.c.l.b16 %v1397
        %v2820 = vunpack.c.h.b16 %v1397
        %v2821 = vunpack.c.l.b16 %v1398
        %v2822 = vunpack.c.h.b16 %v1398
        %v2823 = vunpack.c.l.b16 %v1399
        %v2824 = vunpack.c.h.b16 %v1399
        %v2825 = vunpack.c.l.b16 %v1400
        %v2826 = vunpack.c.h.b16 %v1400
        %v2827 = vunpack.c.l.b16 %v1401
        %v2828 = vunpack.c.h.b16 %v1401
        %v2829 = vunpack.c.l.b16 %v1402
        %v2830 = vunpack.c.h.b16 %v1402
        %v2831 = vunpack.c.l.b16 %v1403
        %v2832 = vunpack.c.h.b16 %v1403
        %v2833 = vunpack.c.l.b16 %v1404
        %v2834 = vunpack.c.h.b16 %v1404
        %v2835 = vunpack.c.l.b16 %v1405
        %v2836 = vunpack.c.h.b16 %v1405
        %v2837 = vunpack.c.l.b16 %v1406
        %v2838 = vunpack.c.h.b16 %v1406
        %v2839 = vunpack.c.l.b16 %v1407
        %v2840 = vunpack.c.h.b16 %v1407
        %v2841 = vunpack.c.l.b16 %v1408
        %v2842 = vunpack.c.h.b16 %v1408
        %v2843 = vunpack.c.l.b16 %v1409
        %v2844 = vunpack.c.h.b16 %v1409
        %v2845 = vunpack.c.l.b16 %v1410
        %v2846 = vunpack.c.h.b16 %v1410
        %v2847 = vunpack.c.l.b16 %v1411
        %v2848 = vunpack.c.h.b16 %v1411
        %v2849 = vunpack.c.l.b16 %v1412
        %v2850 = vunpack.c.h.b16 %v1412
        %v2851 = vunpack.c.l.b16 %v1413
        %v2852 = vunpack.c.h.b16 %v1413
        %v2853 = vunpack.c.l.b16 %v1414
        %v2854 = vunpack.c.h.b16 %v1414
        %v2855 = vunpack.c.l.b16 %v1415
        %v2856 = vunpack.c.h.b16 %v1415
        %v2857 = vunpack.c.l.b16 %v1416
        %v2858 = vunpack.c.h.b16 %v1416
        %v2859 = vunpack.c.l.b16 %v1417
        %v2860 = vunpack.c.h.b16 %v1417
        %v2861 = vunpack.c.l.b16 %v1418
        %v2862 = vunpack.c.h.b16 %v1418
        %v2863 = vunpack.c.l.b16 %v1419
        %v2864 = vunpack.c.h.b16 %v1419
        %v2865 = vunpack.c.l.b16 %v1420
        %v2866 = vunpack.c.h.b16 %v1420
        %v2867 = vunpack.c.l.b16 %v1421
        %v2868 = vunpack.c.h.b16 %v1421
        %v2869 = vunpack.c.l.b16 %v1422
        %v2870 = vunpack.c.h.b16 %v1422
        %v2871 = vunpack.c.l.b16 %v1423
        %v2872 = vunpack.c.h.b16 %v1423
        %v2873 = vunpack.c.l.b16 %v1424
        %v2874 = vunpack.c.h.b16 %v1424
        %v2875 = vunpack.c.l.b16 %v1425
        %v2876 = vunpack.c.h.b16 %v1425
        %v2877 = vunpack.c.l.b16 %v1426
        %v2878 = vunpack.c.h.b16 %v1426
        %v2879 = vunpack.c.l.b16 %v1427
        %v2880 = vunpack.c.h.b16 %v1427
        %v2881 = vunpack.c.l.b16 %v1428
        %v2882 = vunpack.c.h.b16 %v1428
        %v2883 = vunpack.c.l.b16 %v1429
        %v2884 = vunpack.c.h.b16 %v1429
        %v2885 = vunpack.c.l.b16 %v1430
        %v2886 = vunpack.c.h.b16 %v1430
        %v2887 = vunpack.c.l.b16 %v1431
        %v2888 = vunpack.c.h.b16 %v1431
        %v2889 = vunpack.c.l.b16 %v1432
        %v2890 = vunpack.c.h.b16 %v1432
        %v2891 = vunpack.c.l.b16 %v1433
        %v2892 = vunpack.c.h.b16 %v1433
        %v2893 = vunpack.c.l.b16 %v1434
        %v2894 = vunpack.c.h.b16 %v1434
        %v2895 = vunpack.c.l.b16 %v1435
        %v2896 = vunpack.c.h.b16 %v1435
        %v2897 = vunpack.c.l.b16 %v1436
        %v2898 = vunpack.c.h.b16 %v1436
        %v2899 = vunpack.c.l.b16 %v1437
        %v2900 = vunpack.c.h.b16 %v1437
        %v2901 = vunpack.c.l.b16 %v1438
        %v2902 = vunpack.c.h.b16 %v1438
        %v2903 = vunpack.c.l.b16 %v1439
        %v2904 = vunpack.c.h.b16 %v1439
        %v2905 = vunpack.c.l.b16 %v1440
        %v2906 = vunpack.c.h.b16 %v1440
        %v2907 = vunpack.c.l.b16 %v1441
        %v2908 = vunpack.c.h.b16 %v1441
        %v2909 = vunpack.c.l.b16 %v1442
        %v2910 = vunpack.c.h.b16 %v1442
        %v2911 = vunpack.c.l.b16 %v1443
        %v2912 = vunpack.c.h.b16 %v1443
        %v2913 = vunpack.c.l.b16 %v1444
        %v2914 = vunpack.c.h.b16 %v1444
        %v2915 = vunpack.c.l.b16 %v1445
        %v2916 = vunpack.c.h.b16 %v1445
        %v2917 = vunpack.c.l.b16 %v1446
        %v2918 = vunpack.c.h.b16 %v1446
        %v2919 = vunpack.c.l.b16 %v1447
        %v2920 = vunpack.c.h.b16 %v1447
        %v2921 = vunpack.c.l.b16 %v1448
        %v2922 = vunpack.c.h.b16 %v1448
        %v2923 = vunpack.c.l.b16 %v1449
        %v2924 = vunpack.c.h.b16 %v1449
        %v2925 = vunpack.c.l.b16 %v1450
        %v2926 = vunpack.c.h.b16 %v1450
        %v2927 = vunpack.c.l.b16 %v1451
        %v2928 = vunpack.c.h.b16 %v1451
        %v2929 = vunpack.c.l.b16 %v1452
        %v2930 = vunpack.c.h.b16 %v1452
        %v2931 = vunpack.c.l.b16 %v1453
        %v2932 = vunpack.c.h.b16 %v1453
        %v2933 = vunpack.c.l.b16 %v1454
        %v2934 = vunpack.c.h.b16 %v1454
        %v2935 = vunpack.c.l.b16 %v1455
        %v2936 = vunpack.c.h.b16 %v1455
        %v2937 = vunpack.c.l.b16 %v1456
        %v2938 = vunpack.c.h.b16 %v1456
        %v2939 = vunpack.c.l.b16 %v1457
        %v2940 = vunpack.c.h.b16 %v1457
        %v2941 = vunpack.c.l.b16 %v1458
        %v2942 = vunpack.c.h.b16 %v1458
        %v2943 = vunpack.c.l.b16 %v1459
        %v2944 = vunpack.c.h.b16 %v1459
        %v2945 = vunpack.c.l.b16 %v1460
        %v2946 = vunpack.c.h.b16 %v1460
        %v2947 = vunpack.c.l.b16 %v1461
        %v2948 = vunpack.c.h.b16 %v1461
        %v2949 = vunpack.c.l.b16 %v1462
        %v2950 = vunpack.c.h.b16 %v1462
        %v2951 = vunpack.c.l.b16 %v1463
        %v2952 = vunpack.c.h.b16 %v1463
        %v2953 = vunpack.c.l.b16 %v1464
        %v2954 = vunpack.c.h.b16 %v1464
        %v2955 = vunpack.c.l.b16 %v1465
        %v2956 = vunpack.c.h.b16 %v1465
        %v2957 = vunpack.c.l.b16 %v1466
        %v2958 = vunpack.c.h.b16 %v1466
        %v2959 = vunpack.c.l.b16 %v1467
        %v2960 = vunpack.c.h.b16 %v1467
        %v2961 = vunpack.c.l.b16 %v1468
        %v2962 = vunpack.c.h.b16 %v1468
        %v2963 = vunpack.c.l.b16 %v1469
        %v2964 = vunpack.c.h.b16 %v1469
        %v2965 = vunpack.c.l.b16 %v1470
        %v2966 = vunpack.c.h.b16 %v1470
        %v2967 = vunpack.c.l.b16 %v1471
        %v2968 = vunpack.c.h.b16 %v1471
        %v2969 = vunpack.c.l.b16 %v1472
        %v2970 = vunpack.c.h.b16 %v1472
        %v2971 = vunpack.c.l.b16 %v1473
        %v2972 = vunpack.c.h.b16 %v1473
        %v2973 = vunpack.c.l.b16 %v1474
        %v2974 = vunpack.c.h.b16 %v1474
        %v2975 = vunpack.c.l.b16 %v1475
        %v2976 = vunpack.c.h.b16 %v1475
        %v2977 = vunpack.c.l.b16 %v1476
        %v2978 = vunpack.c.h.b16 %v1476
        %v2979 = vunpack.c.l.b16 %v1477
        %v2980 = vunpack.c.h.b16 %v1477
        %v2981 = vunpack.c.l.b16 %v1478
        %v2982 = vunpack.c.h.b16 %v1478
        %v2983 = vunpack.c.l.b16 %v1479
        %v2984 = vunpack.c.h.b16 %v1479
        %v2985 = vunpack.c.l.b16 %v1480
        %v2986 = vunpack.c.h.b16 %v1480
        %v2987 = vunpack.c.l.b16 %v1481
        %v2988 = vunpack.c.h.b16 %v1481
        %v2989 = vunpack.c.l.b16 %v1482
        %v2990 = vunpack.c.h.b16 %v1482
        %v2991 = vunpack.c.l.b16 %v1483
        %v2992 = vunpack.c.h.b16 %v1483
        %v2993 = vunpack.c.l.b16 %v1484
        %v2994 = vunpack.c.h.b16 %v1484
        %v2995 = vunpack.c.l.b16 %v1485
        %v2996 = vunpack.c.h.b16 %v1485
        %v2997 = vunpack.c.l.b16 %v1486
        %v2998 = vunpack.c.h.b16 %v1486
        %v2999 = vunpack.c.l.b16 %v1487
        %v3000 = vunpack.c.h.b16 %v1487
        %v3001 = vunpack.c.l.b16 %v1488
        %v3002 = vunpack.c.h.b16 %v1488
        %v3003 = vunpack.c.l.b16 %v1489
        %v3004 = vunpack.c.h.b16 %v1489
        %v3005 = vunpack.c.l.b16 %v1490
        %v3006 = vunpack.c.h.b16 %v1490
        %v3007 = vunpack.c.l.b16 %v1491
        %v3008 = vunpack.c.h.b16 %v1491
        %v3009 = vunpack.c.l.b16 %v1492
        %v3010 = vunpack.c.h.b16 %v1492
        %v3011 = vunpack.c.l.b16 %v1493
        %v3012 = vunpack.c.h.b16 %v1493
        %v3013 = vunpack.c.l.b16 %v1494
        %v3014 = vunpack.c.h.b16 %v1494
        %v3015 = vunpack.c.l.b16 %v1495
        %v3016 = vunpack.c.h.b16 %v1495
        %v3017 = vunpack.c.l.b16 %v1496
        %v3018 = vunpack.c.h.b16 %v1496
        %v3019 = vunpack.c.l.b16 %v1497
        %v3020 = vunpack.c.h.b16 %v1497
        %v3021 = vunpack.c.l.b16 %v1498
        %v3022 = vunpack.c.h.b16 %v1498
        %v3023 = vunpack.c.l.b16 %v1499
        %v3024 = vunpack.c.h.b16 %v1499
        %v3025 = vunpack.c.l.b16 %v1500
        %v3026 = vunpack.c.h.b16 %v1500
        %v3027 = vunpack.c.l.b16 %v1501
        %v3028 = vunpack.c.h.b16 %v1501
        %v3029 = vunpack.c.l.b16 %v1502
        %v3030 = vunpack.c.h.b16 %v1502
        %v3031 = vunpack.c.l.b16 %v1503
        %v3032 = vunpack.c.h.b16 %v1503
        %v3033 = vunpack.c.l.b16 %v1504
        %v3034 = vunpack.c.h.b16 %v1504
        %v3035 = vunpack.c.l.b16 %v1505
        %v3036 = vunpack.c.h.b16 %v1505
        %v3037 = vunpack.c.l.b16 %v1506
        %v3038 = vunpack.c.h.b16 %v1506
        %v3039 = vunpack.c.l.b16 %v1507
        %v3040 = vunpack.c.h.b16 %v1507
        %v3041 = vunpack.c.l.b16 %v1508
        %v3042 = vunpack.c.h.b16 %v1508
        %v3043 = vunpack.c.l.b16 %v1509
        %v3044 = vunpack.c.h.b16 %v1509
        %v3045 = vunpack.c.l.b16 %v1510
        %v3046 = vunpack.c.h.b16 %v1510
        %v3047 = vunpack.c.l.b16 %v1511
        %v3048 = vunpack.c.h.b16 %v1511
        %v3049 = vunpack.c.l.b16 %v1512
        %v3050 = vunpack.c.h.b16 %v1512
        %v3051 = vunpack.c.l.b16 %v1513
        %v3052 = vunpack.c.h.b16 %v1513
        %v3053 = vunpack.c.l.b16 %v1514
        %v3054 = vunpack.c.h.b16 %v1514
        %v3055 = vunpack.c.l.b16 %v1515
        %v3056 = vunpack.c.h.b16 %v1515
        %v3057 = vunpack.c.l.b16 %v1516
        %v3058 = vunpack.c.h.b16 %v1516
        %v3059 = vunpack.c.l.b16 %v1517
        %v3060 = vunpack.c.h.b16 %v1517
        %v3061 = vunpack.c.l.b16 %v1518
        %v3062 = vunpack.c.h.b16 %v1518
        %v3063 = vunpack.c.l.b16 %v1519
        %v3064 = vunpack.c.h.b16 %v1519
        %v3065 = vunpack.c.l.b16 %v1520
        %v3066 = vunpack.c.h.b16 %v1520
        %v3067 = vunpack.c.l.b16 %v1521
        %v3068 = vunpack.c.h.b16 %v1521
        %v3069 = vunpack.c.l.b16 %v1522
        %v3070 = vunpack.c.h.b16 %v1522
        %v3071 = vunpack.c.l.b16 %v1523
        %v3072 = vunpack.c.h.b16 %v1523
        %v3073 = vunpack.c.l.b16 %v1524
        %v3074 = vunpack.c.h.b16 %v1524
        %v3075 = vunpack.c.l.b16 %v1525
        %v3076 = vunpack.c.h.b16 %v1525
        %v3077 = vunpack.c.l.b16 %v1526
        %v3078 = vunpack.c.h.b16 %v1526
        %v3079 = vunpack.c.l.b16 %v1527
        %v3080 = vunpack.c.h.b16 %v1527
        %v3081 = vunpack.c.l.b16 %v1528
        %v3082 = vunpack.c.h.b16 %v1528
        %v3083 = vpack.c.b16 %v2067, %v2059
        %v3084 = vpack.c.b16 %v2068, %v2060
        %v3085 = vpack.c.b16 %v2069, %v2061
        %v3086 = vpack.c.b16 %v2070, %v2062
        %v3087 = vpack.c.b16 %v2071, %v2063
        %v3088 = vpack.c.b16 %v2072, %v2064
        %v3089 = vpack.c.b16 %v2073, %v2065
        %v3090 = vpack.c.b16 %v2074, %v2066
        %v3091 = vpack.c.b16 %v2083, %v2075
        %v3092 = vpack.c.b16 %v2084, %v2076
        %v3093 = vpack.c.b16 %v2085, %v2077
        %v3094 = vpack.c.b16 %v2086, %v2078
        %v3095 = vpack.c.b16 %v2087, %v2079
        %v3096 = vpack.c.b16 %v2088, %v2080
        %v3097 = vpack.c.b16 %v2089, %v2081
        %v3098 = vpack.c.b16 %v2090, %v2082
        %v3099 = vpack.c.b16 %v2099, %v2091
        %v3100 = vpack.c.b16 %v2100, %v2092
        %v3101 = vpack.c.b16 %v2101, %v2093
        %v3102 = vpack.c.b16 %v2102, %v2094
        %v3103 = vpack.c.b16 %v2103, %v2095
        %v3104 = vpack.c.b16 %v2104, %v2096
        %v3105 = vpack.c.b16 %v2105, %v2097
        %v3106 = vpack.c.b16 %v2106, %v2098
        %v3107 = vpack.c.b16 %v2115, %v2107
        %v3108 = vpack.c.b16 %v2116, %v2108
        %v3109 = vpack.c.b16 %v2117, %v2109
        %v3110 = vpack.c.b16 %v2118, %v2110
        %v3111 = vpack.c.b16 %v2119, %v2111
        %v3112 = vpack.c.b16 %v2120, %v2112
        %v3113 = vpack.c.b16 %v2121, %v2113
        %v3114 = vpack.c.b16 %v2122, %v2114
        %v3115 = vpack.c.b16 %v2131, %v2123
        %v3116 = vpack.c.b16 %v2132, %v2124
        %v3117 = vpack.c.b16 %v2133, %v2125
        %v3118 = vpack.c.b16 %v2134, %v2126
        %v3119 = vpack.c.b16 %v2135, %v2127
        %v3120 = vpack.c.b16 %v2136, %v2128
        %v3121 = vpack.c.b16 %v2137, %v2129
        %v3122 = vpack.c.b16 %v2138, %v2130
        %v3123 = vpack.c.b16 %v2147, %v2139
        %v3124 = vpack.c.b16 %v2148, %v2140
        %v3125 = vpack.c.b16 %v2149, %v2141
        %v3126 = vpack.c.b16 %v2150, %v2142
        %v3127 = vpack.c.b16 %v2151, %v2143
        %v3128 = vpack.c.b16 %v2152, %v2144
        %v3129 = vpack.c.b16 %v2153, %v2145
        %v3130 = vpack.c.b16 %v2154, %v2146
        %v3131 = vpack.c.b16 %v2163, %v2155
        %v3132 = vpack.c.b16 %v2164, %v2156
        %v3133 = vpack.c.b16 %v2165, %v2157
        %v3134 = vpack.c.b16 %v2166, %v2158
        %v3135 = vpack.c.b16 %v2167, %v2159
        %v3136 = vpack.c.b16 %v2168, %v2160
        %v3137 = vpack.c.b16 %v2169, %v2161
        %v3138 = vpack.c.b16 %v2170, %v2162
        %v3139 = vpack.c.b16 %v2179, %v2171
        %v3140 = vpack.c.b16 %v2180, %v2172
        %v3141 = vpack.c.b16 %v2181, %v2173
        %v3142 = vpack.c.b16 %v2182, %v2174
        %v3143 = vpack.c.b16 %v2183, %v2175
        %v3144 = vpack.c.b16 %v2184, %v2176
        %v3145 = vpack.c.b16 %v2185, %v2177
        %v3146 = vpack.c.b16 %v2186, %v2178
        %v3147 = vpack.c.b16 %v2195, %v2187
        %v3148 = vpack.c.b16 %v2196, %v2188
        %v3149 = vpack.c.b16 %v2197, %v2189
        %v3150 = vpack.c.b16 %v2198, %v2190
        %v3151 = vpack.c.b16 %v2199, %v2191
        %v3152 = vpack.c.b16 %v2200, %v2192
        %v3153 = vpack.c.b16 %v2201, %v2193
        %v3154 = vpack.c.b16 %v2202, %v2194
        %v3155 = vpack.c.b16 %v2211, %v2203
        %v3156 = vpack.c.b16 %v2212, %v2204
        %v3157 = vpack.c.b16 %v2213, %v2205
        %v3158 = vpack.c.b16 %v2214, %v2206
        %v3159 = vpack.c.b16 %v2215, %v2207
        %v3160 = vpack.c.b16 %v2216, %v2208
        %v3161 = vpack.c.b16 %v2217, %v2209
        %v3162 = vpack.c.b16 %v2218, %v2210
        %v3163 = vpack.c.b16 %v2227, %v2219
        %v3164 = vpack.c.b16 %v2228, %v2220
        %v3165 = vpack.c.b16 %v2229, %v2221
        %v3166 = vpack.c.b16 %v2230, %v2222
        %v3167 = vpack.c.b16 %v2231, %v2223
        %v3168 = vpack.c.b16 %v2232, %v2224
        %v3169 = vpack.c.b16 %v2233, %v2225
        %v3170 = vpack.c.b16 %v2234, %v2226
        %v3171 = vpack.c.b16 %v2243, %v2235
        %v3172 = vpack.c.b16 %v2244, %v2236
        %v3173 = vpack.c.b16 %v2245, %v2237
        %v3174 = vpack.c.b16 %v2246, %v2238
        %v3175 = vpack.c.b16 %v2247, %v2239
        %v3176 = vpack.c.b16 %v2248, %v2240
        %v3177 = vpack.c.b16 %v2249, %v2241
        %v3178 = vpack.c.b16 %v2250, %v2242
        %v3179 = vpack.c.b16 %v2259, %v2251
        %v3180 = vpack.c.b16 %v2260, %v2252
        %v3181 = vpack.c.b16 %v2261, %v2253
        %v3182 = vpack.c.b16 %v2262, %v2254
        %v3183 = vpack.c.b16 %v2263, %v2255
        %v3184 = vpack.c.b16 %v2264, %v2256
        %v3185 = vpack.c.b16 %v2265, %v2257
        %v3186 = vpack.c.b16 %v2266, %v2258
        %v3187 = vpack.c.b16 %v2275, %v2267
        %v3188 = vpack.c.b16 %v2276, %v2268
        %v3189 = vpack.c.b16 %v2277, %v2269
        %v3190 = vpack.c.b16 %v2278, %v2270
        %v3191 = vpack.c.b16 %v2279, %v2271
        %v3192 = vpack.c.b16 %v2280, %v2272
        %v3193 = vpack.c.b16 %v2281, %v2273
        %v3194 = vpack.c.b16 %v2282, %v2274
        %v3195 = vpack.c.b16 %v2291, %v2283
        %v3196 = vpack.c.b16 %v2292, %v2284
        %v3197 = vpack.c.b16 %v2293, %v2285
        %v3198 = vpack.c.b16 %v2294, %v2286
        %v3199 = vpack.c.b16 %v2295, %v2287
        %v3200 = vpack.c.b16 %v2296, %v2288
        %v3201 = vpack.c.b16 %v2297, %v2289
        %v3202 = vpack.c.b16 %v2298, %v2290
        %v3203 = vpack.c.b16 %v2307, %v2299
        %v3204 = vpack.c.b16 %v2308, %v2300
        %v3205 = vpack.c.b16 %v2309, %v2301
        %v3206 = vpack.c.b16 %v2310, %v2302
        %v3207 = vpack.c.b16 %v2311, %v2303
        %v3208 = vpack.c.b16 %v2312, %v2304
        %v3209 = vpack.c.b16 %v2313, %v2305
        %v3210 = vpack.c.b16 %v2314, %v2306
        %v3211 = vpack.c.b16 %v2323, %v2315
        %v3212 = vpack.c.b16 %v2324, %v2316
        %v3213 = vpack.c.b16 %v2325, %v2317
        %v3214 = vpack.c.b16 %v2326, %v2318
        %v3215 = vpack.c.b16 %v2327, %v2319
        %v3216 = vpack.c.b16 %v2328, %v2320
        %v3217 = vpack.c.b16 %v2329, %v2321
        %v3218 = vpack.c.b16 %v2330, %v2322
        %v3219 = vpack.c.b16 %v2339, %v2331
        %v3220 = vpack.c.b16 %v2340, %v2332
        %v3221 = vpack.c.b16 %v2341, %v2333
        %v3222 = vpack.c.b16 %v2342, %v2334
        %v3223 = vpack.c.b16 %v2343, %v2335
        %v3224 = vpack.c.b16 %v2344, %v2336
        %v3225 = vpack.c.b16 %v2345, %v2337
        %v3226 = vpack.c.b16 %v2346, %v2338
        %v3227 = vpack.c.b16 %v2355, %v2347
        %v3228 = vpack.c.b16 %v2356, %v2348
        %v3229 = vpack.c.b16 %v2357, %v2349
        %v3230 = vpack.c.b16 %v2358, %v2350
        %v3231 = vpack.c.b16 %v2359, %v2351
        %v3232 = vpack.c.b16 %v2360, %v2352
        %v3233 = vpack.c.b16 %v2361, %v2353
        %v3234 = vpack.c.b16 %v2362, %v2354
        %v3235 = vpack.c.b16 %v2371, %v2363
        %v3236 = vpack.c.b16 %v2372, %v2364
        %v3237 = vpack.c.b16 %v2373, %v2365
        %v3238 = vpack.c.b16 %v2374, %v2366
        %v3239 = vpack.c.b16 %v2375, %v2367
        %v3240 = vpack.c.b16 %v2376, %v2368
        %v3241 = vpack.c.b16 %v2377, %v2369
        %v3242 = vpack.c.b16 %v2378, %v2370
        %v3243 = vpack.c.b16 %v2387, %v2379
        %v3244 = vpack.c.b16 %v2388, %v2380
        %v3245 = vpack.c.b16 %v2389, %v2381
        %v3246 = vpack.c.b16 %v2390, %v2382
        %v3247 = vpack.c.b16 %v2391, %v2383
        %v3248 = vpack.c.b16 %v2392, %v2384
        %v3249 = vpack.c.b16 %v2393, %v2385
        %v3250 = vpack.c.b16 %v2394, %v2386
        %v3251 = vpack.c.b16 %v2403, %v2395
        %v3252 = vpack.c.b16 %v2404, %v2396
        %v3253 = vpack.c.b16 %v2405, %v2397
        %v3254 = vpack.c.b16 %v2406, %v2398
        %v3255 = vpack.c.b16 %v2407, %v2399
        %v3256 = vpack.c.b16 %v2408, %v2400
        %v3257 = vpack.c.b16 %v2409, %v2401
        %v3258 = vpack.c.b16 %v2410, %v2402
        %v3259 = vpack.c.b16 %v2419, %v2411
        %v3260 = vpack.c.b16 %v2420, %v2412
        %v3261 = vpack.c.b16 %v2421, %v2413
        %v3262 = vpack.c.b16 %v2422, %v2414
        %v3263 = vpack.c.b16 %v2423, %v2415
        %v3264 = vpack.c.b16 %v2424, %v2416
        %v3265 = vpack.c.b16 %v2425, %v2417
        %v3266 = vpack.c.b16 %v2426, %v2418
        %v3267 = vpack.c.b16 %v2435, %v2427
        %v3268 = vpack.c.b16 %v2436, %v2428
        %v3269 = vpack.c.b16 %v2437, %v2429
        %v3270 = vpack.c.b16 %v2438, %v2430
        %v3271 = vpack.c.b16 %v2439, %v2431
        %v3272 = vpack.c.b16 %v2440, %v2432
        %v3273 = vpack.c.b16 %v2441, %v2433
        %v3274 = vpack.c.b16 %v2442, %v2434
        %v3275 = vpack.c.b16 %v2451, %v2443
        %v3276 = vpack.c.b16 %v2452, %v2444
        %v3277 = vpack.c.b16 %v2453, %v2445
        %v3278 = vpack.c.b16 %v2454, %v2446
        %v3279 = vpack.c.b16 %v2455, %v2447
        %v3280 = vpack.c.b16 %v2456, %v2448
        %v3281 = vpack.c.b16 %v2457, %v2449
        %v3282 = vpack.c.b16 %v2458, %v2450
        %v3283 = vpack.c.b16 %v2467, %v2459
        %v3284 = vpack.c.b16 %v2468, %v2460
        %v3285 = vpack.c.b16 %v2469, %v2461
        %v3286 = vpack.c.b16 %v2470, %v2462
        %v3287 = vpack.c.b16 %v2471, %v2463
        %v3288 = vpack.c.b16 %v2472, %v2464
        %v3289 = vpack.c.b16 %v2473, %v2465
        %v3290 = vpack.c.b16 %v2474, %v2466
        %v3291 = vpack.c.b16 %v2483, %v2475
        %v3292 = vpack.c.b16 %v2484, %v2476
        %v3293 = vpack.c.b16 %v2485, %v2477
        %v3294 = vpack.c.b16 %v2486, %v2478
        %v3295 = vpack.c.b16 %v2487, %v2479
        %v3296 = vpack.c.b16 %v2488, %v2480
        %v3297 = vpack.c.b16 %v2489, %v2481
        %v3298 = vpack.c.b16 %v2490, %v2482
        %v3299 = vpack.c.b16 %v2499, %v2491
        %v3300 = vpack.c.b16 %v2500, %v2492
        %v3301 = vpack.c.b16 %v2501, %v2493
        %v3302 = vpack.c.b16 %v2502, %v2494
        %v3303 = vpack.c.b16 %v2503, %v2495
        %v3304 = vpack.c.b16 %v2504, %v2496
        %v3305 = vpack.c.b16 %v2505, %v2497
        %v3306 = vpack.c.b16 %v2506, %v2498
        %v3307 = vpack.c.b16 %v2515, %v2507
        %v3308 = vpack.c.b16 %v2516, %v2508
        %v3309 = vpack.c.b16 %v2517, %v2509
        %v3310 = vpack.c.b16 %v2518, %v2510
        %v3311 = vpack.c.b16 %v2519, %v2511
        %v3312 = vpack.c.b16 %v2520, %v2512
        %v3313 = vpack.c.b16 %v2521, %v2513
        %v3314 = vpack.c.b16 %v2522, %v2514
        %v3315 = vpack.c.b16 %v2531, %v2523
        %v3316 = vpack.c.b16 %v2532, %v2524
        %v3317 = vpack.c.b16 %v2533, %v2525
        %v3318 = vpack.c.b16 %v2534, %v2526
        %v3319 = vpack.c.b16 %v2535, %v2527
        %v3320 = vpack.c.b16 %v2536, %v2528
        %v3321 = vpack.c.b16 %v2537, %v2529
        %v3322 = vpack.c.b16 %v2538, %v2530
        %v3323 = vpack.c.b16 %v2547, %v2539
        %v3324 = vpack.c.b16 %v2548, %v2540
        %v3325 = vpack.c.b16 %v2549, %v2541
        %v3326 = vpack.c.b16 %v2550, %v2542
        %v3327 = vpack.c.b16 %v2551, %v2543
        %v3328 = vpack.c.b16 %v2552, %v2544
        %v3329 = vpack.c.b16 %v2553, %v2545
        %v3330 = vpack.c.b16 %v2554, %v2546
        %v3331 = vpack.c.b16 %v2563, %v2555
        %v3332 = vpack.c.b16 %v2564, %v2556
        %v3333 = vpack.c.b16 %v2565, %v2557
        %v3334 = vpack.c.b16 %v2566, %v2558
        %v3335 = vpack.c.b16 %v2567, %v2559
        %v3336 = vpack.c.b16 %v2568, %v2560
        %v3337 = vpack.c.b16 %v2569, %v2561
        %v3338 = vpack.c.b16 %v2570, %v2562
        %v3339 = vpack.c.b16 %v2579, %v2571
        %v3340 = vpack.c.b16 %v2580, %v2572
        %v3341 = vpack.c.b16 %v2581, %v2573
        %v3342 = vpack.c.b16 %v2582, %v2574
        %v3343 = vpack.c.b16 %v2583, %v2575
        %v3344 = vpack.c.b16 %v2584, %v2576
        %v3345 = vpack.c.b16 %v2585, %v2577
        %v3346 = vpack.c.b16 %v2586, %v2578
        %v3347 = vpack.c.b16 %v2595, %v2587
        %v3348 = vpack.c.b16 %v2596, %v2588
        %v3349 = vpack.c.b16 %v2597, %v2589
        %v3350 = vpack.c.b16 %v2598, %v2590
        %v3351 = vpack.c.b16 %v2599, %v2591
        %v3352 = vpack.c.b16 %v2600, %v2592
        %v3353 = vpack.c.b16 %v2601, %v2593
        %v3354 = vpack.c.b16 %v2602, %v2594
        %v3355 = vpack.c.b16 %v2611, %v2603
        %v3356 = vpack.c.b16 %v2612, %v2604
        %v3357 = vpack.c.b16 %v2613, %v2605
        %v3358 = vpack.c.b16 %v2614, %v2606
        %v3359 = vpack.c.b16 %v2615, %v2607
        %v3360 = vpack.c.b16 %v2616, %v2608
        %v3361 = vpack.c.b16 %v2617, %v2609
        %v3362 = vpack.c.b16 %v2618, %v2610
        %v3363 = vpack.c.b16 %v2627, %v2619
        %v3364 = vpack.c.b16 %v2628, %v2620
        %v3365 = vpack.c.b16 %v2629, %v2621
        %v3366 = vpack.c.b16 %v2630, %v2622
        %v3367 = vpack.c.b16 %v2631, %v2623
        %v3368 = vpack.c.b16 %v2632, %v2624
        %v3369 = vpack.c.b16 %v2633, %v2625
        %v3370 = vpack.c.b16 %v2634, %v2626
        %v3371 = vpack.c.b16 %v2643, %v2635
        %v3372 = vpack.c.b16 %v2644, %v2636
        %v3373 = vpack.c.b16 %v2645, %v2637
        %v3374 = vpack.c.b16 %v2646, %v2638
        %v3375 = vpack.c.b16 %v2647, %v2639
        %v3376 = vpack.c.b16 %v2648, %v2640
        %v3377 = vpack.c.b16 %v2649, %v2641
        %v3378 = vpack.c.b16 %v2650, %v2642
        %v3379 = vpack.c.b16 %v2659, %v2651
        %v3380 = vpack.c.b16 %v2660, %v2652
        %v3381 = vpack.c.b16 %v2661, %v2653
        %v3382 = vpack.c.b16 %v2662, %v2654
        %v3383 = vpack.c.b16 %v2663, %v2655
        %v3384 = vpack.c.b16 %v2664, %v2656
        %v3385 = vpack.c.b16 %v2665, %v2657
        %v3386 = vpack.c.b16 %v2666, %v2658
        %v3387 = vpack.c.b16 %v2675, %v2667
        %v3388 = vpack.c.b16 %v2676, %v2668
        %v3389 = vpack.c.b16 %v2677, %v2669
        %v3390 = vpack.c.b16 %v2678, %v2670
        %v3391 = vpack.c.b16 %v2679, %v2671
        %v3392 = vpack.c.b16 %v2680, %v2672
        %v3393 = vpack.c.b16 %v2681, %v2673
        %v3394 = vpack.c.b16 %v2682, %v2674
        %v3395 = vpack.c.b16 %v2691, %v2683
        %v3396 = vpack.c.b16 %v2692, %v2684
        %v3397 = vpack.c.b16 %v2693, %v2685
        %v3398 = vpack.c.b16 %v2694, %v2686
        %v3399 = vpack.c.b16 %v2695, %v2687
        %v3400 = vpack.c.b16 %v2696, %v2688
        %v3401 = vpack.c.b16 %v2697, %v2689
        %v3402 = vpack.c.b16 %v2698, %v2690
        %v3403 = vpack.c.b16 %v2707, %v2699
        %v3404 = vpack.c.b16 %v2708, %v2700
        %v3405 = vpack.c.b16 %v2709, %v2701
        %v3406 = vpack.c.b16 %v2710, %v2702
        %v3407 = vpack.c.b16 %v2711, %v2703
        %v3408 = vpack.c.b16 %v2712, %v2704
        %v3409 = vpack.c.b16 %v2713, %v2705
        %v3410 = vpack.c.b16 %v2714, %v2706
        %v3411 = vpack.c.b16 %v2723, %v2715
        %v3412 = vpack.c.b16 %v2724, %v2716
        %v3413 = vpack.c.b16 %v2725, %v2717
        %v3414 = vpack.c.b16 %v2726, %v2718
        %v3415 = vpack.c.b16 %v2727, %v2719
        %v3416 = vpack.c.b16 %v2728, %v2720
        %v3417 = vpack.c.b16 %v2729, %v2721
        %v3418 = vpack.c.b16 %v2730, %v2722
        %v3419 = vpack.c.b16 %v2739, %v2731
        %v3420 = vpack.c.b16 %v2740, %v2732
        %v3421 = vpack.c.b16 %v2741, %v2733
        %v3422 = vpack.c.b16 %v2742, %v2734
        %v3423 = vpack.c.b16 %v2743, %v2735
        %v3424 = vpack.c.b16 %v2744, %v2736
        %v3425 = vpack.c.b16 %v2745, %v2737
        %v3426 = vpack.c.b16 %v2746, %v2738
        %v3427 = vpack.c.b16 %v2755, %v2747
        %v3428 = vpack.c.b16 %v2756, %v2748
        %v3429 = vpack.c.b16 %v2757, %v2749
        %v3430 = vpack.c.b16 %v2758, %v2750
        %v3431 = vpack.c.b16 %v2759, %v2751
        %v3432 = vpack.c.b16 %v2760, %v2752
        %v3433 = vpack.c.b16 %v2761, %v2753
        %v3434 = vpack.c.b16 %v2762, %v2754
        %v3435 = vpack.c.b16 %v2771, %v2763
        %v3436 = vpack.c.b16 %v2772, %v2764
        %v3437 = vpack.c.b16 %v2773, %v2765
        %v3438 = vpack.c.b16 %v2774, %v2766
        %v3439 = vpack.c.b16 %v2775, %v2767
        %v3440 = vpack.c.b16 %v2776, %v2768
        %v3441 = vpack.c.b16 %v2777, %v2769
        %v3442 = vpack.c.b16 %v2778, %v2770
        %v3443 = vpack.c.b16 %v2787, %v2779
        %v3444 = vpack.c.b16 %v2788, %v2780
        %v3445 = vpack.c.b16 %v2789, %v2781
        %v3446 = vpack.c.b16 %v2790, %v2782
        %v3447 = vpack.c.b16 %v2791, %v2783
        %v3448 = vpack.c.b16 %v2792, %v2784
        %v3449 = vpack.c.b16 %v2793, %v2785
        %v3450 = vpack.c.b16 %v2794, %v2786
        %v3451 = vpack.c.b16 %v2803, %v2795
        %v3452 = vpack.c.b16 %v2804, %v2796
        %v3453 = vpack.c.b16 %v2805, %v2797
        %v3454 = vpack.c.b16 %v2806, %v2798
        %v3455 = vpack.c.b16 %v2807, %v2799
        %v3456 = vpack.c.b16 %v2808, %v2800
        %v3457 = vpack.c.b16 %v2809, %v2801
        %v3458 = vpack.c.b16 %v2810, %v2802
        %v3459 = vpack.c.b16 %v2819, %v2811
        %v3460 = vpack.c.b16 %v2820, %v2812
        %v3461 = vpack.c.b16 %v2821, %v2813
        %v3462 = vpack.c.b16 %v2822, %v2814
        %v3463 = vpack.c.b16 %v2823, %v2815
        %v3464 = vpack.c.b16 %v2824, %v2816
        %v3465 = vpack.c.b16 %v2825, %v2817
        %v3466 = vpack.c.b16 %v2826, %v2818
        %v3467 = vpack.c.b16 %v2835, %v2827
        %v3468 = vpack.c.b16 %v2836, %v2828
        %v3469 = vpack.c.b16 %v2837, %v2829
        %v3470 = vpack.c.b16 %v2838, %v2830
        %v3471 = vpack.c.b16 %v2839, %v2831
        %v3472 = vpack.c.b16 %v2840, %v2832
        %v3473 = vpack.c.b16 %v2841, %v2833
        %v3474 = vpack.c.b16 %v2842, %v2834
        %v3475 = vpack.c.b16 %v2851, %v2843
        %v3476 = vpack.c.b16 %v2852, %v2844
        %v3477 = vpack.c.b16 %v2853, %v2845
        %v3478 = vpack.c.b16 %v2854, %v2846
        %v3479 = vpack.c.b16 %v2855, %v2847
        %v3480 = vpack.c.b16 %v2856, %v2848
        %v3481 = vpack.c.b16 %v2857, %v2849
        %v3482 = vpack.c.b16 %v2858, %v2850
        %v3483 = vpack.c.b16 %v2867, %v2859
        %v3484 = vpack.c.b16 %v2868, %v2860
        %v3485 = vpack.c.b16 %v2869, %v2861
        %v3486 = vpack.c.b16 %v2870, %v2862
        %v3487 = vpack.c.b16 %v2871, %v2863
        %v3488 = vpack.c.b16 %v2872, %v2864
        %v3489 = vpack.c.b16 %v2873, %v2865
        %v3490 = vpack.c.b16 %v2874, %v2866
        %v3491 = vpack.c.b16 %v2883, %v2875
        %v3492 = vpack.c.b16 %v2884, %v2876
        %v3493 = vpack.c.b16 %v2885, %v2877
        %v3494 = vpack.c.b16 %v2886, %v2878
        %v3495 = vpack.c.b16 %v2887, %v2879
        %v3496 = vpack.c.b16 %v2888, %v2880
        %v3497 = vpack.c.b16 %v2889, %v2881
        %v3498 = vpack.c.b16 %v2890, %v2882
        %v3499 = vpack.c.b16 %v2899, %v2891
        %v3500 = vpack.c.b16 %v2900, %v2892
        %v3501 = vpack.c.b16 %v2901, %v2893
        %v3502 = vpack.c.b16 %v2902, %v2894
        %v3503 = vpack.c.b16 %v2903, %v2895
        %v3504 = vpack.c.b16 %v2904, %v2896
        %v3505 = vpack.c.b16 %v2905, %v2897
        %v3506 = vpack.c.b16 %v2906, %v2898
        %v3507 = vpack.c.b16 %v2915, %v2907
        %v3508 = vpack.c.b16 %v2916, %v2908
        %v3509 = vpack.c.b16 %v2917, %v2909
        %v3510 = vpack.c.b16 %v2918, %v2910
        %v3511 = vpack.c.b16 %v2919, %v2911
        %v3512 = vpack.c.b16 %v2920, %v2912
        %v3513 = vpack.c.b16 %v2921, %v2913
        %v3514 = vpack.c.b16 %v2922, %v2914
        %v3515 = vpack.c.b16 %v2931, %v2923
        %v3516 = vpack.c.b16 %v2932, %v2924
        %v3517 = vpack.c.b16 %v2933, %v2925
        %v3518 = vpack.c.b16 %v2934, %v2926
        %v3519 = vpack.c.b16 %v2935, %v2927
        %v3520 = vpack.c.b16 %v2936, %v2928
        %v3521 = vpack.c.b16 %v2937, %v2929
        %v3522 = vpack.c.b16 %v2938, %v2930
        %v3523 = vpack.c.b16 %v2947, %v2939
        %v3524 = vpack.c.b16 %v2948, %v2940
        %v3525 = vpack.c.b16 %v2949, %v2941
        %v3526 = vpack.c.b16 %v2950, %v2942
        %v3527 = vpack.c.b16 %v2951, %v2943
        %v3528 = vpack.c.b16 %v2952, %v2944
        %v3529 = vpack.c.b16 %v2953, %v2945
        %v3530 = vpack.c.b16 %v2954, %v2946
        %v3531 = vpack.c.b16 %v2963, %v2955
        %v3532 = vpack.c.b16 %v2964, %v2956
        %v3533 = vpack.c.b16 %v2965, %v2957
        %v3534 = vpack.c.b16 %v2966, %v2958
        %v3535 = vpack.c.b16 %v2967, %v2959
        %v3536 = vpack.c.b16 %v2968, %v2960
        %v3537 = vpack.c.b16 %v2969, %v2961
        %v3538 = vpack.c.b16 %v2970, %v2962
        %v3539 = vpack.c.b16 %v2979, %v2971
        %v3540 = vpack.c.b16 %v2980, %v2972
        %v3541 = vpack.c.b16 %v2981, %v2973
        %v3542 = vpack.c.b16 %v2982, %v2974
        %v3543 = vpack.c.b16 %v2983, %v2975
        %v3544 = vpack.c.b16 %v2984, %v2976
        %v3545 = vpack.c.b16 %v2985, %v2977
        %v3546 = vpack.c.b16 %v2986, %v2978
        %v3547 = vpack.c.b16 %v2995, %v2987
        %v3548 = vpack.c.b16 %v2996, %v2988
        %v3549 = vpack.c.b16 %v2997, %v2989
        %v3550 = vpack.c.b16 %v2998, %v2990
        %v3551 = vpack.c.b16 %v2999, %v2991
        %v3552 = vpack.c.b16 %v3000, %v2992
        %v3553 = vpack.c.b16 %v3001, %v2993
        %v3554 = vpack.c.b16 %v3002, %v2994
        %v3555 = vpack.c.b16 %v3011, %v3003
        %v3556 = vpack.c.b16 %v3012, %v3004
        %v3557 = vpack.c.b16 %v3013, %v3005
        %v3558 = vpack.c.b16 %v3014, %v3006
        %v3559 = vpack.c.b16 %v3015, %v3007
        %v3560 = vpack.c.b16 %v3016, %v3008
        %v3561 = vpack.c.b16 %v3017, %v3009
        %v3562 = vpack.c.b16 %v3018, %v3010
        %v3563 = vpack.c.b16 %v3027, %v3019
        %v3564 = vpack.c.b16 %v3028, %v3020
        %v3565 = vpack.c.b16 %v3029, %v3021
        %v3566 = vpack.c.b16 %v3030, %v3022
        %v3567 = vpack.c.b16 %v3031, %v3023
        %v3568 = vpack.c.b16 %v3032, %v3024
        %v3569 = vpack.c.b16 %v3033, %v3025
        %v3570 = vpack.c.b16 %v3034, %v3026
        %v3571 = vpack.c.b16 %v3043, %v3035
        %v3572 = vpack.c.b16 %v3044, %v3036
        %v3573 = vpack.c.b16 %v3045, %v3037
        %v3574 = vpack.c.b16 %v3046, %v3038
        %v3575 = vpack.c.b16 %v3047, %v3039
        %v3576 = vpack.c.b16 %v3048, %v3040
        %v3577 = vpack.c.b16 %v3049, %v3041
        %v3578 = vpack.c.b16 %v3050, %v3042
        %v3579 = vpack.c.b16 %v3059, %v3051
        %v3580 = vpack.c.b16 %v3060, %v3052
        %v3581 = vpack.c.b16 %v3061, %v3053
        %v3582 = vpack.c.b16 %v3062, %v3054
        %v3583 = vpack.c.b16 %v3063, %v3055
        %v3584 = vpack.c.b16 %v3064, %v3056
        %v3585 = vpack.c.b16 %v3065, %v3057
        %v3586 = vpack.c.b16 %v3066, %v3058
        %v3587 = vpack.c.b16 %v3075, %v3067
        %v3588 = vpack.c.b16 %v3076, %v3068
        %v3589 = vpack.c.b16 %v3077, %v3069
        %v3590 = vpack.c.b16 %v3078, %v3070
        %v3591 = vpack.c.b16 %v3079, %v3071
        %v3592 = vpack.c.b16 %v3080, %v3072
        %v3593 = vpack.c.b16 %v3081, %v3073
        %v3594 = vpack.c.b16 %v3082, %v3074
        %4107 = vmatpush.bf16.msra.mxu0 %v3139
        %4108 = vmatpush.bf16.msra.mxu0 %v3131
        %4109 = vmatpush.bf16.msra.mxu0 %v3123
        %4110 = vmatpush.bf16.msra.mxu0 %v3115
        %4111 = vmatpush.bf16.msra.mxu0 %v3107
        %4112 = vmatpush.bf16.msra.mxu0 %v3099
        %4113 = vmatpush.bf16.msra.mxu0 %v3091
        %4114 = vmatpush.bf16.msra.mxu0 %v3083
        %4115 = vmatmul.bf16.gmra.mxu0 %v1009
        %v4116 = vpop.f32.mrf.mxu0
        %v4117 = vadd.f32 %v1531, %v4116
        %v4118 = vpop.f32.mrf.mxu0
        %4119 = vdwg.mxu0
        %4120 = vmatpush.bf16.msra.mxu0 %v3203
        %4121 = vmatpush.bf16.msra.mxu0 %v3195
        %4122 = vmatpush.bf16.msra.mxu0 %v3187
        %4123 = vmatpush.bf16.msra.mxu0 %v3179
        %4124 = vmatpush.bf16.msra.mxu0 %v3171
        %4125 = vmatpush.bf16.msra.mxu0 %v3163
        %4126 = vmatpush.bf16.msra.mxu0 %v3155
        %4127 = vmatpush.bf16.msra.mxu0 %v3147
        %4128 = vmatmul.bf16.gmra.mxu0 %v1010
        %v4129 = vpop.f32.mrf.mxu0
        %v4130 = vadd.f32 %v4117, %v4129
        %v4131 = vpop.f32.mrf.mxu0
        %4132 = vdwg.mxu0
        %4133 = vmatpush.bf16.msra.mxu0 %v3267
        %4134 = vmatpush.bf16.msra.mxu0 %v3259
        %4135 = vmatpush.bf16.msra.mxu0 %v3251
        %4136 = vmatpush.bf16.msra.mxu0 %v3243
        %4137 = vmatpush.bf16.msra.mxu0 %v3235
        %4138 = vmatpush.bf16.msra.mxu0 %v3227
        %4139 = vmatpush.bf16.msra.mxu0 %v3219
        %4140 = vmatpush.bf16.msra.mxu0 %v3211
        %4141 = vmatmul.bf16.gmra.mxu0 %v1011
        %v4142 = vpop.f32.mrf.mxu0
        %v4143 = vadd.f32 %v4130, %v4142
        %v4144 = vpop.f32.mrf.mxu0
        %4145 = vdwg.mxu0
        %4146 = vmatpush.bf16.msra.mxu0 %v3331
        %4147 = vmatpush.bf16.msra.mxu0 %v3323
        %4148 = vmatpush.bf16.msra.mxu0 %v3315
        %4149 = vmatpush.bf16.msra.mxu0 %v3307
        %4150 = vmatpush.bf16.msra.mxu0 %v3299
        %4151 = vmatpush.bf16.msra.mxu0 %v3291
        %4152 = vmatpush.bf16.msra.mxu0 %v3283
        %4153 = vmatpush.bf16.msra.mxu0 %v3275
        %4154 = vmatmul.bf16.gmra.mxu0 %v1012
        %v4155 = vpop.f32.mrf.mxu0
        %v4156 = vadd.f32 %v4143, %v4155
        %v4157 = vpop.f32.mrf.mxu0
        %4158 = vdwg.mxu0
        %4159 = vmatpush.bf16.msra.mxu0 %v3395
        %4160 = vmatpush.bf16.msra.mxu0 %v3387
        %4161 = vmatpush.bf16.msra.mxu0 %v3379
        %4162 = vmatpush.bf16.msra.mxu0 %v3371
        %4163 = vmatpush.bf16.msra.mxu0 %v3363
        %4164 = vmatpush.bf16.msra.mxu0 %v3355
        %4165 = vmatpush.bf16.msra.mxu0 %v3347
        %4166 = vmatpush.bf16.msra.mxu0 %v3339
        %4167 = vmatmul.bf16.gmra.mxu0 %v1013
        %v4168 = vpop.f32.mrf.mxu0
        %v4169 = vadd.f32 %v4156, %v4168
        %v4170 = vpop.f32.mrf.mxu0
        %4171 = vdwg.mxu0
        %4172 = vmatpush.bf16.msra.mxu0 %v3459
        %4173 = vmatpush.bf16.msra.mxu0 %v3451
        %4174 = vmatpush.bf16.msra.mxu0 %v3443
        %4175 = vmatpush.bf16.msra.mxu0 %v3435
        %4176 = vmatpush.bf16.msra.mxu0 %v3427
        %4177 = vmatpush.bf16.msra.mxu0 %v3419
        %4178 = vmatpush.bf16.msra.mxu0 %v3411
        %4179 = vmatpush.bf16.msra.mxu0 %v3403
        %4180 = vmatmul.bf16.gmra.mxu0 %v1014
        %v4181 = vpop.f32.mrf.mxu0
        %v4182 = vadd.f32 %v4169, %v4181
        %v4183 = vpop.f32.mrf.mxu0
        %4184 = vdwg.mxu0
        %4185 = vmatpush.bf16.msra.mxu0 %v3523
        %4186 = vmatpush.bf16.msra.mxu0 %v3515
        %4187 = vmatpush.bf16.msra.mxu0 %v3507
        %4188 = vmatpush.bf16.msra.mxu0 %v3499
        %4189 = vmatpush.bf16.msra.mxu0 %v3491
        %4190 = vmatpush.bf16.msra.mxu0 %v3483
        %4191 = vmatpush.bf16.msra.mxu0 %v3475
        %4192 = vmatpush.bf16.msra.mxu0 %v3467
        %4193 = vmatmul.bf16.gmra.mxu0 %v1015
        %v4194 = vpop.f32.mrf.mxu0
        %v4195 = vadd.f32 %v4182, %v4194
        %v4196 = vpop.f32.mrf.mxu0
        %4197 = vdwg.mxu0
        %4198 = vmatpush.bf16.msra.mxu0 %v3587
        %4199 = vmatpush.bf16.msra.mxu0 %v3579
        %4200 = vmatpush.bf16.msra.mxu0 %v3571
        %4201 = vmatpush.bf16.msra.mxu0 %v3563
        %4202 = vmatpush.bf16.msra.mxu0 %v3555
        %4203 = vmatpush.bf16.msra.mxu0 %v3547
        %4204 = vmatpush.bf16.msra.mxu0 %v3539
        %4205 = vmatpush.bf16.msra.mxu0 %v3531
        %4206 = vmatmul.bf16.gmra.mxu0 %v1016
        %v4207 = vpop.f32.mrf.mxu0
        %v4208 = vadd.f32 %v4195, %v4207
        %v4209 = vpop.f32.mrf.mxu0
        %4210 = vdwg.mxu0
        %4211 = vmatpush.bf16.msra.mxu0 %v3140
        %4212 = vmatpush.bf16.msra.mxu0 %v3132
        %4213 = vmatpush.bf16.msra.mxu0 %v3124
        %4214 = vmatpush.bf16.msra.mxu0 %v3116
        %4215 = vmatpush.bf16.msra.mxu0 %v3108
        %4216 = vmatpush.bf16.msra.mxu0 %v3100
        %4217 = vmatpush.bf16.msra.mxu0 %v3092
        %4218 = vmatpush.bf16.msra.mxu0 %v3084
        %4219 = vmatmul.bf16.gmra.mxu0 %v1009
        %v4220 = vpop.f32.mrf.mxu0
        %v4221 = vadd.f32 %v1532, %v4220
        %v4222 = vpop.f32.mrf.mxu0
        %4223 = vdwg.mxu0
        %4224 = vmatpush.bf16.msra.mxu0 %v3204
        %4225 = vmatpush.bf16.msra.mxu0 %v3196
        %4226 = vmatpush.bf16.msra.mxu0 %v3188
        %4227 = vmatpush.bf16.msra.mxu0 %v3180
        %4228 = vmatpush.bf16.msra.mxu0 %v3172
        %4229 = vmatpush.bf16.msra.mxu0 %v3164
        %4230 = vmatpush.bf16.msra.mxu0 %v3156
        %4231 = vmatpush.bf16.msra.mxu0 %v3148
        %4232 = vmatmul.bf16.gmra.mxu0 %v1010
        %v4233 = vpop.f32.mrf.mxu0
        %v4234 = vadd.f32 %v4221, %v4233
        %v4235 = vpop.f32.mrf.mxu0
        %4236 = vdwg.mxu0
        %4237 = vmatpush.bf16.msra.mxu0 %v3268
        %4238 = vmatpush.bf16.msra.mxu0 %v3260
        %4239 = vmatpush.bf16.msra.mxu0 %v3252
        %4240 = vmatpush.bf16.msra.mxu0 %v3244
        %4241 = vmatpush.bf16.msra.mxu0 %v3236
        %4242 = vmatpush.bf16.msra.mxu0 %v3228
        %4243 = vmatpush.bf16.msra.mxu0 %v3220
        %4244 = vmatpush.bf16.msra.mxu0 %v3212
        %4245 = vmatmul.bf16.gmra.mxu0 %v1011
        %v4246 = vpop.f32.mrf.mxu0
        %v4247 = vadd.f32 %v4234, %v4246
        %v4248 = vpop.f32.mrf.mxu0
        %4249 = vdwg.mxu0
        %4250 = vmatpush.bf16.msra.mxu0 %v3332
        %4251 = vmatpush.bf16.msra.mxu0 %v3324
        %4252 = vmatpush.bf16.msra.mxu0 %v3316
        %4253 = vmatpush.bf16.msra.mxu0 %v3308
        %4254 = vmatpush.bf16.msra.mxu0 %v3300
        %4255 = vmatpush.bf16.msra.mxu0 %v3292
        %4256 = vmatpush.bf16.msra.mxu0 %v3284
        %4257 = vmatpush.bf16.msra.mxu0 %v3276
        %4258 = vmatmul.bf16.gmra.mxu0 %v1012
        %v4259 = vpop.f32.mrf.mxu0
        %v4260 = vadd.f32 %v4247, %v4259
        %v4261 = vpop.f32.mrf.mxu0
        %4262 = vdwg.mxu0
        %4263 = vmatpush.bf16.msra.mxu0 %v3396
        %4264 = vmatpush.bf16.msra.mxu0 %v3388
        %4265 = vmatpush.bf16.msra.mxu0 %v3380
        %4266 = vmatpush.bf16.msra.mxu0 %v3372
        %4267 = vmatpush.bf16.msra.mxu0 %v3364
        %4268 = vmatpush.bf16.msra.mxu0 %v3356
        %4269 = vmatpush.bf16.msra.mxu0 %v3348
        %4270 = vmatpush.bf16.msra.mxu0 %v3340
        %4271 = vmatmul.bf16.gmra.mxu0 %v1013
        %v4272 = vpop.f32.mrf.mxu0
        %v4273 = vadd.f32 %v4260, %v4272
        %v4274 = vpop.f32.mrf.mxu0
        %4275 = vdwg.mxu0
        %4276 = vmatpush.bf16.msra.mxu0 %v3460
        %4277 = vmatpush.bf16.msra.mxu0 %v3452
        %4278 = vmatpush.bf16.msra.mxu0 %v3444
        %4279 = vmatpush.bf16.msra.mxu0 %v3436
        %4280 = vmatpush.bf16.msra.mxu0 %v3428
        %4281 = vmatpush.bf16.msra.mxu0 %v3420
        %4282 = vmatpush.bf16.msra.mxu0 %v3412
        %4283 = vmatpush.bf16.msra.mxu0 %v3404
        %4284 = vmatmul.bf16.gmra.mxu0 %v1014
        %v4285 = vpop.f32.mrf.mxu0
        %v4286 = vadd.f32 %v4273, %v4285
        %v4287 = vpop.f32.mrf.mxu0
        %4288 = vdwg.mxu0
        %4289 = vmatpush.bf16.msra.mxu0 %v3524
        %4290 = vmatpush.bf16.msra.mxu0 %v3516
        %4291 = vmatpush.bf16.msra.mxu0 %v3508
        %4292 = vmatpush.bf16.msra.mxu0 %v3500
        %4293 = vmatpush.bf16.msra.mxu0 %v3492
        %4294 = vmatpush.bf16.msra.mxu0 %v3484
        %4295 = vmatpush.bf16.msra.mxu0 %v3476
        %4296 = vmatpush.bf16.msra.mxu0 %v3468
        %4297 = vmatmul.bf16.gmra.mxu0 %v1015
        %v4298 = vpop.f32.mrf.mxu0
        %v4299 = vadd.f32 %v4286, %v4298
        %v4300 = vpop.f32.mrf.mxu0
        %4301 = vdwg.mxu0
        %4302 = vmatpush.bf16.msra.mxu0 %v3588
        %4303 = vmatpush.bf16.msra.mxu0 %v3580
        %4304 = vmatpush.bf16.msra.mxu0 %v3572
        %4305 = vmatpush.bf16.msra.mxu0 %v3564
        %4306 = vmatpush.bf16.msra.mxu0 %v3556
        %4307 = vmatpush.bf16.msra.mxu0 %v3548
        %4308 = vmatpush.bf16.msra.mxu0 %v3540
        %4309 = vmatpush.bf16.msra.mxu0 %v3532
        %4310 = vmatmul.bf16.gmra.mxu0 %v1016
        %v4311 = vpop.f32.mrf.mxu0
        %v4312 = vadd.f32 %v4299, %v4311
        %v4313 = vpop.f32.mrf.mxu0
        %4314 = vdwg.mxu0
        %4315 = vmatpush.bf16.msra.mxu0 %v3141
        %4316 = vmatpush.bf16.msra.mxu0 %v3133
        %4317 = vmatpush.bf16.msra.mxu0 %v3125
        %4318 = vmatpush.bf16.msra.mxu0 %v3117
        %4319 = vmatpush.bf16.msra.mxu0 %v3109
        %4320 = vmatpush.bf16.msra.mxu0 %v3101
        %4321 = vmatpush.bf16.msra.mxu0 %v3093
        %4322 = vmatpush.bf16.msra.mxu0 %v3085
        %4323 = vmatmul.bf16.gmra.mxu0 %v1009
        %v4324 = vpop.f32.mrf.mxu0
        %v4325 = vadd.f32 %v1533, %v4324
        %v4326 = vpop.f32.mrf.mxu0
        %4327 = vdwg.mxu0
        %4328 = vmatpush.bf16.msra.mxu0 %v3205
        %4329 = vmatpush.bf16.msra.mxu0 %v3197
        %4330 = vmatpush.bf16.msra.mxu0 %v3189
        %4331 = vmatpush.bf16.msra.mxu0 %v3181
        %4332 = vmatpush.bf16.msra.mxu0 %v3173
        %4333 = vmatpush.bf16.msra.mxu0 %v3165
        %4334 = vmatpush.bf16.msra.mxu0 %v3157
        %4335 = vmatpush.bf16.msra.mxu0 %v3149
        %4336 = vmatmul.bf16.gmra.mxu0 %v1010
        %v4337 = vpop.f32.mrf.mxu0
        %v4338 = vadd.f32 %v4325, %v4337
        %v4339 = vpop.f32.mrf.mxu0
        %4340 = vdwg.mxu0
        %4341 = vmatpush.bf16.msra.mxu0 %v3269
        %4342 = vmatpush.bf16.msra.mxu0 %v3261
        %4343 = vmatpush.bf16.msra.mxu0 %v3253
        %4344 = vmatpush.bf16.msra.mxu0 %v3245
        %4345 = vmatpush.bf16.msra.mxu0 %v3237
        %4346 = vmatpush.bf16.msra.mxu0 %v3229
        %4347 = vmatpush.bf16.msra.mxu0 %v3221
        %4348 = vmatpush.bf16.msra.mxu0 %v3213
        %4349 = vmatmul.bf16.gmra.mxu0 %v1011
        %v4350 = vpop.f32.mrf.mxu0
        %v4351 = vadd.f32 %v4338, %v4350
        %v4352 = vpop.f32.mrf.mxu0
        %4353 = vdwg.mxu0
        %4354 = vmatpush.bf16.msra.mxu0 %v3333
        %4355 = vmatpush.bf16.msra.mxu0 %v3325
        %4356 = vmatpush.bf16.msra.mxu0 %v3317
        %4357 = vmatpush.bf16.msra.mxu0 %v3309
        %4358 = vmatpush.bf16.msra.mxu0 %v3301
        %4359 = vmatpush.bf16.msra.mxu0 %v3293
        %4360 = vmatpush.bf16.msra.mxu0 %v3285
        %4361 = vmatpush.bf16.msra.mxu0 %v3277
        %4362 = vmatmul.bf16.gmra.mxu0 %v1012
        %v4363 = vpop.f32.mrf.mxu0
        %v4364 = vadd.f32 %v4351, %v4363
        %v4365 = vpop.f32.mrf.mxu0
        %4366 = vdwg.mxu0
        %4367 = vmatpush.bf16.msra.mxu0 %v3397
        %4368 = vmatpush.bf16.msra.mxu0 %v3389
        %4369 = vmatpush.bf16.msra.mxu0 %v3381
        %4370 = vmatpush.bf16.msra.mxu0 %v3373
        %4371 = vmatpush.bf16.msra.mxu0 %v3365
        %4372 = vmatpush.bf16.msra.mxu0 %v3357
        %4373 = vmatpush.bf16.msra.mxu0 %v3349
        %4374 = vmatpush.bf16.msra.mxu0 %v3341
        %4375 = vmatmul.bf16.gmra.mxu0 %v1013
        %v4376 = vpop.f32.mrf.mxu0
        %v4377 = vadd.f32 %v4364, %v4376
        %v4378 = vpop.f32.mrf.mxu0
        %4379 = vdwg.mxu0
        %4380 = vmatpush.bf16.msra.mxu0 %v3461
        %4381 = vmatpush.bf16.msra.mxu0 %v3453
        %4382 = vmatpush.bf16.msra.mxu0 %v3445
        %4383 = vmatpush.bf16.msra.mxu0 %v3437
        %4384 = vmatpush.bf16.msra.mxu0 %v3429
        %4385 = vmatpush.bf16.msra.mxu0 %v3421
        %4386 = vmatpush.bf16.msra.mxu0 %v3413
        %4387 = vmatpush.bf16.msra.mxu0 %v3405
        %4388 = vmatmul.bf16.gmra.mxu0 %v1014
        %v4389 = vpop.f32.mrf.mxu0
        %v4390 = vadd.f32 %v4377, %v4389
        %v4391 = vpop.f32.mrf.mxu0
        %4392 = vdwg.mxu0
        %4393 = vmatpush.bf16.msra.mxu0 %v3525
        %4394 = vmatpush.bf16.msra.mxu0 %v3517
        %4395 = vmatpush.bf16.msra.mxu0 %v3509
        %4396 = vmatpush.bf16.msra.mxu0 %v3501
        %4397 = vmatpush.bf16.msra.mxu0 %v3493
        %4398 = vmatpush.bf16.msra.mxu0 %v3485
        %4399 = vmatpush.bf16.msra.mxu0 %v3477
        %4400 = vmatpush.bf16.msra.mxu0 %v3469
        %4401 = vmatmul.bf16.gmra.mxu0 %v1015
        %v4402 = vpop.f32.mrf.mxu0
        %v4403 = vadd.f32 %v4390, %v4402
        %v4404 = vpop.f32.mrf.mxu0
        %4405 = vdwg.mxu0
        %4406 = vmatpush.bf16.msra.mxu0 %v3589
        %4407 = vmatpush.bf16.msra.mxu0 %v3581
        %4408 = vmatpush.bf16.msra.mxu0 %v3573
        %4409 = vmatpush.bf16.msra.mxu0 %v3565
        %4410 = vmatpush.bf16.msra.mxu0 %v3557
        %4411 = vmatpush.bf16.msra.mxu0 %v3549
        %4412 = vmatpush.bf16.msra.mxu0 %v3541
        %4413 = vmatpush.bf16.msra.mxu0 %v3533
        %4414 = vmatmul.bf16.gmra.mxu0 %v1016
        %v4415 = vpop.f32.mrf.mxu0
        %v4416 = vadd.f32 %v4403, %v4415
        %v4417 = vpop.f32.mrf.mxu0
        %4418 = vdwg.mxu0
        %4419 = vmatpush.bf16.msra.mxu0 %v3142
        %4420 = vmatpush.bf16.msra.mxu0 %v3134
        %4421 = vmatpush.bf16.msra.mxu0 %v3126
        %4422 = vmatpush.bf16.msra.mxu0 %v3118
        %4423 = vmatpush.bf16.msra.mxu0 %v3110
        %4424 = vmatpush.bf16.msra.mxu0 %v3102
        %4425 = vmatpush.bf16.msra.mxu0 %v3094
        %4426 = vmatpush.bf16.msra.mxu0 %v3086
        %4427 = vmatmul.bf16.gmra.mxu0 %v1009
        %v4428 = vpop.f32.mrf.mxu0
        %v4429 = vadd.f32 %v1534, %v4428
        %v4430 = vpop.f32.mrf.mxu0
        %4431 = vdwg.mxu0
        %4432 = vmatpush.bf16.msra.mxu0 %v3206
        %4433 = vmatpush.bf16.msra.mxu0 %v3198
        %4434 = vmatpush.bf16.msra.mxu0 %v3190
        %4435 = vmatpush.bf16.msra.mxu0 %v3182
        %4436 = vmatpush.bf16.msra.mxu0 %v3174
        %4437 = vmatpush.bf16.msra.mxu0 %v3166
        %4438 = vmatpush.bf16.msra.mxu0 %v3158
        %4439 = vmatpush.bf16.msra.mxu0 %v3150
        %4440 = vmatmul.bf16.gmra.mxu0 %v1010
        %v4441 = vpop.f32.mrf.mxu0
        %v4442 = vadd.f32 %v4429, %v4441
        %v4443 = vpop.f32.mrf.mxu0
        %4444 = vdwg.mxu0
        %4445 = vmatpush.bf16.msra.mxu0 %v3270
        %4446 = vmatpush.bf16.msra.mxu0 %v3262
        %4447 = vmatpush.bf16.msra.mxu0 %v3254
        %4448 = vmatpush.bf16.msra.mxu0 %v3246
        %4449 = vmatpush.bf16.msra.mxu0 %v3238
        %4450 = vmatpush.bf16.msra.mxu0 %v3230
        %4451 = vmatpush.bf16.msra.mxu0 %v3222
        %4452 = vmatpush.bf16.msra.mxu0 %v3214
        %4453 = vmatmul.bf16.gmra.mxu0 %v1011
        %v4454 = vpop.f32.mrf.mxu0
        %v4455 = vadd.f32 %v4442, %v4454
        %v4456 = vpop.f32.mrf.mxu0
        %4457 = vdwg.mxu0
        %4458 = vmatpush.bf16.msra.mxu0 %v3334
        %4459 = vmatpush.bf16.msra.mxu0 %v3326
        %4460 = vmatpush.bf16.msra.mxu0 %v3318
        %4461 = vmatpush.bf16.msra.mxu0 %v3310
        %4462 = vmatpush.bf16.msra.mxu0 %v3302
        %4463 = vmatpush.bf16.msra.mxu0 %v3294
        %4464 = vmatpush.bf16.msra.mxu0 %v3286
        %4465 = vmatpush.bf16.msra.mxu0 %v3278
        %4466 = vmatmul.bf16.gmra.mxu0 %v1012
        %v4467 = vpop.f32.mrf.mxu0
        %v4468 = vadd.f32 %v4455, %v4467
        %v4469 = vpop.f32.mrf.mxu0
        %4470 = vdwg.mxu0
        %4471 = vmatpush.bf16.msra.mxu0 %v3398
        %4472 = vmatpush.bf16.msra.mxu0 %v3390
        %4473 = vmatpush.bf16.msra.mxu0 %v3382
        %4474 = vmatpush.bf16.msra.mxu0 %v3374
        %4475 = vmatpush.bf16.msra.mxu0 %v3366
        %4476 = vmatpush.bf16.msra.mxu0 %v3358
        %4477 = vmatpush.bf16.msra.mxu0 %v3350
        %4478 = vmatpush.bf16.msra.mxu0 %v3342
        %4479 = vmatmul.bf16.gmra.mxu0 %v1013
        %v4480 = vpop.f32.mrf.mxu0
        %v4481 = vadd.f32 %v4468, %v4480
        %v4482 = vpop.f32.mrf.mxu0
        %4483 = vdwg.mxu0
        %4484 = vmatpush.bf16.msra.mxu0 %v3462
        %4485 = vmatpush.bf16.msra.mxu0 %v3454
        %4486 = vmatpush.bf16.msra.mxu0 %v3446
        %4487 = vmatpush.bf16.msra.mxu0 %v3438
        %4488 = vmatpush.bf16.msra.mxu0 %v3430
        %4489 = vmatpush.bf16.msra.mxu0 %v3422
        %4490 = vmatpush.bf16.msra.mxu0 %v3414
        %4491 = vmatpush.bf16.msra.mxu0 %v3406
        %4492 = vmatmul.bf16.gmra.mxu0 %v1014
        %v4493 = vpop.f32.mrf.mxu0
        %v4494 = vadd.f32 %v4481, %v4493
        %v4495 = vpop.f32.mrf.mxu0
        %4496 = vdwg.mxu0
        %4497 = vmatpush.bf16.msra.mxu0 %v3526
        %4498 = vmatpush.bf16.msra.mxu0 %v3518
        %4499 = vmatpush.bf16.msra.mxu0 %v3510
        %4500 = vmatpush.bf16.msra.mxu0 %v3502
        %4501 = vmatpush.bf16.msra.mxu0 %v3494
        %4502 = vmatpush.bf16.msra.mxu0 %v3486
        %4503 = vmatpush.bf16.msra.mxu0 %v3478
        %4504 = vmatpush.bf16.msra.mxu0 %v3470
        %4505 = vmatmul.bf16.gmra.mxu0 %v1015
        %v4506 = vpop.f32.mrf.mxu0
        %v4507 = vadd.f32 %v4494, %v4506
        %v4508 = vpop.f32.mrf.mxu0
        %4509 = vdwg.mxu0
        %4510 = vmatpush.bf16.msra.mxu0 %v3590
        %4511 = vmatpush.bf16.msra.mxu0 %v3582
        %4512 = vmatpush.bf16.msra.mxu0 %v3574
        %4513 = vmatpush.bf16.msra.mxu0 %v3566
        %4514 = vmatpush.bf16.msra.mxu0 %v3558
        %4515 = vmatpush.bf16.msra.mxu0 %v3550
        %4516 = vmatpush.bf16.msra.mxu0 %v3542
        %4517 = vmatpush.bf16.msra.mxu0 %v3534
        %4518 = vmatmul.bf16.gmra.mxu0 %v1016
        %v4519 = vpop.f32.mrf.mxu0
        %v4520 = vadd.f32 %v4507, %v4519
        %v4521 = vpop.f32.mrf.mxu0
        %4522 = vdwg.mxu0
        %4523 = vmatpush.bf16.msra.mxu0 %v3143
        %4524 = vmatpush.bf16.msra.mxu0 %v3135
        %4525 = vmatpush.bf16.msra.mxu0 %v3127
        %4526 = vmatpush.bf16.msra.mxu0 %v3119
        %4527 = vmatpush.bf16.msra.mxu0 %v3111
        %4528 = vmatpush.bf16.msra.mxu0 %v3103
        %4529 = vmatpush.bf16.msra.mxu0 %v3095
        %4530 = vmatpush.bf16.msra.mxu0 %v3087
        %4531 = vmatmul.bf16.gmra.mxu0 %v1009
        %v4532 = vpop.f32.mrf.mxu0
        %v4533 = vadd.f32 %v1535, %v4532
        %v4534 = vpop.f32.mrf.mxu0
        %4535 = vdwg.mxu0
        %4536 = vmatpush.bf16.msra.mxu0 %v3207
        %4537 = vmatpush.bf16.msra.mxu0 %v3199
        %4538 = vmatpush.bf16.msra.mxu0 %v3191
        %4539 = vmatpush.bf16.msra.mxu0 %v3183
        %4540 = vmatpush.bf16.msra.mxu0 %v3175
        %4541 = vmatpush.bf16.msra.mxu0 %v3167
        %4542 = vmatpush.bf16.msra.mxu0 %v3159
        %4543 = vmatpush.bf16.msra.mxu0 %v3151
        %4544 = vmatmul.bf16.gmra.mxu0 %v1010
        %v4545 = vpop.f32.mrf.mxu0
        %v4546 = vadd.f32 %v4533, %v4545
        %v4547 = vpop.f32.mrf.mxu0
        %4548 = vdwg.mxu0
        %4549 = vmatpush.bf16.msra.mxu0 %v3271
        %4550 = vmatpush.bf16.msra.mxu0 %v3263
        %4551 = vmatpush.bf16.msra.mxu0 %v3255
        %4552 = vmatpush.bf16.msra.mxu0 %v3247
        %4553 = vmatpush.bf16.msra.mxu0 %v3239
        %4554 = vmatpush.bf16.msra.mxu0 %v3231
        %4555 = vmatpush.bf16.msra.mxu0 %v3223
        %4556 = vmatpush.bf16.msra.mxu0 %v3215
        %4557 = vmatmul.bf16.gmra.mxu0 %v1011
        %v4558 = vpop.f32.mrf.mxu0
        %v4559 = vadd.f32 %v4546, %v4558
        %v4560 = vpop.f32.mrf.mxu0
        %4561 = vdwg.mxu0
        %4562 = vmatpush.bf16.msra.mxu0 %v3335
        %4563 = vmatpush.bf16.msra.mxu0 %v3327
        %4564 = vmatpush.bf16.msra.mxu0 %v3319
        %4565 = vmatpush.bf16.msra.mxu0 %v3311
        %4566 = vmatpush.bf16.msra.mxu0 %v3303
        %4567 = vmatpush.bf16.msra.mxu0 %v3295
        %4568 = vmatpush.bf16.msra.mxu0 %v3287
        %4569 = vmatpush.bf16.msra.mxu0 %v3279
        %4570 = vmatmul.bf16.gmra.mxu0 %v1012
        %v4571 = vpop.f32.mrf.mxu0
        %v4572 = vadd.f32 %v4559, %v4571
        %v4573 = vpop.f32.mrf.mxu0
        %4574 = vdwg.mxu0
        %4575 = vmatpush.bf16.msra.mxu0 %v3399
        %4576 = vmatpush.bf16.msra.mxu0 %v3391
        %4577 = vmatpush.bf16.msra.mxu0 %v3383
        %4578 = vmatpush.bf16.msra.mxu0 %v3375
        %4579 = vmatpush.bf16.msra.mxu0 %v3367
        %4580 = vmatpush.bf16.msra.mxu0 %v3359
        %4581 = vmatpush.bf16.msra.mxu0 %v3351
        %4582 = vmatpush.bf16.msra.mxu0 %v3343
        %4583 = vmatmul.bf16.gmra.mxu0 %v1013
        %v4584 = vpop.f32.mrf.mxu0
        %v4585 = vadd.f32 %v4572, %v4584
        %v4586 = vpop.f32.mrf.mxu0
        %4587 = vdwg.mxu0
        %4588 = vmatpush.bf16.msra.mxu0 %v3463
        %4589 = vmatpush.bf16.msra.mxu0 %v3455
        %4590 = vmatpush.bf16.msra.mxu0 %v3447
        %4591 = vmatpush.bf16.msra.mxu0 %v3439
        %4592 = vmatpush.bf16.msra.mxu0 %v3431
        %4593 = vmatpush.bf16.msra.mxu0 %v3423
        %4594 = vmatpush.bf16.msra.mxu0 %v3415
        %4595 = vmatpush.bf16.msra.mxu0 %v3407
        %4596 = vmatmul.bf16.gmra.mxu0 %v1014
        %v4597 = vpop.f32.mrf.mxu0
        %v4598 = vadd.f32 %v4585, %v4597
        %v4599 = vpop.f32.mrf.mxu0
        %4600 = vdwg.mxu0
        %4601 = vmatpush.bf16.msra.mxu0 %v3527
        %4602 = vmatpush.bf16.msra.mxu0 %v3519
        %4603 = vmatpush.bf16.msra.mxu0 %v3511
        %4604 = vmatpush.bf16.msra.mxu0 %v3503
        %4605 = vmatpush.bf16.msra.mxu0 %v3495
        %4606 = vmatpush.bf16.msra.mxu0 %v3487
        %4607 = vmatpush.bf16.msra.mxu0 %v3479
        %4608 = vmatpush.bf16.msra.mxu0 %v3471
        %4609 = vmatmul.bf16.gmra.mxu0 %v1015
        %v4610 = vpop.f32.mrf.mxu0
        %v4611 = vadd.f32 %v4598, %v4610
        %v4612 = vpop.f32.mrf.mxu0
        %4613 = vdwg.mxu0
        %4614 = vmatpush.bf16.msra.mxu0 %v3591
        %4615 = vmatpush.bf16.msra.mxu0 %v3583
        %4616 = vmatpush.bf16.msra.mxu0 %v3575
        %4617 = vmatpush.bf16.msra.mxu0 %v3567
        %4618 = vmatpush.bf16.msra.mxu0 %v3559
        %4619 = vmatpush.bf16.msra.mxu0 %v3551
        %4620 = vmatpush.bf16.msra.mxu0 %v3543
        %4621 = vmatpush.bf16.msra.mxu0 %v3535
        %4622 = vmatmul.bf16.gmra.mxu0 %v1016
        %v4623 = vpop.f32.mrf.mxu0
        %v4624 = vadd.f32 %v4611, %v4623
        %v4625 = vpop.f32.mrf.mxu0
        %4626 = vdwg.mxu0
        %4627 = vmatpush.bf16.msra.mxu0 %v3144
        %4628 = vmatpush.bf16.msra.mxu0 %v3136
        %4629 = vmatpush.bf16.msra.mxu0 %v3128
        %4630 = vmatpush.bf16.msra.mxu0 %v3120
        %4631 = vmatpush.bf16.msra.mxu0 %v3112
        %4632 = vmatpush.bf16.msra.mxu0 %v3104
        %4633 = vmatpush.bf16.msra.mxu0 %v3096
        %4634 = vmatpush.bf16.msra.mxu0 %v3088
        %4635 = vmatmul.bf16.gmra.mxu0 %v1009
        %v4636 = vpop.f32.mrf.mxu0
        %v4637 = vadd.f32 %v1536, %v4636
        %v4638 = vpop.f32.mrf.mxu0
        %4639 = vdwg.mxu0
        %4640 = vmatpush.bf16.msra.mxu0 %v3208
        %4641 = vmatpush.bf16.msra.mxu0 %v3200
        %4642 = vmatpush.bf16.msra.mxu0 %v3192
        %4643 = vmatpush.bf16.msra.mxu0 %v3184
        %4644 = vmatpush.bf16.msra.mxu0 %v3176
        %4645 = vmatpush.bf16.msra.mxu0 %v3168
        %4646 = vmatpush.bf16.msra.mxu0 %v3160
        %4647 = vmatpush.bf16.msra.mxu0 %v3152
        %4648 = vmatmul.bf16.gmra.mxu0 %v1010
        %v4649 = vpop.f32.mrf.mxu0
        %v4650 = vadd.f32 %v4637, %v4649
        %v4651 = vpop.f32.mrf.mxu0
        %4652 = vdwg.mxu0
        %4653 = vmatpush.bf16.msra.mxu0 %v3272
        %4654 = vmatpush.bf16.msra.mxu0 %v3264
        %4655 = vmatpush.bf16.msra.mxu0 %v3256
        %4656 = vmatpush.bf16.msra.mxu0 %v3248
        %4657 = vmatpush.bf16.msra.mxu0 %v3240
        %4658 = vmatpush.bf16.msra.mxu0 %v3232
        %4659 = vmatpush.bf16.msra.mxu0 %v3224
        %4660 = vmatpush.bf16.msra.mxu0 %v3216
        %4661 = vmatmul.bf16.gmra.mxu0 %v1011
        %v4662 = vpop.f32.mrf.mxu0
        %v4663 = vadd.f32 %v4650, %v4662
        %v4664 = vpop.f32.mrf.mxu0
        %4665 = vdwg.mxu0
        %4666 = vmatpush.bf16.msra.mxu0 %v3336
        %4667 = vmatpush.bf16.msra.mxu0 %v3328
        %4668 = vmatpush.bf16.msra.mxu0 %v3320
        %4669 = vmatpush.bf16.msra.mxu0 %v3312
        %4670 = vmatpush.bf16.msra.mxu0 %v3304
        %4671 = vmatpush.bf16.msra.mxu0 %v3296
        %4672 = vmatpush.bf16.msra.mxu0 %v3288
        %4673 = vmatpush.bf16.msra.mxu0 %v3280
        %4674 = vmatmul.bf16.gmra.mxu0 %v1012
        %v4675 = vpop.f32.mrf.mxu0
        %v4676 = vadd.f32 %v4663, %v4675
        %v4677 = vpop.f32.mrf.mxu0
        %4678 = vdwg.mxu0
        %4679 = vmatpush.bf16.msra.mxu0 %v3400
        %4680 = vmatpush.bf16.msra.mxu0 %v3392
        %4681 = vmatpush.bf16.msra.mxu0 %v3384
        %4682 = vmatpush.bf16.msra.mxu0 %v3376
        %4683 = vmatpush.bf16.msra.mxu0 %v3368
        %4684 = vmatpush.bf16.msra.mxu0 %v3360
        %4685 = vmatpush.bf16.msra.mxu0 %v3352
        %4686 = vmatpush.bf16.msra.mxu0 %v3344
        %4687 = vmatmul.bf16.gmra.mxu0 %v1013
        %v4688 = vpop.f32.mrf.mxu0
        %v4689 = vadd.f32 %v4676, %v4688
        %v4690 = vpop.f32.mrf.mxu0
        %4691 = vdwg.mxu0
        %4692 = vmatpush.bf16.msra.mxu0 %v3464
        %4693 = vmatpush.bf16.msra.mxu0 %v3456
        %4694 = vmatpush.bf16.msra.mxu0 %v3448
        %4695 = vmatpush.bf16.msra.mxu0 %v3440
        %4696 = vmatpush.bf16.msra.mxu0 %v3432
        %4697 = vmatpush.bf16.msra.mxu0 %v3424
        %4698 = vmatpush.bf16.msra.mxu0 %v3416
        %4699 = vmatpush.bf16.msra.mxu0 %v3408
        %4700 = vmatmul.bf16.gmra.mxu0 %v1014
        %v4701 = vpop.f32.mrf.mxu0
        %v4702 = vadd.f32 %v4689, %v4701
        %v4703 = vpop.f32.mrf.mxu0
        %4704 = vdwg.mxu0
        %4705 = vmatpush.bf16.msra.mxu0 %v3528
        %4706 = vmatpush.bf16.msra.mxu0 %v3520
        %4707 = vmatpush.bf16.msra.mxu0 %v3512
        %4708 = vmatpush.bf16.msra.mxu0 %v3504
        %4709 = vmatpush.bf16.msra.mxu0 %v3496
        %4710 = vmatpush.bf16.msra.mxu0 %v3488
        %4711 = vmatpush.bf16.msra.mxu0 %v3480
        %4712 = vmatpush.bf16.msra.mxu0 %v3472
        %4713 = vmatmul.bf16.gmra.mxu0 %v1015
        %v4714 = vpop.f32.mrf.mxu0
        %v4715 = vadd.f32 %v4702, %v4714
        %v4716 = vpop.f32.mrf.mxu0
        %4717 = vdwg.mxu0
        %4718 = vmatpush.bf16.msra.mxu0 %v3592
        %4719 = vmatpush.bf16.msra.mxu0 %v3584
        %4720 = vmatpush.bf16.msra.mxu0 %v3576
        %4721 = vmatpush.bf16.msra.mxu0 %v3568
        %4722 = vmatpush.bf16.msra.mxu0 %v3560
        %4723 = vmatpush.bf16.msra.mxu0 %v3552
        %4724 = vmatpush.bf16.msra.mxu0 %v3544
        %4725 = vmatpush.bf16.msra.mxu0 %v3536
        %4726 = vmatmul.bf16.gmra.mxu0 %v1016
        %v4727 = vpop.f32.mrf.mxu0
        %v4728 = vadd.f32 %v4715, %v4727
        %v4729 = vpop.f32.mrf.mxu0
        %4730 = vdwg.mxu0
        %4731 = vmatpush.bf16.msra.mxu0 %v3145
        %4732 = vmatpush.bf16.msra.mxu0 %v3137
        %4733 = vmatpush.bf16.msra.mxu0 %v3129
        %4734 = vmatpush.bf16.msra.mxu0 %v3121
        %4735 = vmatpush.bf16.msra.mxu0 %v3113
        %4736 = vmatpush.bf16.msra.mxu0 %v3105
        %4737 = vmatpush.bf16.msra.mxu0 %v3097
        %4738 = vmatpush.bf16.msra.mxu0 %v3089
        %4739 = vmatmul.bf16.gmra.mxu0 %v1009
        %v4740 = vpop.f32.mrf.mxu0
        %v4741 = vadd.f32 %v1537, %v4740
        %v4742 = vpop.f32.mrf.mxu0
        %4743 = vdwg.mxu0
        %4744 = vmatpush.bf16.msra.mxu0 %v3209
        %4745 = vmatpush.bf16.msra.mxu0 %v3201
        %4746 = vmatpush.bf16.msra.mxu0 %v3193
        %4747 = vmatpush.bf16.msra.mxu0 %v3185
        %4748 = vmatpush.bf16.msra.mxu0 %v3177
        %4749 = vmatpush.bf16.msra.mxu0 %v3169
        %4750 = vmatpush.bf16.msra.mxu0 %v3161
        %4751 = vmatpush.bf16.msra.mxu0 %v3153
        %4752 = vmatmul.bf16.gmra.mxu0 %v1010
        %v4753 = vpop.f32.mrf.mxu0
        %v4754 = vadd.f32 %v4741, %v4753
        %v4755 = vpop.f32.mrf.mxu0
        %4756 = vdwg.mxu0
        %4757 = vmatpush.bf16.msra.mxu0 %v3273
        %4758 = vmatpush.bf16.msra.mxu0 %v3265
        %4759 = vmatpush.bf16.msra.mxu0 %v3257
        %4760 = vmatpush.bf16.msra.mxu0 %v3249
        %4761 = vmatpush.bf16.msra.mxu0 %v3241
        %4762 = vmatpush.bf16.msra.mxu0 %v3233
        %4763 = vmatpush.bf16.msra.mxu0 %v3225
        %4764 = vmatpush.bf16.msra.mxu0 %v3217
        %4765 = vmatmul.bf16.gmra.mxu0 %v1011
        %v4766 = vpop.f32.mrf.mxu0
        %v4767 = vadd.f32 %v4754, %v4766
        %v4768 = vpop.f32.mrf.mxu0
        %4769 = vdwg.mxu0
        %4770 = vmatpush.bf16.msra.mxu0 %v3337
        %4771 = vmatpush.bf16.msra.mxu0 %v3329
        %4772 = vmatpush.bf16.msra.mxu0 %v3321
        %4773 = vmatpush.bf16.msra.mxu0 %v3313
        %4774 = vmatpush.bf16.msra.mxu0 %v3305
        %4775 = vmatpush.bf16.msra.mxu0 %v3297
        %4776 = vmatpush.bf16.msra.mxu0 %v3289
        %4777 = vmatpush.bf16.msra.mxu0 %v3281
        %4778 = vmatmul.bf16.gmra.mxu0 %v1012
        %v4779 = vpop.f32.mrf.mxu0
        %v4780 = vadd.f32 %v4767, %v4779
        %v4781 = vpop.f32.mrf.mxu0
        %4782 = vdwg.mxu0
        %4783 = vmatpush.bf16.msra.mxu0 %v3401
        %4784 = vmatpush.bf16.msra.mxu0 %v3393
        %4785 = vmatpush.bf16.msra.mxu0 %v3385
        %4786 = vmatpush.bf16.msra.mxu0 %v3377
        %4787 = vmatpush.bf16.msra.mxu0 %v3369
        %4788 = vmatpush.bf16.msra.mxu0 %v3361
        %4789 = vmatpush.bf16.msra.mxu0 %v3353
        %4790 = vmatpush.bf16.msra.mxu0 %v3345
        %4791 = vmatmul.bf16.gmra.mxu0 %v1013
        %v4792 = vpop.f32.mrf.mxu0
        %v4793 = vadd.f32 %v4780, %v4792
        %v4794 = vpop.f32.mrf.mxu0
        %4795 = vdwg.mxu0
        %4796 = vmatpush.bf16.msra.mxu0 %v3465
        %4797 = vmatpush.bf16.msra.mxu0 %v3457
        %4798 = vmatpush.bf16.msra.mxu0 %v3449
        %4799 = vmatpush.bf16.msra.mxu0 %v3441
        %4800 = vmatpush.bf16.msra.mxu0 %v3433
        %4801 = vmatpush.bf16.msra.mxu0 %v3425
        %4802 = vmatpush.bf16.msra.mxu0 %v3417
        %4803 = vmatpush.bf16.msra.mxu0 %v3409
        %4804 = vmatmul.bf16.gmra.mxu0 %v1014
        %v4805 = vpop.f32.mrf.mxu0
        %v4806 = vadd.f32 %v4793, %v4805
        %v4807 = vpop.f32.mrf.mxu0
        %4808 = vdwg.mxu0
        %4809 = vmatpush.bf16.msra.mxu0 %v3529
        %4810 = vmatpush.bf16.msra.mxu0 %v3521
        %4811 = vmatpush.bf16.msra.mxu0 %v3513
        %4812 = vmatpush.bf16.msra.mxu0 %v3505
        %4813 = vmatpush.bf16.msra.mxu0 %v3497
        %4814 = vmatpush.bf16.msra.mxu0 %v3489
        %4815 = vmatpush.bf16.msra.mxu0 %v3481
        %4816 = vmatpush.bf16.msra.mxu0 %v3473
        %4817 = vmatmul.bf16.gmra.mxu0 %v1015
        %v4818 = vpop.f32.mrf.mxu0
        %v4819 = vadd.f32 %v4806, %v4818
        %v4820 = vpop.f32.mrf.mxu0
        %4821 = vdwg.mxu0
        %4822 = vmatpush.bf16.msra.mxu0 %v3593
        %4823 = vmatpush.bf16.msra.mxu0 %v3585
        %4824 = vmatpush.bf16.msra.mxu0 %v3577
        %4825 = vmatpush.bf16.msra.mxu0 %v3569
        %4826 = vmatpush.bf16.msra.mxu0 %v3561
        %4827 = vmatpush.bf16.msra.mxu0 %v3553
        %4828 = vmatpush.bf16.msra.mxu0 %v3545
        %4829 = vmatpush.bf16.msra.mxu0 %v3537
        %4830 = vmatmul.bf16.gmra.mxu0 %v1016
        %v4831 = vpop.f32.mrf.mxu0
        %v4832 = vadd.f32 %v4819, %v4831
        %v4833 = vpop.f32.mrf.mxu0
        %4834 = vdwg.mxu0
        %4835 = vmatpush.bf16.msra.mxu0 %v3146
        %4836 = vmatpush.bf16.msra.mxu0 %v3138
        %4837 = vmatpush.bf16.msra.mxu0 %v3130
        %4838 = vmatpush.bf16.msra.mxu0 %v3122
        %4839 = vmatpush.bf16.msra.mxu0 %v3114
        %4840 = vmatpush.bf16.msra.mxu0 %v3106
        %4841 = vmatpush.bf16.msra.mxu0 %v3098
        %4842 = vmatpush.bf16.msra.mxu0 %v3090
        %4843 = vmatmul.bf16.gmra.mxu0 %v1009
        %v4844 = vpop.f32.mrf.mxu0
        %v4845 = vadd.f32 %v1538, %v4844
        %v4846 = vpop.f32.mrf.mxu0
        %4847 = vdwg.mxu0
        %4848 = vmatpush.bf16.msra.mxu0 %v3210
        %4849 = vmatpush.bf16.msra.mxu0 %v3202
        %4850 = vmatpush.bf16.msra.mxu0 %v3194
        %4851 = vmatpush.bf16.msra.mxu0 %v3186
        %4852 = vmatpush.bf16.msra.mxu0 %v3178
        %4853 = vmatpush.bf16.msra.mxu0 %v3170
        %4854 = vmatpush.bf16.msra.mxu0 %v3162
        %4855 = vmatpush.bf16.msra.mxu0 %v3154
        %4856 = vmatmul.bf16.gmra.mxu0 %v1010
        %v4857 = vpop.f32.mrf.mxu0
        %v4858 = vadd.f32 %v4845, %v4857
        %v4859 = vpop.f32.mrf.mxu0
        %4860 = vdwg.mxu0
        %4861 = vmatpush.bf16.msra.mxu0 %v3274
        %4862 = vmatpush.bf16.msra.mxu0 %v3266
        %4863 = vmatpush.bf16.msra.mxu0 %v3258
        %4864 = vmatpush.bf16.msra.mxu0 %v3250
        %4865 = vmatpush.bf16.msra.mxu0 %v3242
        %4866 = vmatpush.bf16.msra.mxu0 %v3234
        %4867 = vmatpush.bf16.msra.mxu0 %v3226
        %4868 = vmatpush.bf16.msra.mxu0 %v3218
        %4869 = vmatmul.bf16.gmra.mxu0 %v1011
        %v4870 = vpop.f32.mrf.mxu0
        %v4871 = vadd.f32 %v4858, %v4870
        %v4872 = vpop.f32.mrf.mxu0
        %4873 = vdwg.mxu0
        %4874 = vmatpush.bf16.msra.mxu0 %v3338
        %4875 = vmatpush.bf16.msra.mxu0 %v3330
        %4876 = vmatpush.bf16.msra.mxu0 %v3322
        %4877 = vmatpush.bf16.msra.mxu0 %v3314
        %4878 = vmatpush.bf16.msra.mxu0 %v3306
        %4879 = vmatpush.bf16.msra.mxu0 %v3298
        %4880 = vmatpush.bf16.msra.mxu0 %v3290
        %4881 = vmatpush.bf16.msra.mxu0 %v3282
        %4882 = vmatmul.bf16.gmra.mxu0 %v1012
        %v4883 = vpop.f32.mrf.mxu0
        %v4884 = vadd.f32 %v4871, %v4883
        %v4885 = vpop.f32.mrf.mxu0
        %4886 = vdwg.mxu0
        %4887 = vmatpush.bf16.msra.mxu0 %v3402
        %4888 = vmatpush.bf16.msra.mxu0 %v3394
        %4889 = vmatpush.bf16.msra.mxu0 %v3386
        %4890 = vmatpush.bf16.msra.mxu0 %v3378
        %4891 = vmatpush.bf16.msra.mxu0 %v3370
        %4892 = vmatpush.bf16.msra.mxu0 %v3362
        %4893 = vmatpush.bf16.msra.mxu0 %v3354
        %4894 = vmatpush.bf16.msra.mxu0 %v3346
        %4895 = vmatmul.bf16.gmra.mxu0 %v1013
        %v4896 = vpop.f32.mrf.mxu0
        %v4897 = vadd.f32 %v4884, %v4896
        %v4898 = vpop.f32.mrf.mxu0
        %4899 = vdwg.mxu0
        %4900 = vmatpush.bf16.msra.mxu0 %v3466
        %4901 = vmatpush.bf16.msra.mxu0 %v3458
        %4902 = vmatpush.bf16.msra.mxu0 %v3450
        %4903 = vmatpush.bf16.msra.mxu0 %v3442
        %4904 = vmatpush.bf16.msra.mxu0 %v3434
        %4905 = vmatpush.bf16.msra.mxu0 %v3426
        %4906 = vmatpush.bf16.msra.mxu0 %v3418
        %4907 = vmatpush.bf16.msra.mxu0 %v3410
        %4908 = vmatmul.bf16.gmra.mxu0 %v1014
        %v4909 = vpop.f32.mrf.mxu0
        %v4910 = vadd.f32 %v4897, %v4909
        %v4911 = vpop.f32.mrf.mxu0
        %4912 = vdwg.mxu0
        %4913 = vmatpush.bf16.msra.mxu0 %v3530
        %4914 = vmatpush.bf16.msra.mxu0 %v3522
        %4915 = vmatpush.bf16.msra.mxu0 %v3514
        %4916 = vmatpush.bf16.msra.mxu0 %v3506
        %4917 = vmatpush.bf16.msra.mxu0 %v3498
        %4918 = vmatpush.bf16.msra.mxu0 %v3490
        %4919 = vmatpush.bf16.msra.mxu0 %v3482
        %4920 = vmatpush.bf16.msra.mxu0 %v3474
        %4921 = vmatmul.bf16.gmra.mxu0 %v1015
        %v4922 = vpop.f32.mrf.mxu0
        %v4923 = vadd.f32 %v4910, %v4922
        %v4924 = vpop.f32.mrf.mxu0
        %4925 = vdwg.mxu0
        %4926 = vmatpush.bf16.msra.mxu0 %v3594
        %4927 = vmatpush.bf16.msra.mxu0 %v3586
        %4928 = vmatpush.bf16.msra.mxu0 %v3578
        %4929 = vmatpush.bf16.msra.mxu0 %v3570
        %4930 = vmatpush.bf16.msra.mxu0 %v3562
        %4931 = vmatpush.bf16.msra.mxu0 %v3554
        %4932 = vmatpush.bf16.msra.mxu0 %v3546
        %4933 = vmatpush.bf16.msra.mxu0 %v3538
        %4934 = vmatmul.bf16.gmra.mxu0 %v1016
        %v4935 = vpop.f32.mrf.mxu0
        %v4936 = vadd.f32 %v4923, %v4935
        %v4937 = vpop.f32.mrf.mxu0
        %4938 = vdwg.mxu0
        %v4939 = vpack.c.bf16 %v4208, %v4208
        %v4940 = vpack.c.bf16 %v4312, %v4312
        %v4941 = vpack.c.bf16 %v4416, %v4416
        %v4942 = vpack.c.bf16 %v4520, %v4520
        %v4943 = vpack.c.bf16 %v4624, %v4624
        %v4944 = vpack.c.bf16 %v4728, %v4728
        %v4945 = vpack.c.bf16 %v4832, %v4832
        %v4946 = vpack.c.bf16 %v4936, %v4936
        %v4947 = vld [vmem:[%s437] sm:$0xf]
        %v4948 = vld [vmem:[%s437 + $0x4] sm:$0xf]
        %v4949 = vld [vmem:[%s437 + $0x8] sm:$0xf]
        %v4950 = vld [vmem:[%s437 + $0xc] sm:$0xf]
        %v4951 = vld [vmem:[%s437 + $0x10] sm:$0xf]
        %v4952 = vld [vmem:[%s437 + $0x14] sm:$0xf]
        %v4953 = vld [vmem:[%s437 + $0x18] sm:$0xf]
        %v4954 = vld [vmem:[%s437 + $0x1c] sm:$0xf]
        %v4955 = vld [vmem:[%s437 + $0x20] sm:$0xf]
        %v4956 = vld [vmem:[%s437 + $0x24] sm:$0xf]
        %v4957 = vld [vmem:[%s437 + $0x28] sm:$0xf]
        %v4958 = vld [vmem:[%s437 + $0x2c] sm:$0xf]
        %v4959 = vld [vmem:[%s437 + $0x30] sm:$0xf]
        %v4960 = vld [vmem:[%s437 + $0x34] sm:$0xf]
        %v4961 = vld [vmem:[%s437 + $0x38] sm:$0xf]
        %v4962 = vld [vmem:[%s437 + $0x3c] sm:$0xf]
        %v4963 = vld [vmem:[%s437 + $0x40] sm:$0xf]
        %v4964 = vld [vmem:[%s437 + $0x44] sm:$0xf]
        %v4965 = vld [vmem:[%s437 + $0x48] sm:$0xf]
        %v4966 = vld [vmem:[%s437 + $0x4c] sm:$0xf]
        %v4967 = vld [vmem:[%s437 + $0x50] sm:$0xf]
        %v4968 = vld [vmem:[%s437 + $0x54] sm:$0xf]
        %v4969 = vld [vmem:[%s437 + $0x58] sm:$0xf]
        %v4970 = vld [vmem:[%s437 + $0x5c] sm:$0xf]
        %v4971 = vld [vmem:[%s437 + $0x60] sm:$0xf]
        %v4972 = vld [vmem:[%s437 + $0x64] sm:$0xf]
        %v4973 = vld [vmem:[%s437 + $0x68] sm:$0xf]
        %v4974 = vld [vmem:[%s437 + $0x6c] sm:$0xf]
        %v4975 = vld [vmem:[%s437 + $0x70] sm:$0xf]
        %v4976 = vld [vmem:[%s437 + $0x74] sm:$0xf]
        %v4977 = vld [vmem:[%s437 + $0x78] sm:$0xf]
        %v4978 = vld [vmem:[%s437 + $0x7c] sm:$0xf]
        %v4979 = vld [vmem:[%s437 + $0x80] sm:$0xf]
        %v4980 = vld [vmem:[%s437 + $0x84] sm:$0xf]
        %v4981 = vld [vmem:[%s437 + $0x88] sm:$0xf]
        %v4982 = vld [vmem:[%s437 + $0x8c] sm:$0xf]
        %v4983 = vld [vmem:[%s437 + $0x90] sm:$0xf]
        %v4984 = vld [vmem:[%s437 + $0x94] sm:$0xf]
        %v4985 = vld [vmem:[%s437 + $0x98] sm:$0xf]
        %v4986 = vld [vmem:[%s437 + $0x9c] sm:$0xf]
        %v4987 = vld [vmem:[%s437 + $0xa0] sm:$0xf]
        %v4988 = vld [vmem:[%s437 + $0xa4] sm:$0xf]
        %v4989 = vld [vmem:[%s437 + $0xa8] sm:$0xf]
        %v4990 = vld [vmem:[%s437 + $0xac] sm:$0xf]
        %v4991 = vld [vmem:[%s437 + $0xb0] sm:$0xf]
        %v4992 = vld [vmem:[%s437 + $0xb4] sm:$0xf]
        %v4993 = vld [vmem:[%s437 + $0xb8] sm:$0xf]
        %v4994 = vld [vmem:[%s437 + $0xbc] sm:$0xf]
        %v4995 = vld [vmem:[%s437 + $0xc0] sm:$0xf]
        %v4996 = vld [vmem:[%s437 + $0xc4] sm:$0xf]
        %v4997 = vld [vmem:[%s437 + $0xc8] sm:$0xf]
        %v4998 = vld [vmem:[%s437 + $0xcc] sm:$0xf]
        %v4999 = vld [vmem:[%s437 + $0xd0] sm:$0xf]
        %v5000 = vld [vmem:[%s437 + $0xd4] sm:$0xf]
        %v5001 = vld [vmem:[%s437 + $0xd8] sm:$0xf]
        %v5002 = vld [vmem:[%s437 + $0xdc] sm:$0xf]
        %v5003 = vld [vmem:[%s437 + $0xe0] sm:$0xf]
        %v5004 = vld [vmem:[%s437 + $0xe4] sm:$0xf]
        %v5005 = vld [vmem:[%s437 + $0xe8] sm:$0xf]
        %v5006 = vld [vmem:[%s437 + $0xec] sm:$0xf]
        %v5007 = vld [vmem:[%s437 + $0xf0] sm:$0xf]
        %v5008 = vld [vmem:[%s437 + $0xf4] sm:$0xf]
        %v5009 = vld [vmem:[%s437 + $0xf8] sm:$0xf]
        %v5010 = vld [vmem:[%s437 + $0xfc] sm:$0xf]
        %v5011 = vld [vmem:[%s437 + $0x100] sm:$0xf]
        %v5012 = vld [vmem:[%s437 + $0x104] sm:$0xf]
        %v5013 = vld [vmem:[%s437 + $0x108] sm:$0xf]
        %v5014 = vld [vmem:[%s437 + $0x10c] sm:$0xf]
        %v5015 = vld [vmem:[%s437 + $0x110] sm:$0xf]
        %v5016 = vld [vmem:[%s437 + $0x114] sm:$0xf]
        %v5017 = vld [vmem:[%s437 + $0x118] sm:$0xf]
        %v5018 = vld [vmem:[%s437 + $0x11c] sm:$0xf]
        %v5019 = vld [vmem:[%s437 + $0x120] sm:$0xf]
        %v5020 = vld [vmem:[%s437 + $0x124] sm:$0xf]
        %v5021 = vld [vmem:[%s437 + $0x128] sm:$0xf]
        %v5022 = vld [vmem:[%s437 + $0x12c] sm:$0xf]
        %v5023 = vld [vmem:[%s437 + $0x130] sm:$0xf]
        %v5024 = vld [vmem:[%s437 + $0x134] sm:$0xf]
        %v5025 = vld [vmem:[%s437 + $0x138] sm:$0xf]
        %v5026 = vld [vmem:[%s437 + $0x13c] sm:$0xf]
        %v5027 = vld [vmem:[%s437 + $0x140] sm:$0xf]
        %v5028 = vld [vmem:[%s437 + $0x144] sm:$0xf]
        %v5029 = vld [vmem:[%s437 + $0x148] sm:$0xf]
        %v5030 = vld [vmem:[%s437 + $0x14c] sm:$0xf]
        %v5031 = vld [vmem:[%s437 + $0x150] sm:$0xf]
        %v5032 = vld [vmem:[%s437 + $0x154] sm:$0xf]
        %v5033 = vld [vmem:[%s437 + $0x158] sm:$0xf]
        %v5034 = vld [vmem:[%s437 + $0x15c] sm:$0xf]
        %v5035 = vld [vmem:[%s437 + $0x160] sm:$0xf]
        %v5036 = vld [vmem:[%s437 + $0x164] sm:$0xf]
        %v5037 = vld [vmem:[%s437 + $0x168] sm:$0xf]
        %v5038 = vld [vmem:[%s437 + $0x16c] sm:$0xf]
        %v5039 = vld [vmem:[%s437 + $0x170] sm:$0xf]
        %v5040 = vld [vmem:[%s437 + $0x174] sm:$0xf]
        %v5041 = vld [vmem:[%s437 + $0x178] sm:$0xf]
        %v5042 = vld [vmem:[%s437 + $0x17c] sm:$0xf]
        %v5043 = vld [vmem:[%s437 + $0x180] sm:$0xf]
        %v5044 = vld [vmem:[%s437 + $0x184] sm:$0xf]
        %v5045 = vld [vmem:[%s437 + $0x188] sm:$0xf]
        %v5046 = vld [vmem:[%s437 + $0x18c] sm:$0xf]
        %v5047 = vld [vmem:[%s437 + $0x190] sm:$0xf]
        %v5048 = vld [vmem:[%s437 + $0x194] sm:$0xf]
        %v5049 = vld [vmem:[%s437 + $0x198] sm:$0xf]
        %v5050 = vld [vmem:[%s437 + $0x19c] sm:$0xf]
        %v5051 = vld [vmem:[%s437 + $0x1a0] sm:$0xf]
        %v5052 = vld [vmem:[%s437 + $0x1a4] sm:$0xf]
        %v5053 = vld [vmem:[%s437 + $0x1a8] sm:$0xf]
        %v5054 = vld [vmem:[%s437 + $0x1ac] sm:$0xf]
        %v5055 = vld [vmem:[%s437 + $0x1b0] sm:$0xf]
        %v5056 = vld [vmem:[%s437 + $0x1b4] sm:$0xf]
        %v5057 = vld [vmem:[%s437 + $0x1b8] sm:$0xf]
        %v5058 = vld [vmem:[%s437 + $0x1bc] sm:$0xf]
        %v5059 = vld [vmem:[%s437 + $0x1c0] sm:$0xf]
        %v5060 = vld [vmem:[%s437 + $0x1c4] sm:$0xf]
        %v5061 = vld [vmem:[%s437 + $0x1c8] sm:$0xf]
        %v5062 = vld [vmem:[%s437 + $0x1cc] sm:$0xf]
        %v5063 = vld [vmem:[%s437 + $0x1d0] sm:$0xf]
        %v5064 = vld [vmem:[%s437 + $0x1d4] sm:$0xf]
        %v5065 = vld [vmem:[%s437 + $0x1d8] sm:$0xf]
        %v5066 = vld [vmem:[%s437 + $0x1dc] sm:$0xf]
        %v5067 = vld [vmem:[%s437 + $0x1e0] sm:$0xf]
        %v5068 = vld [vmem:[%s437 + $0x1e4] sm:$0xf]
        %v5069 = vld [vmem:[%s437 + $0x1e8] sm:$0xf]
        %v5070 = vld [vmem:[%s437 + $0x1ec] sm:$0xf]
        %v5071 = vld [vmem:[%s437 + $0x1f0] sm:$0xf]
        %v5072 = vld [vmem:[%s437 + $0x1f4] sm:$0xf]
        %v5073 = vld [vmem:[%s437 + $0x1f8] sm:$0xf]
        %v5074 = vld [vmem:[%s437 + $0x1fc] sm:$0xf]
        %v5075 = vld [vmem:[%s446] sm:$0x1]
        %v5077 = vperm.slane %v5075, 0
        %v5207 = vunpack.c.l.b16 %v4947
        %v5208 = vunpack.c.l.b16 %v4948
        %v5209 = vunpack.c.l.b16 %v4949
        %v5210 = vunpack.c.l.b16 %v4950
        %v5211 = vunpack.c.l.b16 %v4951
        %v5212 = vunpack.c.l.b16 %v4952
        %v5213 = vunpack.c.l.b16 %v4953
        %v5214 = vunpack.c.l.b16 %v4954
        %v5215 = vunpack.c.l.b16 %v4955
        %v5216 = vunpack.c.l.b16 %v4956
        %v5217 = vunpack.c.l.b16 %v4957
        %v5218 = vunpack.c.l.b16 %v4958
        %v5219 = vunpack.c.l.b16 %v4959
        %v5220 = vunpack.c.l.b16 %v4960
        %v5221 = vunpack.c.l.b16 %v4961
        %v5222 = vunpack.c.l.b16 %v4962
        %v5223 = vunpack.c.l.b16 %v4963
        %v5224 = vunpack.c.l.b16 %v4964
        %v5225 = vunpack.c.l.b16 %v4965
        %v5226 = vunpack.c.l.b16 %v4966
        %v5227 = vunpack.c.l.b16 %v4967
        %v5228 = vunpack.c.l.b16 %v4968
        %v5229 = vunpack.c.l.b16 %v4969
        %v5230 = vunpack.c.l.b16 %v4970
        %v5231 = vunpack.c.l.b16 %v4971
        %v5232 = vunpack.c.l.b16 %v4972
        %v5233 = vunpack.c.l.b16 %v4973
        %v5234 = vunpack.c.l.b16 %v4974
        %v5235 = vunpack.c.l.b16 %v4975
        %v5236 = vunpack.c.l.b16 %v4976
        %v5237 = vunpack.c.l.b16 %v4977
        %v5238 = vunpack.c.l.b16 %v4978
        %v5239 = vunpack.c.l.b16 %v4979
        %v5240 = vunpack.c.l.b16 %v4980
        %v5241 = vunpack.c.l.b16 %v4981
        %v5242 = vunpack.c.l.b16 %v4982
        %v5243 = vunpack.c.l.b16 %v4983
        %v5244 = vunpack.c.l.b16 %v4984
        %v5245 = vunpack.c.l.b16 %v4985
        %v5246 = vunpack.c.l.b16 %v4986
        %v5247 = vunpack.c.l.b16 %v4987
        %v5248 = vunpack.c.l.b16 %v4988
        %v5249 = vunpack.c.l.b16 %v4989
        %v5250 = vunpack.c.l.b16 %v4990
        %v5251 = vunpack.c.l.b16 %v4991
        %v5252 = vunpack.c.l.b16 %v4992
        %v5253 = vunpack.c.l.b16 %v4993
        %v5254 = vunpack.c.l.b16 %v4994
        %v5255 = vunpack.c.l.b16 %v4995
        %v5256 = vunpack.c.l.b16 %v4996
        %v5257 = vunpack.c.l.b16 %v4997
        %v5258 = vunpack.c.l.b16 %v4998
        %v5259 = vunpack.c.l.b16 %v4999
        %v5260 = vunpack.c.l.b16 %v5000
        %v5261 = vunpack.c.l.b16 %v5001
        %v5262 = vunpack.c.l.b16 %v5002
        %v5263 = vunpack.c.l.b16 %v5003
        %v5264 = vunpack.c.l.b16 %v5004
        %v5265 = vunpack.c.l.b16 %v5005
        %v5266 = vunpack.c.l.b16 %v5006
        %v5267 = vunpack.c.l.b16 %v5007
        %v5268 = vunpack.c.l.b16 %v5008
        %v5269 = vunpack.c.l.b16 %v5009
        %v5270 = vunpack.c.l.b16 %v5010
        %v5271 = vunpack.c.l.b16 %v5011
        %v5272 = vunpack.c.l.b16 %v5012
        %v5273 = vunpack.c.l.b16 %v5013
        %v5274 = vunpack.c.l.b16 %v5014
        %v5275 = vunpack.c.l.b16 %v5015
        %v5276 = vunpack.c.l.b16 %v5016
        %v5277 = vunpack.c.l.b16 %v5017
        %v5278 = vunpack.c.l.b16 %v5018
        %v5279 = vunpack.c.l.b16 %v5019
        %v5280 = vunpack.c.l.b16 %v5020
        %v5281 = vunpack.c.l.b16 %v5021
        %v5282 = vunpack.c.l.b16 %v5022
        %v5283 = vunpack.c.l.b16 %v5023
        %v5284 = vunpack.c.l.b16 %v5024
        %v5285 = vunpack.c.l.b16 %v5025
        %v5286 = vunpack.c.l.b16 %v5026
        %v5287 = vunpack.c.l.b16 %v5027
        %v5288 = vunpack.c.l.b16 %v5028
        %v5289 = vunpack.c.l.b16 %v5029
        %v5290 = vunpack.c.l.b16 %v5030
        %v5291 = vunpack.c.l.b16 %v5031
        %v5292 = vunpack.c.l.b16 %v5032
        %v5293 = vunpack.c.l.b16 %v5033
        %v5294 = vunpack.c.l.b16 %v5034
        %v5295 = vunpack.c.l.b16 %v5035
        %v5296 = vunpack.c.l.b16 %v5036
        %v5297 = vunpack.c.l.b16 %v5037
        %v5298 = vunpack.c.l.b16 %v5038
        %v5299 = vunpack.c.l.b16 %v5039
        %v5300 = vunpack.c.l.b16 %v5040
        %v5301 = vunpack.c.l.b16 %v5041
        %v5302 = vunpack.c.l.b16 %v5042
        %v5303 = vunpack.c.l.b16 %v5043
        %v5304 = vunpack.c.l.b16 %v5044
        %v5305 = vunpack.c.l.b16 %v5045
        %v5306 = vunpack.c.l.b16 %v5046
        %v5307 = vunpack.c.l.b16 %v5047
        %v5308 = vunpack.c.l.b16 %v5048
        %v5309 = vunpack.c.l.b16 %v5049
        %v5310 = vunpack.c.l.b16 %v5050
        %v5311 = vunpack.c.l.b16 %v5051
        %v5312 = vunpack.c.l.b16 %v5052
        %v5313 = vunpack.c.l.b16 %v5053
        %v5314 = vunpack.c.l.b16 %v5054
        %v5315 = vunpack.c.l.b16 %v5055
        %v5316 = vunpack.c.l.b16 %v5056
        %v5317 = vunpack.c.l.b16 %v5057
        %v5318 = vunpack.c.l.b16 %v5058
        %v5319 = vunpack.c.l.b16 %v5059
        %v5320 = vunpack.c.l.b16 %v5060
        %v5321 = vunpack.c.l.b16 %v5061
        %v5322 = vunpack.c.l.b16 %v5062
        %v5323 = vunpack.c.l.b16 %v5063
        %v5324 = vunpack.c.l.b16 %v5064
        %v5325 = vunpack.c.l.b16 %v5065
        %v5326 = vunpack.c.l.b16 %v5066
        %v5327 = vunpack.c.l.b16 %v5067
        %v5328 = vunpack.c.l.b16 %v5068
        %v5329 = vunpack.c.l.b16 %v5069
        %v5330 = vunpack.c.l.b16 %v5070
        %v5331 = vunpack.c.l.b16 %v5071
        %v5332 = vunpack.c.l.b16 %v5072
        %v5333 = vunpack.c.l.b16 %v5073
        %v5334 = vunpack.c.l.b16 %v5074
        %v5335 = vpack.c.b16 %v5208, %v5207
        %v5336 = vpack.c.b16 %v5210, %v5209
        %v5337 = vpack.c.b16 %v5212, %v5211
        %v5338 = vpack.c.b16 %v5214, %v5213
        %v5339 = vpack.c.b16 %v5216, %v5215
        %v5340 = vpack.c.b16 %v5218, %v5217
        %v5341 = vpack.c.b16 %v5220, %v5219
        %v5342 = vpack.c.b16 %v5222, %v5221
        %v5343 = vpack.c.b16 %v5224, %v5223
        %v5344 = vpack.c.b16 %v5226, %v5225
        %v5345 = vpack.c.b16 %v5228, %v5227
        %v5346 = vpack.c.b16 %v5230, %v5229
        %v5347 = vpack.c.b16 %v5232, %v5231
        %v5348 = vpack.c.b16 %v5234, %v5233
        %v5349 = vpack.c.b16 %v5236, %v5235
        %v5350 = vpack.c.b16 %v5238, %v5237
        %v5351 = vpack.c.b16 %v5240, %v5239
        %v5352 = vpack.c.b16 %v5242, %v5241
        %v5353 = vpack.c.b16 %v5244, %v5243
        %v5354 = vpack.c.b16 %v5246, %v5245
        %v5355 = vpack.c.b16 %v5248, %v5247
        %v5356 = vpack.c.b16 %v5250, %v5249
        %v5357 = vpack.c.b16 %v5252, %v5251
        %v5358 = vpack.c.b16 %v5254, %v5253
        %v5359 = vpack.c.b16 %v5256, %v5255
        %v5360 = vpack.c.b16 %v5258, %v5257
        %v5361 = vpack.c.b16 %v5260, %v5259
        %v5362 = vpack.c.b16 %v5262, %v5261
        %v5363 = vpack.c.b16 %v5264, %v5263
        %v5364 = vpack.c.b16 %v5266, %v5265
        %v5365 = vpack.c.b16 %v5268, %v5267
        %v5366 = vpack.c.b16 %v5270, %v5269
        %v5367 = vpack.c.b16 %v5272, %v5271
        %v5368 = vpack.c.b16 %v5274, %v5273
        %v5369 = vpack.c.b16 %v5276, %v5275
        %v5370 = vpack.c.b16 %v5278, %v5277
        %v5371 = vpack.c.b16 %v5280, %v5279
        %v5372 = vpack.c.b16 %v5282, %v5281
        %v5373 = vpack.c.b16 %v5284, %v5283
        %v5374 = vpack.c.b16 %v5286, %v5285
        %v5375 = vpack.c.b16 %v5288, %v5287
        %v5376 = vpack.c.b16 %v5290, %v5289
        %v5377 = vpack.c.b16 %v5292, %v5291
        %v5378 = vpack.c.b16 %v5294, %v5293
        %v5379 = vpack.c.b16 %v5296, %v5295
        %v5380 = vpack.c.b16 %v5298, %v5297
        %v5381 = vpack.c.b16 %v5300, %v5299
        %v5382 = vpack.c.b16 %v5302, %v5301
        %v5383 = vpack.c.b16 %v5304, %v5303
        %v5384 = vpack.c.b16 %v5306, %v5305
        %v5385 = vpack.c.b16 %v5308, %v5307
        %v5386 = vpack.c.b16 %v5310, %v5309
        %v5387 = vpack.c.b16 %v5312, %v5311
        %v5388 = vpack.c.b16 %v5314, %v5313
        %v5389 = vpack.c.b16 %v5316, %v5315
        %v5390 = vpack.c.b16 %v5318, %v5317
        %v5391 = vpack.c.b16 %v5320, %v5319
        %v5392 = vpack.c.b16 %v5322, %v5321
        %v5393 = vpack.c.b16 %v5324, %v5323
        %v5394 = vpack.c.b16 %v5326, %v5325
        %v5395 = vpack.c.b16 %v5328, %v5327
        %v5396 = vpack.c.b16 %v5330, %v5329
        %v5397 = vpack.c.b16 %v5332, %v5331
        %v5398 = vpack.c.b16 %v5334, %v5333
        %5463 = vmatpush.bf16.msra.mxu0 %v5342
        %5464 = vmatpush.bf16.msra.mxu0 %v5341
        %5465 = vmatpush.bf16.msra.mxu0 %v5340
        %5466 = vmatpush.bf16.msra.mxu0 %v5339
        %5467 = vmatpush.bf16.msra.mxu0 %v5338
        %5468 = vmatpush.bf16.msra.mxu0 %v5337
        %5469 = vmatpush.bf16.msra.mxu0 %v5336
        %5470 = vmatpush.bf16.msra.mxu0 %v5335
        %5471 = vmatmul.bf16.gmra.mxu0 %v4939
        %v5472 = vpop.f32.mrf.mxu0
        %v5473 = vadd.f32 %v5077, %v5472
        %v5474 = vpop.f32.mrf.mxu0
        %5475 = vdwg.mxu0
        %5476 = vmatpush.bf16.msra.mxu0 %v5350
        %5477 = vmatpush.bf16.msra.mxu0 %v5349
        %5478 = vmatpush.bf16.msra.mxu0 %v5348
        %5479 = vmatpush.bf16.msra.mxu0 %v5347
        %5480 = vmatpush.bf16.msra.mxu0 %v5346
        %5481 = vmatpush.bf16.msra.mxu0 %v5345
        %5482 = vmatpush.bf16.msra.mxu0 %v5344
        %5483 = vmatpush.bf16.msra.mxu0 %v5343
        %5484 = vmatmul.bf16.gmra.mxu0 %v4940
        %v5485 = vpop.f32.mrf.mxu0
        %v5486 = vadd.f32 %v5473, %v5485
        %v5487 = vpop.f32.mrf.mxu0
        %5488 = vdwg.mxu0
        %5489 = vmatpush.bf16.msra.mxu0 %v5358
        %5490 = vmatpush.bf16.msra.mxu0 %v5357
        %5491 = vmatpush.bf16.msra.mxu0 %v5356
        %5492 = vmatpush.bf16.msra.mxu0 %v5355
        %5493 = vmatpush.bf16.msra.mxu0 %v5354
        %5494 = vmatpush.bf16.msra.mxu0 %v5353
        %5495 = vmatpush.bf16.msra.mxu0 %v5352
        %5496 = vmatpush.bf16.msra.mxu0 %v5351
        %5497 = vmatmul.bf16.gmra.mxu0 %v4941
        %v5498 = vpop.f32.mrf.mxu0
        %v5499 = vadd.f32 %v5486, %v5498
        %v5500 = vpop.f32.mrf.mxu0
        %5501 = vdwg.mxu0
        %5502 = vmatpush.bf16.msra.mxu0 %v5366
        %5503 = vmatpush.bf16.msra.mxu0 %v5365
        %5504 = vmatpush.bf16.msra.mxu0 %v5364
        %5505 = vmatpush.bf16.msra.mxu0 %v5363
        %5506 = vmatpush.bf16.msra.mxu0 %v5362
        %5507 = vmatpush.bf16.msra.mxu0 %v5361
        %5508 = vmatpush.bf16.msra.mxu0 %v5360
        %5509 = vmatpush.bf16.msra.mxu0 %v5359
        %5510 = vmatmul.bf16.gmra.mxu0 %v4942
        %v5511 = vpop.f32.mrf.mxu0
        %v5512 = vadd.f32 %v5499, %v5511
        %v5513 = vpop.f32.mrf.mxu0
        %5514 = vdwg.mxu0
        %5515 = vmatpush.bf16.msra.mxu0 %v5374
        %5516 = vmatpush.bf16.msra.mxu0 %v5373
        %5517 = vmatpush.bf16.msra.mxu0 %v5372
        %5518 = vmatpush.bf16.msra.mxu0 %v5371
        %5519 = vmatpush.bf16.msra.mxu0 %v5370
        %5520 = vmatpush.bf16.msra.mxu0 %v5369
        %5521 = vmatpush.bf16.msra.mxu0 %v5368
        %5522 = vmatpush.bf16.msra.mxu0 %v5367
        %5523 = vmatmul.bf16.gmra.mxu0 %v4943
        %v5524 = vpop.f32.mrf.mxu0
        %v5525 = vadd.f32 %v5512, %v5524
        %v5526 = vpop.f32.mrf.mxu0
        %5527 = vdwg.mxu0
        %5528 = vmatpush.bf16.msra.mxu0 %v5382
        %5529 = vmatpush.bf16.msra.mxu0 %v5381
        %5530 = vmatpush.bf16.msra.mxu0 %v5380
        %5531 = vmatpush.bf16.msra.mxu0 %v5379
        %5532 = vmatpush.bf16.msra.mxu0 %v5378
        %5533 = vmatpush.bf16.msra.mxu0 %v5377
        %5534 = vmatpush.bf16.msra.mxu0 %v5376
        %5535 = vmatpush.bf16.msra.mxu0 %v5375
        %5536 = vmatmul.bf16.gmra.mxu0 %v4944
        %v5537 = vpop.f32.mrf.mxu0
        %v5538 = vadd.f32 %v5525, %v5537
        %v5539 = vpop.f32.mrf.mxu0
        %5540 = vdwg.mxu0
        %5541 = vmatpush.bf16.msra.mxu0 %v5390
        %5542 = vmatpush.bf16.msra.mxu0 %v5389
        %5543 = vmatpush.bf16.msra.mxu0 %v5388
        %5544 = vmatpush.bf16.msra.mxu0 %v5387
        %5545 = vmatpush.bf16.msra.mxu0 %v5386
        %5546 = vmatpush.bf16.msra.mxu0 %v5385
        %5547 = vmatpush.bf16.msra.mxu0 %v5384
        %5548 = vmatpush.bf16.msra.mxu0 %v5383
        %5549 = vmatmul.bf16.gmra.mxu0 %v4945
        %v5550 = vpop.f32.mrf.mxu0
        %v5551 = vadd.f32 %v5538, %v5550
        %v5552 = vpop.f32.mrf.mxu0
        %5553 = vdwg.mxu0
        %5554 = vmatpush.bf16.msra.mxu0 %v5398
        %5555 = vmatpush.bf16.msra.mxu0 %v5397
        %5556 = vmatpush.bf16.msra.mxu0 %v5396
        %5557 = vmatpush.bf16.msra.mxu0 %v5395
        %5558 = vmatpush.bf16.msra.mxu0 %v5394
        %5559 = vmatpush.bf16.msra.mxu0 %v5393
        %5560 = vmatpush.bf16.msra.mxu0 %v5392
        %5561 = vmatpush.bf16.msra.mxu0 %v5391
        %5562 = vmatmul.bf16.gmra.mxu0 %v4946
        %v5563 = vpop.f32.mrf.mxu0
        %v5564 = vadd.f32 %v5551, %v5563
        %v5565 = vpop.f32.mrf.mxu0
        %5566 = vdwg.mxu0
        %5567 = vst [vmem:[%s501] sm:$0xff] %v5564
        %s5568 = sand.u32 %s216, 1
        %s5569 = scalar_lea.sflag [#allocation4], %s5568
        %s5570 = sand.u32 %s216, 1
        %s5571 = smul.addr %s5570, 8
        %s5572 = scalar_lea.vmem [#allocation14], %s5571
        // Predicated region
        $region77: #{tpu_custom_call.1} parent=47 // pred_check
          %p5573 = pneg %p226
        $region78: #{tpu_custom_call.1} parent=47 // pred_check_branch
          %5575 = sbr.rel (%p5573) target = $region80
        $region79: #{tpu_custom_call.1} parent=47 // pred_region
          %5577 = vsyncadd %s5569, 0
          %s5578 = smul.addr %s31, 8
          %s5579 = scalar_lea.hbm %s7, %s5578
          %s5581 = sshll.u32 %s5572, 4
          %s5582 = int_to_ptr.vmem [resolvable:$true] %s5581
          %s5583 = sshll.u32 %s5579, 4
          %s5584 = int_to_ptr.hbm [resolvable:$true] %s5583
          %5586 = dma.vmem_to_hbm [thread:$0]  %s5582, 128, %s5584, %s5569
        $region80: #{tpu_custom_call.1} parent=47 // pred_fallthru
          _
      $region48: #{tpu_custom_call.1} parent=5 // pred_fallthru
        _
      %p5587 = scmp.le.s32.totalorder 2, %s26
      // Predicated region
      $region81: #{tpu_custom_call.1} parent=5 // pred_check
        %p5588 = pneg %p5587
      $region82: #{tpu_custom_call.1} parent=5 // pred_check_branch
        %5590 = sbr.rel (%p5588) target = $region84
      $region83: #{tpu_custom_call.1} parent=5 // pred_region
        %s5591 = ssub.s32 %s26, 2
        // Predicated region
        $region85: #{tpu_custom_call.1} parent=83 // pred_check
          %p5592 = pneg %p232
        $region86: #{tpu_custom_call.1} parent=83 // pred_check_branch
          %5594 = sbr.rel (%p5592) target = $region88
        $region87: #{tpu_custom_call.1} parent=83 // pred_region
          %s5595 = sand.u32 %s217, 1
          %s5596 = scalar_lea.sflag [#allocation4], %s5595
          %s5597 = sand.u32 %s217, 1
          %s5598 = smul.addr %s5597, 8
          %s5599 = scalar_lea.vmem [#allocation14], %s5598
          %5601 = dma.done %s5596, 128
        $region88: #{tpu_custom_call.1} parent=83 // pred_fallthru
          _
      $region84: #{tpu_custom_call.1} parent=5 // pred_fallthru
        _
    $region6: #{tpu_custom_call.1} parent=1 // loop_footer
      %s30 = sadd.s32 1, %s26
    $region7: #{tpu_custom_call.1} parent=1 // loop_footer_branch
      %25 = sbr.rel target = $region3
    $region8: #{tpu_custom_call.1} parent=1 // loop_exit
      _
    %5602 = vsyncpa [#allocation3], 1
    %s5603 = scalar_lea.sflag [#allocation3], 1
    %5604 = vsyncpa %s5603, 1
    %5605 = vsyncpa [#allocation6], 1
    %s5606 = scalar_lea.sflag [#allocation6], 1
    %5607 = vsyncpa %s5606, 1
    %5608 = vsyncpa [#allocation9], 1
    %s5609 = scalar_lea.sflag [#allocation9], 1
    %5610 = vsyncpa %s5609, 1
    %5611 = vsyncpa [#allocation12], 1
    %s5612 = scalar_lea.sflag [#allocation12], 1
    %5613 = vsyncpa %s5612, 1
    %5614 = vsyncpa [#allocation4], 1
    %s5615 = scalar_lea.sflag [#allocation4], 1
    %5616 = vsyncpa %s5615, 1

</llo_original>
